<compile_context>
chip_gen: v7x
topology: tpu7x:2x2x1
jax: 0.10.0
libtpu: 0.0.40
codegen_flags: <defaults>
</compile_context>

<pallas_src>
import math

import jax
import jax.numpy as jnp
import numpy as np
from jax import lax
from jax.experimental import pallas as pl
from jax.experimental.pallas import tpu as pltpu


def _make_kernel(num_heads, dim_head, channels, cvp, p_dtype, exp_dtype,
                 approx_recip):
    inner = num_heads * dim_head
    f32 = jnp.float32

    def kernel(xf_ref, xq_ref, w_ref, b_ref, o_ref):
        x_full = xf_ref[0]            # (C+1, HW)  last channel == 1.0
        x_q = xq_ref[0]               # (C+1, TQ)  this step's query columns
        w = w_ref[...]                # (2*inner + heads*cvp, C+1)

        # Q projection only on this q-tile; K + folded-V(+ones) over full HW.
        q_all = jnp.dot(w[:inner], x_q, preferred_element_type=f32)       # (inner, TQ)
        kv_all = jnp.dot(w[inner:], x_full, preferred_element_type=f32)   # (inner+h*cvp, HW)

        y = None
        # TODO(synk): if num_heads grows beyond ~2, move heads onto a grid axis
        # so each head's HW*TQ temporaries are scoped to one grid step.
        for h in range(num_heads):
            lo = h * dim_head
            q = q_all[lo:lo + dim_head, :]                    # (dh, TQ)
            k = kv_all[lo:lo + dim_head, :]                   # (dh, HW)
            # Folded V block: rows [0:C] = (Wo_h @ Wv_h) @ x, row C = ones,
            # remaining rows = zero padding (8-sublane alignment).
            v_ext = kv_all[inner + h * cvp: inner + (h + 1) * cvp, :]     # (cvp, HW)

            # Transposed scores S^T = K^T Q : (HW_k, TQ); softmax over keys.
            s = lax.dot_general(k, q, (((0,), (0,)), ((), ())),
                                preferred_element_type=f32)
            s = s - jnp.max(s, axis=0, keepdims=True)         # f32 max-subtract
            p = jnp.exp(s.astype(exp_dtype)).astype(p_dtype)  # (HW_k, TQ)

            # PV matmul also produces the softmax denominator (row `channels`,
            # via the ones channel of x) with f32 MXU accumulation.
            o_ext = jnp.dot(v_ext.astype(p_dtype), p,
                            preferred_element_type=f32)       # (cvp, TQ)
            inv_l = pl.reciprocal(o_ext[channels:channels + 1, :],
                                  approx=approx_recip)        # (1, TQ)
            y_h = o_ext[:channels, :] * inv_l                 # deferred norm
            y = y_h if y is None else y + y_h

        # Output-conv bias (C,1) broadcast over lanes; lane-dense store.
        o_ref[0] = (y + b_ref[...]).astype(o_ref.dtype)
        # TODO(synk): nn.Dropout(p=0.0) is identity at inference; nothing to do.
        # TODO(synk): on v7x, mark a grid axis pltpu.CORE_PARALLEL (or use
        # pl.core_map) to guarantee both TensorCores are fed when B is small.

    return kernel


def _round_up(x, m):
    return ((x + m - 1) // m) * m


def _pick_q_tile(hw):
    """Query-column tile: full HW when small; 128-multiple tile when large."""
    if hw <= 1024:
        return hw
    for t in (512, 256, 128):
        if hw % t == 0:
            return t
    return hw


def _bf16_exp_supported():
    """bf16 EUP path exists on v6e / v7x; v5e and older do not have it."""
    try:
        kind = jax.devices()[0].device_kind.lower()
    except Exception:
        return False
    return ("v6" in kind) or ("v7" in kind)


def frequency_attention(x_nchw, wq, wk, wv, wo, bias, *, num_heads, dim_head,
                        use_bf16_p=True, bf16_exp="auto"):
    """FrequencyAttention forward.

    x_nchw : (B, C, H, W) float32
    wq/wk/wv : (inner, C)  1x1-conv weights (squeezed), inner = heads*dim_head
    wo : (C, inner)        output 1x1-conv weight (squeezed)
    bias : (C,)            output 1x1-conv bias
    use_bf16_p : store exp'd scores (P) in bf16 and run the PV matmul on the
                 native bf16 MXU path (f32 accumulation).  ~5e-3 max relative
                 error; set False for strict f32 verification.
    bf16_exp   : run exp itself in bf16 ("auto" = only on chips with a bf16
                 EUP, i.e. v6e / v7x).  Ignored unless use_bf16_p.
    """
    B, C, H, W = x_nchw.shape
    HW = H * W
    inner = num_heads * dim_head
    scale = float(dim_head) ** (-0.5)

    p_dtype = jnp.bfloat16 if use_bf16_p else jnp.float32
    if bf16_exp == "auto":
        bf16_exp = _bf16_exp_supported()
    exp_dtype = jnp.bfloat16 if (use_bf16_p and bf16_exp) else jnp.float32
    approx_recip = bool(use_bf16_p)

    # --- weight prep (tiny; done once in XLA outside the kernel) -----------
    # Fold the output 1x1 conv into V: per head (C, dh) @ (dh, C) -> (C, C).
    wo_heads = wo.reshape(C, num_heads, dim_head)             # (C, h, dh)
    wv_heads = wv.reshape(num_heads, dim_head, C)             # (h, dh, C)
    wv_fold = jnp.einsum('chd,hdk->hck', wo_heads, wv_heads)  # (h, C, C)

    # Augment x with a constant ones channel; each head's folded-V block gets
    # an extra row selecting it so the PV matmul also yields sum_k p[k, :].
    cvp = _round_up(C + 1, 8)                                 # 8-sublane aligned
    v_blk = jnp.zeros((num_heads, cvp, C + 1), jnp.float32)
    v_blk = v_blk.at[:, :C, :C].set(wv_fold)
    v_blk = v_blk.at[:, C, C].set(1.0)
    v_blk = v_blk.reshape(num_heads * cvp, C + 1)

    zcol = ((0, 0), (0, 1))
    w_fused = jnp.concatenate(
        [jnp.pad(wq * scale, zcol),       # Q rows, 1/sqrt(dh) folded in
         jnp.pad(wk, zcol),               # K rows
         v_blk], axis=0).astype(jnp.float32)                  # (2*inner+h*cvp, C+1)

    x_flat = x_nchw.reshape(B, C, HW)                         # no transpose
    x_aug = jnp.concatenate(
        [x_flat, jnp.ones((B, 1, HW), x_flat.dtype)], axis=1)  # (B, C+1, HW)
    bias2d = bias.reshape(C, 1)

    # --- grid / tiling -------------------------------------------------------
    tq = _pick_q_tile(HW)
    n_qt = HW // tq
    rows = w_fused.shape[0]

    # Raise the scoped VMEM limit only when the per-step working set needs it.
    p_bytes = 2 if use_bf16_p else 4
    est = (num_heads * HW * tq * (4 + p_bytes)        # s (f32) + p per head
           + rows * HW * 4                            # projections
           + 4 * (C + 1) * HW * 4 + 4 * C * tq * 4)   # in/out double buffers
    vmem_limit = None
    if est > (24 << 20):
        vmem_limit = min(int(est * 1.5) + (8 << 20), 112 << 20)

    kernel = _make_kernel(num_heads, dim_head, C, cvp, p_dtype, exp_dtype,
                          approx_recip)

    out = pl.pallas_call(
        kernel,
        out_shape=jax.ShapeDtypeStruct((B, C, HW), jnp.float32),
        grid_spec=pltpu.PrefetchScalarGridSpec(
            num_scalar_prefetch=0,
            grid=(B, n_qt),
            in_specs=[
                pl.BlockSpec((1, C + 1, HW), lambda b, qi: (b, 0, 0)),   # x (K/V cols)
                pl.BlockSpec((1, C + 1, tq), lambda b, qi: (b, 0, qi)),  # x (Q cols)
                pl.BlockSpec((rows, C + 1), lambda b, qi: (0, 0)),       # fused weights
                pl.BlockSpec((C, 1), lambda b, qi: (0, 0)),              # out bias
            ],
            out_specs=pl.BlockSpec((1, C, tq), lambda b, qi: (b, 0, qi)),
        ),
        compiler_params=pltpu.CompilerParams(
            dimension_semantics=("parallel", "parallel"),
            vmem_limit_bytes=vmem_limit),
    )(x_aug, x_aug, w_fused, bias2d)

    return out.reshape(B, C, H, W)


def _reference(x_nchw, wq, wk, wv, wo, bias, *, num_heads, dim_head):
    """Pure-JAX reference mirroring the PyTorch forward exactly."""
    B, C, H, W = x_nchw.shape
    HW = H * W
    scale = dim_head ** (-0.5)
    x = x_nchw.reshape(B, C, HW)                                     # (B, C, HW)
    q = jnp.einsum('ec,bcn->ben', wq, x)                             # (B, inner, HW)
    k = jnp.einsum('ec,bcn->ben', wk, x)
    v = jnp.einsum('ec,bcn->ben', wv, x)
    q = q.reshape(B, num_heads, dim_head, HW).transpose(0, 1, 3, 2)  # (B,h,HW,dh)
    k = k.reshape(B, num_heads, dim_head, HW)                        # (B,h,dh,HW)
    v = v.reshape(B, num_heads, dim_head, HW).transpose(0, 1, 3, 2)  # (B,h,HW,dh)
    attn = jnp.einsum('bhid,bhdj->bhij', q, k) * scale
    attn = jax.nn.softmax(attn, axis=-1)
    out = jnp.einsum('bhij,bhjd->bhid', attn, v)                     # (B,h,HW,dh)
    out = out.transpose(0, 1, 3, 2).reshape(B, num_heads * dim_head, HW)
    y = jnp.einsum('ce,ben->bcn', wo, out) + bias[None, :, None]
    return y.reshape(B, C, H, W)


if __name__ == "__main__":
    # Small shapes consistent with the module defaults.
    B, C, H, W = 2, 4, 16, 16
    num_heads, dim_head = 2, 8
    inner = num_heads * dim_head

    key = jax.random.PRNGKey(0)
    kx, kq, kk, kv, ko, kb = jax.random.split(key, 6)

    x = jax.random.normal(kx, (B, C, H, W), dtype=jnp.float32)

    # Deterministic synthetic parameters (PyTorch Conv2d 1x1 weights squeezed).
    w_scale = 1.0 / math.sqrt(C)
    wq = jax.random.normal(kq, (inner, C), dtype=jnp.float32) * w_scale
    wk = jax.random.normal(kk, (inner, C), dtype=jnp.float32) * w_scale
    wv = jax.random.normal(kv, (inner, C), dtype=jnp.float32) * w_scale
    wo = jax.random.normal(ko, (C, inner), dtype=jnp.float32) / math.sqrt(inner)
    bias = jax.random.normal(kb, (C,), dtype=jnp.float32) * 0.1

    y_ref = jax.block_until_ready(
        _reference(x, wq, wk, wv, wo, bias, num_heads=num_heads, dim_head=dim_head))

    # Fast path: bf16 P stream (+ bf16 exp where the EUP supports it).
    try:
        y_fast = jax.block_until_ready(
            frequency_attention(x, wq, wk, wv, wo, bias, num_heads=num_heads,
                                dim_head=dim_head, use_bf16_p=True, bf16_exp="auto"))
    except Exception:
        # Conservative fallback if this chip rejects the bf16 paths.
        y_fast = jax.block_until_ready(
            frequency_attention(x, wq, wk, wv, wo, bias, num_heads=num_heads,
                                dim_head=dim_head, use_bf16_p=False, bf16_exp=False))
    np.testing.assert_allclose(np.asarray(y_fast), np.asarray(y_ref),
                               rtol=2e-2, atol=2e-2)

    # Strict f32 path: tight reference check (exact semantics preserved).
    y_f32 = jax.block_until_ready(
        frequency_attention(x, wq, wk, wv, wo, bias, num_heads=num_heads,
                            dim_head=dim_head, use_bf16_p=False, bf16_exp=False))
    np.testing.assert_allclose(np.asarray(y_f32), np.asarray(y_ref),
                               rtol=1e-4, atol=1e-4)

    print("KERNEL_OK")
</pallas_src>

<mosaic_0001>
module attributes {stable_mosaic.version = 11 : i64} {
  func.func @kernel(%arg0: i32, %arg1: i32, %arg2: memref<1x5x256xf32, #tpu.memory_space<vmem>>, %arg3: memref<1x5x256xf32, #tpu.memory_space<vmem>>, %arg4: memref<48x5xf32, #tpu.memory_space<vmem>>, %arg5: memref<4x1xf32, #tpu.memory_space<vmem>>, %arg6: memref<1x4x256xf32, #tpu.memory_space<vmem>>) attributes {dimension_semantics = [#tpu.dimension_semantics<parallel>, #tpu.dimension_semantics<parallel>], iteration_bounds = array<i64: 2, 1>, scalar_prefetch = 0 : i64, scratch_operands = 0 : i64, tpu.core_type = #tpu.core_type<tc>, window_params = [{transform_indices = @transform_0, window_bounds = array<i64: 1, 5, 256>}, {transform_indices = @transform_1, window_bounds = array<i64: 1, 5, 256>}, {pipeline_mode = #tpu.pipeline_mode<synchronous>, transform_indices = @transform_2, window_bounds = array<i64: 48, 5>}, {pipeline_mode = #tpu.pipeline_mode<synchronous>, transform_indices = @transform_3, window_bounds = array<i64: 4, 1>}, {transform_indices = @transform_4, window_bounds = array<i64: 1, 4, 256>}]} {
    %c0 = arith.constant 0 : index
    %c0_0 = arith.constant 0 : index
    %c0_1 = arith.constant 0 : index
    %0 = vector.load %arg2[%c0, %c0_0, %c0_1] : memref<1x5x256xf32, #tpu.memory_space<vmem>>, vector<1x5x256xf32>
    %1 = vector.shape_cast %0 : vector<1x5x256xf32> to vector<5x256xf32>
    %c0_2 = arith.constant 0 : index
    %c0_3 = arith.constant 0 : index
    %c0_4 = arith.constant 0 : index
    %2 = vector.load %arg3[%c0_2, %c0_3, %c0_4] : memref<1x5x256xf32, #tpu.memory_space<vmem>>, vector<1x5x256xf32>
    %3 = vector.shape_cast %2 : vector<1x5x256xf32> to vector<5x256xf32>
    %c0_5 = arith.constant 0 : index
    %c0_6 = arith.constant 0 : index
    %4 = vector.load %arg4[%c0_5, %c0_6] : memref<48x5xf32, #tpu.memory_space<vmem>>, vector<48x5xf32>
    %5 = vector.extract_strided_slice %4 {offsets = [0, 0], sizes = [16, 5], strides = [1, 1]} : vector<48x5xf32> to vector<16x5xf32>
    %cst = arith.constant dense<0.000000e+00> : vector<16x256xf32>
    %6 = tpu.matmul %5, %3, %cst {dimension_numbers = #tpu.dot_dimension_numbers<[1], [0], [0], [1], [0, 0, 1, 1], [], []>} : vector<16x5xf32>, vector<5x256xf32>, vector<16x256xf32> -> vector<16x256xf32>
    %7 = vector.extract_strided_slice %4 {offsets = [16, 0], sizes = [32, 5], strides = [1, 1]} : vector<48x5xf32> to vector<32x5xf32>
    %cst_7 = arith.constant dense<0.000000e+00> : vector<32x256xf32>
    %8 = tpu.matmul %7, %1, %cst_7 {dimension_numbers = #tpu.dot_dimension_numbers<[1], [0], [0], [1], [0, 0, 1, 1], [], []>} : vector<32x5xf32>, vector<5x256xf32>, vector<32x256xf32> -> vector<32x256xf32>
    %9 = vector.extract_strided_slice %6 {offsets = [0, 0], sizes = [8, 256], strides = [1, 1]} : vector<16x256xf32> to vector<8x256xf32>
    %10 = vector.extract_strided_slice %8 {offsets = [0, 0], sizes = [8, 256], strides = [1, 1]} : vector<32x256xf32> to vector<8x256xf32>
    %11 = vector.extract_strided_slice %8 {offsets = [16, 0], sizes = [8, 256], strides = [1, 1]} : vector<32x256xf32> to vector<8x256xf32>
    %cst_8 = arith.constant dense<0.000000e+00> : vector<256x256xf32>
    %12 = tpu.matmul %10, %9, %cst_8 {dimension_numbers = #tpu.dot_dimension_numbers<[0], [0], [1], [1], [0, 1, 1, 1], [], []>} : vector<8x256xf32>, vector<8x256xf32>, vector<256x256xf32> -> vector<256x256xf32>
    %cst_9 = arith.constant dense<0xFF800000> : vector<256xf32>
    %13 = vector.multi_reduction <maximumf>, %12, %cst_9 [0] : vector<256x256xf32> to vector<256xf32>
    %14 = vector.shape_cast %13 : vector<256xf32> to vector<1x256xf32>
    %15 = vector.broadcast %14 : vector<1x256xf32> to vector<256x256xf32>
    %16 = arith.subf %12, %15 : vector<256x256xf32>
    %17 = math.exp %16 : vector<256x256xf32>
    %18 = arith.truncf %17 : vector<256x256xf32> to vector<256x256xbf16>
    %19 = arith.truncf %11 : vector<8x256xf32> to vector<8x256xbf16>
    %cst_10 = arith.constant dense<0.000000e+00> : vector<8x256xf32>
    %20 = tpu.matmul %19, %18, %cst_10 {dimension_numbers = #tpu.dot_dimension_numbers<[1], [0], [0], [1], [0, 0, 1, 1], [], []>} : vector<8x256xbf16>, vector<256x256xbf16>, vector<8x256xf32> -> vector<8x256xf32>
    %21 = vector.extract_strided_slice %20 {offsets = [4, 0], sizes = [1, 256], strides = [1, 1]} : vector<8x256xf32> to vector<1x256xf32>
    %22 = tpu.reciprocal %21 {approx = true} : vector<1x256xf32> -> vector<1x256xf32>
    %23 = vector.extract_strided_slice %20 {offsets = [0, 0], sizes = [4, 256], strides = [1, 1]} : vector<8x256xf32> to vector<4x256xf32>
    %24 = vector.broadcast %22 : vector<1x256xf32> to vector<4x256xf32>
    %25 = arith.mulf %23, %24 : vector<4x256xf32>
    %26 = vector.extract_strided_slice %6 {offsets = [8, 0], sizes = [8, 256], strides = [1, 1]} : vector<16x256xf32> to vector<8x256xf32>
    %27 = vector.extract_strided_slice %8 {offsets = [8, 0], sizes = [8, 256], strides = [1, 1]} : vector<32x256xf32> to vector<8x256xf32>
    %28 = vector.extract_strided_slice %8 {offsets = [24, 0], sizes = [8, 256], strides = [1, 1]} : vector<32x256xf32> to vector<8x256xf32>
    %cst_11 = arith.constant dense<0.000000e+00> : vector<256x256xf32>
    %29 = tpu.matmul %27, %26, %cst_11 {dimension_numbers = #tpu.dot_dimension_numbers<[0], [0], [1], [1], [0, 1, 1, 1], [], []>} : vector<8x256xf32>, vector<8x256xf32>, vector<256x256xf32> -> vector<256x256xf32>
    %cst_12 = arith.constant dense<0xFF800000> : vector<256xf32>
    %30 = vector.multi_reduction <maximumf>, %29, %cst_12 [0] : vector<256x256xf32> to vector<256xf32>
    %31 = vector.shape_cast %30 : vector<256xf32> to vector<1x256xf32>
    %32 = vector.broadcast %31 : vector<1x256xf32> to vector<256x256xf32>
    %33 = arith.subf %29, %32 : vector<256x256xf32>
    %34 = math.exp %33 : vector<256x256xf32>
    %35 = arith.truncf %34 : vector<256x256xf32> to vector<256x256xbf16>
    %36 = arith.truncf %28 : vector<8x256xf32> to vector<8x256xbf16>
    %cst_13 = arith.constant dense<0.000000e+00> : vector<8x256xf32>
    %37 = tpu.matmul %36, %35, %cst_13 {dimension_numbers = #tpu.dot_dimension_numbers<[1], [0], [0], [1], [0, 0, 1, 1], [], []>} : vector<8x256xbf16>, vector<256x256xbf16>, vector<8x256xf32> -> vector<8x256xf32>
    %38 = vector.extract_strided_slice %37 {offsets = [4, 0], sizes = [1, 256], strides = [1, 1]} : vector<8x256xf32> to vector<1x256xf32>
    %39 = tpu.reciprocal %38 {approx = true} : vector<1x256xf32> -> vector<1x256xf32>
    %40 = vector.extract_strided_slice %37 {offsets = [0, 0], sizes = [4, 256], strides = [1, 1]} : vector<8x256xf32> to vector<4x256xf32>
    %41 = vector.broadcast %39 : vector<1x256xf32> to vector<4x256xf32>
    %42 = arith.mulf %40, %41 : vector<4x256xf32>
    %43 = arith.addf %25, %42 : vector<4x256xf32>
    %c0_14 = arith.constant 0 : index
    %c0_15 = arith.constant 0 : index
    %44 = vector.load %arg5[%c0_14, %c0_15] : memref<4x1xf32, #tpu.memory_space<vmem>>, vector<4x1xf32>
    %45 = vector.broadcast %44 : vector<4x1xf32> to vector<4x256xf32>
    %46 = arith.addf %43, %45 : vector<4x256xf32>
    %c0_16 = arith.constant 0 : index
    %c0_17 = arith.constant 0 : index
    %c0_18 = arith.constant 0 : index
    %47 = vector.load %arg6[%c0_16, %c0_17, %c0_18] : memref<1x4x256xf32, #tpu.memory_space<vmem>>, vector<1x4x256xf32>
    %48 = vector.shape_cast %47 : vector<1x4x256xf32> to vector<4x256xf32>
    %49 = vector.shape_cast %46 : vector<4x256xf32> to vector<1x4x256xf32>
    tpu.vector_store %arg6[%c0_16, %c0_17, %c0_18], %49 {strides = array<i32>} : memref<1x4x256xf32, #tpu.memory_space<vmem>>, vector<1x4x256xf32>,
    return
  }
  func.func @transform_0(%arg0: i32, %arg1: i32) -> (i32, i32, i32) {
    %c0_i32 = arith.constant 0 : i32
    %c0_i32_0 = arith.constant 0 : i32
    %c0_i32_1 = arith.constant 0 : i32
    return %arg0, %c0_i32, %c0_i32_0 : i32, i32, i32
  }
  func.func @transform_1(%arg0: i32, %arg1: i32) -> (i32, i32, i32) {
    %c0_i32 = arith.constant 0 : i32
    %c0_i32_0 = arith.constant 0 : i32
    return %arg0, %c0_i32, %arg1 : i32, i32, i32
  }
  func.func @transform_2(%arg0: i32, %arg1: i32) -> (i32, i32) {
    %c0_i32 = arith.constant 0 : i32
    %c0_i32_0 = arith.constant 0 : i32
    %c0_i32_1 = arith.constant 0 : i32
    return %c0_i32, %c0_i32_0 : i32, i32
  }
  func.func @transform_3(%arg0: i32, %arg1: i32) -> (i32, i32) {
    %c0_i32 = arith.constant 0 : i32
    %c0_i32_0 = arith.constant 0 : i32
    %c0_i32_1 = arith.constant 0 : i32
    return %c0_i32, %c0_i32_0 : i32, i32
  }
  func.func @transform_4(%arg0: i32, %arg1: i32) -> (i32, i32, i32) {
    %c0_i32 = arith.constant 0 : i32
    %c0_i32_0 = arith.constant 0 : i32
    return %arg0, %c0_i32, %arg1 : i32, i32, i32
  }
}

module attributes {stable_mosaic.version = 11 : i64} {
  func.func @kernel(%arg0: i32, %arg1: i32, %arg2: memref<1x5x256xf32, #tpu.memory_space<vmem>>, %arg3: memref<1x5x256xf32, #tpu.memory_space<vmem>>, %arg4: memref<48x5xf32, #tpu.memory_space<vmem>>, %arg5: memref<4x1xf32, #tpu.memory_space<vmem>>, %arg6: memref<1x4x256xf32, #tpu.memory_space<vmem>>) attributes {dimension_semantics = [#tpu.dimension_semantics<parallel>, #tpu.dimension_semantics<parallel>], iteration_bounds = array<i64: 2, 1>, scalar_prefetch = 0 : i64, scratch_operands = 0 : i64, tpu.core_type = #tpu.core_type<tc>, window_params = [{transform_indices = @transform_0, window_bounds = array<i64: 1, 5, 256>}, {transform_indices = @transform_1, window_bounds = array<i64: 1, 5, 256>}, {pipeline_mode = #tpu.pipeline_mode<synchronous>, transform_indices = @transform_2, window_bounds = array<i64: 48, 5>}, {pipeline_mode = #tpu.pipeline_mode<synchronous>, transform_indices = @transform_3, window_bounds = array<i64: 4, 1>}, {transform_indices = @transform_4, window_bounds = array<i64: 1, 4, 256>}]} {
    %c0 = arith.constant 0 : index
    %c0_0 = arith.constant 0 : index
    %c0_1 = arith.constant 0 : index
    %0 = vector.load %arg2[%c0, %c0_0, %c0_1] : memref<1x5x256xf32, #tpu.memory_space<vmem>>, vector<1x5x256xf32>
    %1 = vector.shape_cast %0 : vector<1x5x256xf32> to vector<5x256xf32>
    %c0_2 = arith.constant 0 : index
    %c0_3 = arith.constant 0 : index
    %c0_4 = arith.constant 0 : index
    %2 = vector.load %arg3[%c0_2, %c0_3, %c0_4] : memref<1x5x256xf32, #tpu.memory_space<vmem>>, vector<1x5x256xf32>
    %3 = vector.shape_cast %2 : vector<1x5x256xf32> to vector<5x256xf32>
    %c0_5 = arith.constant 0 : index
    %c0_6 = arith.constant 0 : index
    %4 = vector.load %arg4[%c0_5, %c0_6] : memref<48x5xf32, #tpu.memory_space<vmem>>, vector<48x5xf32>
    %5 = vector.extract_strided_slice %4 {offsets = [0, 0], sizes = [16, 5], strides = [1, 1]} : vector<48x5xf32> to vector<16x5xf32>
    %cst = arith.constant dense<0.000000e+00> : vector<16x256xf32>
    %6 = tpu.matmul %5, %3, %cst {dimension_numbers = #tpu.dot_dimension_numbers<[1], [0], [0], [1], [0, 0, 1, 1], [], []>} : vector<16x5xf32>, vector<5x256xf32>, vector<16x256xf32> -> vector<16x256xf32>
    %7 = vector.extract_strided_slice %4 {offsets = [16, 0], sizes = [32, 5], strides = [1, 1]} : vector<48x5xf32> to vector<32x5xf32>
    %cst_7 = arith.constant dense<0.000000e+00> : vector<32x256xf32>
    %8 = tpu.matmul %7, %1, %cst_7 {dimension_numbers = #tpu.dot_dimension_numbers<[1], [0], [0], [1], [0, 0, 1, 1], [], []>} : vector<32x5xf32>, vector<5x256xf32>, vector<32x256xf32> -> vector<32x256xf32>
    %9 = vector.extract_strided_slice %6 {offsets = [0, 0], sizes = [8, 256], strides = [1, 1]} : vector<16x256xf32> to vector<8x256xf32>
    %10 = vector.extract_strided_slice %8 {offsets = [0, 0], sizes = [8, 256], strides = [1, 1]} : vector<32x256xf32> to vector<8x256xf32>
    %11 = vector.extract_strided_slice %8 {offsets = [16, 0], sizes = [8, 256], strides = [1, 1]} : vector<32x256xf32> to vector<8x256xf32>
    %cst_8 = arith.constant dense<0.000000e+00> : vector<256x256xf32>
    %12 = tpu.matmul %10, %9, %cst_8 {dimension_numbers = #tpu.dot_dimension_numbers<[0], [0], [1], [1], [0, 1, 1, 1], [], []>} : vector<8x256xf32>, vector<8x256xf32>, vector<256x256xf32> -> vector<256x256xf32>
    %cst_9 = arith.constant dense<0xFF800000> : vector<256xf32>
    %13 = vector.multi_reduction <maximumf>, %12, %cst_9 [0] : vector<256x256xf32> to vector<256xf32>
    %14 = vector.shape_cast %13 : vector<256xf32> to vector<1x256xf32>
    %15 = vector.broadcast %14 : vector<1x256xf32> to vector<256x256xf32>
    %16 = arith.subf %12, %15 : vector<256x256xf32>
    %17 = math.exp %16 : vector<256x256xf32>
    %cst_10 = arith.constant dense<0.000000e+00> : vector<8x256xf32>
    %18 = tpu.matmul %11, %17, %cst_10 {dimension_numbers = #tpu.dot_dimension_numbers<[1], [0], [0], [1], [0, 0, 1, 1], [], []>} : vector<8x256xf32>, vector<256x256xf32>, vector<8x256xf32> -> vector<8x256xf32>
    %19 = vector.extract_strided_slice %18 {offsets = [4, 0], sizes = [1, 256], strides = [1, 1]} : vector<8x256xf32> to vector<1x256xf32>
    %20 = tpu.reciprocal %19 : vector<1x256xf32> -> vector<1x256xf32>
    %21 = vector.extract_strided_slice %18 {offsets = [0, 0], sizes = [4, 256], strides = [1, 1]} : vector<8x256xf32> to vector<4x256xf32>
    %22 = vector.broadcast %20 : vector<1x256xf32> to vector<4x256xf32>
    %23 = arith.mulf %21, %22 : vector<4x256xf32>
    %24 = vector.extract_strided_slice %6 {offsets = [8, 0], sizes = [8, 256], strides = [1, 1]} : vector<16x256xf32> to vector<8x256xf32>
    %25 = vector.extract_strided_slice %8 {offsets = [8, 0], sizes = [8, 256], strides = [1, 1]} : vector<32x256xf32> to vector<8x256xf32>
    %26 = vector.extract_strided_slice %8 {offsets = [24, 0], sizes = [8, 256], strides = [1, 1]} : vector<32x256xf32> to vector<8x256xf32>
    %cst_11 = arith.constant dense<0.000000e+00> : vector<256x256xf32>
    %27 = tpu.matmul %25, %24, %cst_11 {dimension_numbers = #tpu.dot_dimension_numbers<[0], [0], [1], [1], [0, 1, 1, 1], [], []>} : vector<8x256xf32>, vector<8x256xf32>, vector<256x256xf32> -> vector<256x256xf32>
    %cst_12 = arith.constant dense<0xFF800000> : vector<256xf32>
    %28 = vector.multi_reduction <maximumf>, %27, %cst_12 [0] : vector<256x256xf32> to vector<256xf32>
    %29 = vector.shape_cast %28 : vector<256xf32> to vector<1x256xf32>
    %30 = vector.broadcast %29 : vector<1x256xf32> to vector<256x256xf32>
    %31 = arith.subf %27, %30 : vector<256x256xf32>
    %32 = math.exp %31 : vector<256x256xf32>
    %cst_13 = arith.constant dense<0.000000e+00> : vector<8x256xf32>
    %33 = tpu.matmul %26, %32, %cst_13 {dimension_numbers = #tpu.dot_dimension_numbers<[1], [0], [0], [1], [0, 0, 1, 1], [], []>} : vector<8x256xf32>, vector<256x256xf32>, vector<8x256xf32> -> vector<8x256xf32>
    %34 = vector.extract_strided_slice %33 {offsets = [4, 0], sizes = [1, 256], strides = [1, 1]} : vector<8x256xf32> to vector<1x256xf32>
    %35 = tpu.reciprocal %34 : vector<1x256xf32> -> vector<1x256xf32>
    %36 = vector.extract_strided_slice %33 {offsets = [0, 0], sizes = [4, 256], strides = [1, 1]} : vector<8x256xf32> to vector<4x256xf32>
    %37 = vector.broadcast %35 : vector<1x256xf32> to vector<4x256xf32>
    %38 = arith.mulf %36, %37 : vector<4x256xf32>
    %39 = arith.addf %23, %38 : vector<4x256xf32>
    %c0_14 = arith.constant 0 : index
    %c0_15 = arith.constant 0 : index
    %40 = vector.load %arg5[%c0_14, %c0_15] : memref<4x1xf32, #tpu.memory_space<vmem>>, vector<4x1xf32>
    %41 = vector.broadcast %40 : vector<4x1xf32> to vector<4x256xf32>
    %42 = arith.addf %39, %41 : vector<4x256xf32>
    %c0_16 = arith.constant 0 : index
    %c0_17 = arith.constant 0 : index
    %c0_18 = arith.constant 0 : index
    %43 = vector.load %arg6[%c0_16, %c0_17, %c0_18] : memref<1x4x256xf32, #tpu.memory_space<vmem>>, vector<1x4x256xf32>
    %44 = vector.shape_cast %43 : vector<1x4x256xf32> to vector<4x256xf32>
    %45 = vector.shape_cast %42 : vector<4x256xf32> to vector<1x4x256xf32>
    tpu.vector_store %arg6[%c0_16, %c0_17, %c0_18], %45 {strides = array<i32>} : memref<1x4x256xf32, #tpu.memory_space<vmem>>, vector<1x4x256xf32>,
    return
  }
  func.func @transform_0(%arg0: i32, %arg1: i32) -> (i32, i32, i32) {
    %c0_i32 = arith.constant 0 : i32
    %c0_i32_0 = arith.constant 0 : i32
    %c0_i32_1 = arith.constant 0 : i32
    return %arg0, %c0_i32, %c0_i32_0 : i32, i32, i32
  }
  func.func @transform_1(%arg0: i32, %arg1: i32) -> (i32, i32, i32) {
    %c0_i32 = arith.constant 0 : i32
    %c0_i32_0 = arith.constant 0 : i32
    return %arg0, %c0_i32, %arg1 : i32, i32, i32
  }
  func.func @transform_2(%arg0: i32, %arg1: i32) -> (i32, i32) {
    %c0_i32 = arith.constant 0 : i32
    %c0_i32_0 = arith.constant 0 : i32
    %c0_i32_1 = arith.constant 0 : i32
    return %c0_i32, %c0_i32_0 : i32, i32
  }
  func.func @transform_3(%arg0: i32, %arg1: i32) -> (i32, i32) {
    %c0_i32 = arith.constant 0 : i32
    %c0_i32_0 = arith.constant 0 : i32
    %c0_i32_1 = arith.constant 0 : i32
    return %c0_i32, %c0_i32_0 : i32, i32
  }
  func.func @transform_4(%arg0: i32, %arg1: i32) -> (i32, i32, i32) {
    %c0_i32 = arith.constant 0 : i32
    %c0_i32_0 = arith.constant 0 : i32
    return %arg0, %c0_i32, %arg1 : i32, i32, i32
  }
}

</mosaic_0001>

<llo_original>
// kernel: tpu_custom_call.1
$region0: #{tpu_custom_call.1}
  #allocation0 [shape = 'u32[]', space=smem, size = 0x4, offset = 0x4, fixed_abs, tag = 'smem constant byte address 0x4 - core index']
  #allocation1 [shape = 'u32[144,128]{1,0:T(1,128)}', space=vmem, size = 0x12000, scoped, tag = 'internal scratch']
  %s0 = inlined_call_operand.vmem [shape: f32[2,5,256], index: 0, kind: input, shape index: {}]
  %s1 = inlined_call_operand.vmem [shape: f32[2,5,256], index: 1, kind: input, shape index: {}]
  %s2 = inlined_call_operand.vmem [shape: f32[48,5], index: 2, kind: input, shape index: {}]
  %s3 = inlined_call_operand.vmem [shape: f32[4,1], index: 3, kind: input, shape index: {}]
  %s4 = inlined_call_operand.hbm [shape: f32[2,4,256], index: 4, kind: output, shape index: {}]
  %s5 = sld [smem:[#allocation0]]
  $region49: #{tpu_custom_call.1} parent=0
    _
  %s7 = ssub.s32 1, %s5
  %s8 = scalar_select 0, %s7, %s5
  $region1: #{tpu_custom_call.1} parent=0
    #allocation2 [shape = 'u8[8192]{0}', space=vmem, size = 0x2000, scoped, tag = 'output window, operand 0']
    #allocation3 [shape = 's32[2]{0}', space=sflag, size = 0x8, scoped, tag = 'scoped memory for tpu_custom_call.1']
    %9 = vsyncpa [#allocation3], 0
    %s10 = scalar_lea.sflag [#allocation3], 1
    %11 = vsyncpa %s10, 0
    loop: start=0, step=1, limit=4
    $region2: #{tpu_custom_call.1} parent=1 // loop_pre_header
      _
    $region3: #{tpu_custom_call.1} parent=1 // loop_header
      %s13 = sphi 0, %s17
      %p14 = scmp.ge.s32.totalorder %s13, 4
      %s20 = sphi 0, %s32
      %s21 = sphi 0, %s28
      %s22 = sphi 0, %s20
      %s23 = sphi 0, %s21
      %s24 = sphi 0, %s22
      %s25 = sphi 0, %s23
      %s35 = sphi 0, %s37
      %s38 = sphi 0, %s35
      %s39 = sphi 0, %s38
      %s55 = sphi 0, %s39
      %s63 = sphi 0, %s65
      %s66 = sphi 0, %s63
      %s67 = sphi 0, %s66
      %s83 = sphi 0, %s67
      %s87 = sphi 0, %s87
      %s89 = sphi 0, %s87
      %s90 = sphi 0, %s89
      %s104 = sphi 0, %s90
      %s108 = sphi 0, %s108
      %s110 = sphi 0, %s108
      %s111 = sphi 0, %s110
      %s125 = sphi 0, %s111
      %s133 = sphi 0, %s135
      %s136 = sphi 0, %s133
      %s137 = sphi 0, %s136
      %s153 = sphi 0, %s137
    $region4: #{tpu_custom_call.1} parent=1 // loop_header_branch
      %16 = sbr.rel (%p14) target = $region8
    $region5: #{tpu_custom_call.1} parent=1 // loop_body
      %s18 = ssub.s32 %s13, 1
      %s19 = ssub.s32 %s13, 2
      %s26 = sadd.s32 1, %s21
      %p27 = scmp.ge.s32.totalorder %s26, 1
      %s28 = scalar_select %p27, 0, %s26
      %s29 = sadd.s32 1, %s20
      %s30 = scalar_select %p27, %s29, %s20
      %p31 = scmp.ge.s32.totalorder %s30, 2
      %s32 = scalar_select %p31, 0, %s30
      %s33 = ssub.s32 %s20, %s32
      %p34 = scmp.eq.s32.totalorder %s33, 0
      %s36 = sadd.s32 %s35, 1
      %s37 = scalar_select %p34, %s35, %s36
      %p40 = pneg %p34
      %p41 = scmp.eq.s32.totalorder %s13, 1
      %p42 = por %p40, %p41
      %p43 = scmp.ne.s32.totalorder %s35, %s38
      %p44 = scmp.eq.s32.totalorder %s13, 0
      %p45 = por %p43, %p44
      %p46 = scmp.ne.s32.totalorder %s35, %s38
      %p47 = scmp.eq.s32.totalorder %s18, 1
      %p48 = por %p46, %p47
      %p49 = scmp.ne.s32.totalorder %s38, %s39
      %p50 = scmp.eq.s32.totalorder %s18, 0
      %p51 = por %p49, %p50
      %p52 = scmp.ne.s32.totalorder %s38, %s39
      %p53 = scmp.eq.s32.totalorder %s19, 1
      %p54 = por %p52, %p53
      %p56 = scmp.ne.s32.totalorder %s39, %s55
      %p57 = scmp.eq.s32.totalorder %s19, 0
      %p58 = por %p56, %p57
      %s59 = ssub.s32 %s20, %s32
      %s60 = ssub.s32 %s21, %s28
      %s61 = sor.u32 %s59, %s60
      %p62 = scmp.eq.s32.totalorder %s61, 0
      %s64 = sadd.s32 %s63, 1
      %s65 = scalar_select %p62, %s63, %s64
      %p68 = pneg %p62
      %p69 = scmp.eq.s32.totalorder %s13, 1
      %p70 = por %p68, %p69
      %p71 = scmp.ne.s32.totalorder %s63, %s66
      %p72 = scmp.eq.s32.totalorder %s13, 0
      %p73 = por %p71, %p72
      %p74 = scmp.ne.s32.totalorder %s63, %s66
      %p75 = scmp.eq.s32.totalorder %s18, 1
      %p76 = por %p74, %p75
      %p77 = scmp.ne.s32.totalorder %s66, %s67
      %p78 = scmp.eq.s32.totalorder %s18, 0
      %p79 = por %p77, %p78
      %p80 = scmp.ne.s32.totalorder %s66, %s67
      %p81 = scmp.eq.s32.totalorder %s19, 1
      %p82 = por %p80, %p81
      %p84 = scmp.ne.s32.totalorder %s67, %s83
      %p85 = scmp.eq.s32.totalorder %s19, 0
      %p86 = por %p84, %p85
      %s88 = sadd.s32 %s87, 1
      %p91 = scmp.eq.s32.totalorder %s13, 1
      %p92 = scmp.ne.s32.totalorder %s87, %s89
      %p93 = scmp.eq.s32.totalorder %s13, 0
      %p94 = por %p92, %p93
      %p95 = scmp.ne.s32.totalorder %s87, %s89
      %p96 = scmp.eq.s32.totalorder %s18, 1
      %p97 = por %p95, %p96
      %p98 = scmp.ne.s32.totalorder %s89, %s90
      %p99 = scmp.eq.s32.totalorder %s18, 0
      %p100 = por %p98, %p99
      %p101 = scmp.ne.s32.totalorder %s89, %s90
      %p102 = scmp.eq.s32.totalorder %s19, 1
      %p103 = por %p101, %p102
      %p105 = scmp.ne.s32.totalorder %s90, %s104
      %p106 = scmp.eq.s32.totalorder %s19, 0
      %p107 = por %p105, %p106
      %s109 = sadd.s32 %s108, 1
      %p112 = scmp.eq.s32.totalorder %s13, 1
      %p113 = scmp.ne.s32.totalorder %s108, %s110
      %p114 = scmp.eq.s32.totalorder %s13, 0
      %p115 = por %p113, %p114
      %p116 = scmp.ne.s32.totalorder %s108, %s110
      %p117 = scmp.eq.s32.totalorder %s18, 1
      %p118 = por %p116, %p117
      %p119 = scmp.ne.s32.totalorder %s110, %s111
      %p120 = scmp.eq.s32.totalorder %s18, 0
      %p121 = por %p119, %p120
      %p122 = scmp.ne.s32.totalorder %s110, %s111
      %p123 = scmp.eq.s32.totalorder %s19, 1
      %p124 = por %p122, %p123
      %p126 = scmp.ne.s32.totalorder %s111, %s125
      %p127 = scmp.eq.s32.totalorder %s19, 0
      %p128 = por %p126, %p127
      %s129 = ssub.s32 %s20, %s32
      %s130 = ssub.s32 %s21, %s28
      %s131 = sor.u32 %s129, %s130
      %p132 = scmp.eq.s32.totalorder %s131, 0
      %s134 = sadd.s32 %s133, 1
      %s135 = scalar_select %p132, %s133, %s134
      %p138 = pneg %p132
      %p139 = scmp.eq.s32.totalorder %s13, 1
      %p140 = por %p138, %p139
      %p141 = scmp.ne.s32.totalorder %s133, %s136
      %p142 = scmp.eq.s32.totalorder %s13, 0
      %p143 = por %p141, %p142
      %p144 = scmp.ne.s32.totalorder %s133, %s136
      %p145 = scmp.eq.s32.totalorder %s18, 1
      %p146 = por %p144, %p145
      %p147 = scmp.ne.s32.totalorder %s136, %s137
      %p148 = scmp.eq.s32.totalorder %s18, 0
      %p149 = por %p147, %p148
      %p150 = scmp.ne.s32.totalorder %s136, %s137
      %p151 = scmp.eq.s32.totalorder %s19, 1
      %p152 = por %p150, %p151
      %p154 = scmp.ne.s32.totalorder %s137, %s153
      %p155 = scmp.eq.s32.totalorder %s19, 0
      %p156 = por %p154, %p155
      %p157 = scmp.le.s32.totalorder 1, %s13
      %p158 = scmp.lt.s32.totalorder %s13, 3
      %p159 = pnand %p157, %p158
      %p160 = pneg %p159
      // Predicated region
      $region9: #{tpu_custom_call.1} parent=5 // pred_check
        _
      $region10: #{tpu_custom_call.1} parent=5 // pred_check_branch
        %162 = sbr.rel (%p159) target = $region12
      $region11: #{tpu_custom_call.1} parent=5 // pred_region
        %s163 = ssub.s32 %s13, 1
        // Predicated region
        $region13: #{tpu_custom_call.1} parent=11 // pred_check
          %p164 = pneg %p100
        $region14: #{tpu_custom_call.1} parent=11 // pred_check_branch
          %166 = sbr.rel (%p164) target = $region16
        $region15: #{tpu_custom_call.1} parent=11 // pred_region
          _
        $region16: #{tpu_custom_call.1} parent=11 // pred_fallthru
          _
        // Predicated region
        $region17: #{tpu_custom_call.1} parent=11 // pred_check
          %p167 = pneg %p121
        $region18: #{tpu_custom_call.1} parent=11 // pred_check_branch
          %169 = sbr.rel (%p167) target = $region20
        $region19: #{tpu_custom_call.1} parent=11 // pred_region
          _
        $region20: #{tpu_custom_call.1} parent=11 // pred_fallthru
          _
      $region12: #{tpu_custom_call.1} parent=5 // pred_fallthru
        _
      %p170 = scmp.lt.s32.totalorder %s13, 2
      // Predicated region
      $region21: #{tpu_custom_call.1} parent=5 // pred_check
        %p171 = pneg %p170
      $region22: #{tpu_custom_call.1} parent=5 // pred_check_branch
        %173 = sbr.rel (%p171) target = $region24
      $region23: #{tpu_custom_call.1} parent=5 // pred_region
        // Predicated region
        $region25: #{tpu_custom_call.1} parent=23 // pred_check
          %p174 = pneg %p45
        $region26: #{tpu_custom_call.1} parent=23 // pred_check_branch
          %176 = sbr.rel (%p174) target = $region28
        $region27: #{tpu_custom_call.1} parent=23 // pred_region
          %p177 = scmp.lt.s32.totalorder %s20, 1
          %s178 = scalar_select %p177, %s20, 1
          %s179 = smul.addr %s178, 2
          %s180 = smul.addr %s179, 8
          %s181 = scalar_lea.vmem %s0, %s180
        $region28: #{tpu_custom_call.1} parent=23 // pred_fallthru
          _
        // Predicated region
        $region29: #{tpu_custom_call.1} parent=23 // pred_check
          %p182 = pneg %p73
        $region30: #{tpu_custom_call.1} parent=23 // pred_check_branch
          %184 = sbr.rel (%p182) target = $region32
        $region31: #{tpu_custom_call.1} parent=23 // pred_region
          %s185 = smul.u32 2, %s21
          %p186 = scmp.lt.s32.totalorder %s20, 1
          %s187 = scalar_select %p186, %s20, 1
          %p188 = scmp.lt.s32.totalorder %s185, 1
          %s189 = scalar_select %p188, %s185, 1
          %s190 = smul.addr %s187, 2
          %s191 = sadd.s32 %s189, %s190
          %s192 = smul.addr %s191, 8
          %s193 = scalar_lea.vmem %s1, %s192
          %s194 = smul.u32 2, %s21
        $region32: #{tpu_custom_call.1} parent=23 // pred_fallthru
          _
      $region24: #{tpu_custom_call.1} parent=5 // pred_fallthru
        _
      %p195 = scmp.le.s32.totalorder 1, %s13
      %p196 = scmp.lt.s32.totalorder %s13, 3
      %p197 = pnand %p195, %p196
      %p198 = pneg %p197
      // Predicated region
      $region33: #{tpu_custom_call.1} parent=5 // pred_check
        _
      $region34: #{tpu_custom_call.1} parent=5 // pred_check_branch
        %200 = sbr.rel (%p197) target = $region36
      $region35: #{tpu_custom_call.1} parent=5 // pred_region
        %s201 = ssub.s32 %s13, 1
        %p202 = scmp.lt.s32.totalorder %s22, 1
        %s203 = scalar_select %p202, %s22, 1
        %s204 = smul.addr %s203, 2
        %s205 = smul.addr %s204, 8
        %s206 = scalar_lea.vmem %s0, %s205
        %p207 = pneg %p51
        %p208 = pneg %p48
        %s209 = smul.u32 2, %s23
        %p210 = scmp.lt.s32.totalorder %s22, 1
        %s211 = scalar_select %p210, %s22, 1
        %p212 = scmp.lt.s32.totalorder %s209, 1
        %s213 = scalar_select %p212, %s209, 1
        %s214 = smul.addr %s211, 2
        %s215 = sadd.s32 %s213, %s214
        %s216 = smul.addr %s215, 8
        %s217 = scalar_lea.vmem %s1, %s216
        %p218 = pneg %p79
        %p219 = pneg %p76
        %p220 = pneg %p100
        %p221 = pneg %p97
        %p222 = pneg %p121
        %p223 = pneg %p118
        %p224 = pneg %p149
        %p225 = pneg %p146
        %s226 = sand.u32 %s136, 1
        %s227 = scalar_lea.sflag [#allocation3], %s226
        %s228 = sand.u32 %s136, 1
        %s229 = smul.addr %s228, 8
        %s230 = scalar_lea.vmem [#allocation2], %s229
        %p231 = scmp.lt.s32.totalorder %s22, 1
        %s232 = scalar_select %p231, %s22, 1
        %s233 = smul.addr %s232, 2
        %s234 = smul.addr %s233, 8
        %s235 = scalar_lea.vmem %s0, %s234
        %s236 = smul.u32 2, %s23
        %p237 = scmp.lt.s32.totalorder %s22, 1
        %s238 = scalar_select %p237, %s22, 1
        %p239 = scmp.lt.s32.totalorder %s236, 1
        %s240 = scalar_select %p239, %s236, 1
        %s241 = smul.addr %s238, 2
        %s242 = sadd.s32 %s240, %s241
        %s243 = smul.addr %s242, 8
        %s244 = scalar_lea.vmem %s1, %s243
        %s245 = smul.u32 2, %s23
        %s246 = smul.u32 2, %s23
        %v247 = vld [vmem:[%s235] sm:$0x1f]
        %v248 = vld [vmem:[%s235 + $0x8] sm:$0x1f]
        %v249 = vld [vmem:[%s244] sm:$0x1f]
        %v250 = vld [vmem:[%s244 + $0x8] sm:$0x1f]
        %v251 = vld [vmem:[%s2] sm:$0xff]
        %v252 = vld [vmem:[%s2 + $0x8] sm:$0xff]
        %v253 = vld [vmem:[%s2 + $0x10] sm:$0xff]
        %v254 = vld [vmem:[%s2 + $0x18] sm:$0xff]
        %v255 = vld [vmem:[%s2 + $0x20] sm:$0xff]
        %v256 = vld [vmem:[%s2 + $0x28] sm:$0xff]
        %vm257 = vcmask 39936
        %v259 = vsel %vm257, %v251, 0
        %v262 = vsel %vm257, %v252, 0
        %vm264 = vcmask 1044480
        %v266 = vsel %vm264, %v249, 0
        %v269 = vsel %vm264, %v250, 0
        %271 = vmatprep.subr.mxu0 %v269
        %272 = vmatpush1.msra.mxu0 %v266
        %273 = vmatprep.subr.mxu0 0.0
        %274 = vmatpush1.msra.mxu0 0.0
        %275 = vmatprep.subr.mxu0 0.0
        %276 = vmatpush1.msra.mxu0 0.0
        %277 = vmatprep.subr.mxu0 0.0
        %278 = vmatpush1.msra.mxu0 0.0
        %279 = vmatprep.subr.mxu0 0.0
        %280 = vmatpush1.msra.mxu0 0.0
        %281 = vmatprep.subr.mxu0 0.0
        %282 = vmatpush1.msra.mxu0 0.0
        %283 = vmatprep.subr.mxu0 0.0
        %284 = vmatpush1.msra.mxu0 0.0
        %285 = vmatprep.subr.mxu0 0.0
        %286 = vmatpush1.msra.mxu0 0.0
        %287 = vmatprep.subr.mxu0 0.0
        %288 = vmatpush1.msra.mxu0 0.0
        %289 = vmatprep.subr.mxu0 0.0
        %290 = vmatpush1.msra.mxu0 0.0
        %291 = vmatprep.subr.mxu0 0.0
        %292 = vmatpush1.msra.mxu0 0.0
        %293 = vmatprep.subr.mxu0 0.0
        %294 = vmatpush1.msra.mxu0 0.0
        %295 = vmatprep.subr.mxu0 0.0
        %296 = vmatpush1.msra.mxu0 0.0
        %297 = vmatprep.subr.mxu0 0.0
        %298 = vmatpush1.msra.mxu0 0.0
        %299 = vmatprep.subr.mxu0 0.0
        %300 = vmatpush1.msra.mxu0 0.0
        %301 = vmatprep.subr.mxu0 0.0
        %302 = vmatpush1.msra.mxu0 0.0
        %303 = vmatprep.subr.mxu0 0.0
        %304 = vmatpush1.msra.mxu0 0.0
        %305 = vmatprep.subr.mxu0 0.0
        %306 = vmatpush1.msra.mxu0 0.0
        %307 = vmatprep.subr.mxu0 0.0
        %308 = vmatpush1.msra.mxu0 0.0
        %309 = vmatprep.subr.mxu0 0.0
        %310 = vmatpush1.msra.mxu0 0.0
        %311 = vmatprep.subr.mxu0 0.0
        %312 = vmatpush1.msra.mxu0 0.0
        %313 = vmatprep.subr.mxu0 0.0
        %314 = vmatpush1.msra.mxu0 0.0
        %315 = vmatprep.subr.mxu0 0.0
        %316 = vmatpush1.msra.mxu0 0.0
        %317 = vmatprep.subr.mxu0 0.0
        %318 = vmatpush1.msra.mxu0 0.0
        %319 = vmatprep.subr.mxu0 0.0
        %320 = vmatpush1.msra.mxu0 0.0
        %321 = vmatprep.subr.mxu0 0.0
        %322 = vmatpush1.msra.mxu0 0.0
        %323 = vmatprep.subr.mxu0 0.0
        %324 = vmatpush1.msra.mxu0 0.0
        %325 = vmatprep.subr.mxu0 0.0
        %326 = vmatpush1.msra.mxu0 0.0
        %327 = vmatprep.subr.mxu0 0.0
        %328 = vmatpush1.msra.mxu0 0.0
        %329 = vmatprep.subr.mxu0 0.0
        %330 = vmatpush1.msra.mxu0 0.0
        %331 = vmatprep.subr.mxu0 0.0
        %332 = vmatpush1.msra.mxu0 0.0
        %333 = vmatprep.subr.mxu0 0.0
        %334 = vmatpush1.msra.mxu0 0.0
        %335 = vmatprep.mubr.f32.mxu0 0.0
        %336 = vmatmul.mubr.f32.gmra.mrb[0].mxu0 %v259
        %v337 = vpop.f32.mrb[0].mxu0
        %v338 = vadd.f32 0.0, %v337
        %v339 = vpop.f32.mrb[0].mxu0
        %v340 = vadd.f32 0.0, %v339
        %341 = vmatprep.mubr.f32.mxu0 0.0
        %342 = vmatmul.mubr.f32.gmra.mrb[0].mxu0 %v262
        %v343 = vpop.f32.mrb[0].mxu0
        %v344 = vadd.f32 0.0, %v343
        %v345 = vpop.f32.mrb[0].mxu0
        %v346 = vadd.f32 0.0, %v345
        %347 = vdwg.mxu0
        %v349 = vsel %vm257, %v253, 0
        %v352 = vsel %vm257, %v254, 0
        %v355 = vsel %vm257, %v255, 0
        %v358 = vsel %vm257, %v256, 0
        %v361 = vsel %vm264, %v247, 0
        %v364 = vsel %vm264, %v248, 0
        %366 = vmatprep.subr.mxu0 %v364
        %367 = vmatpush1.msra.mxu0 %v361
        %368 = vmatprep.subr.mxu0 0.0
        %369 = vmatpush1.msra.mxu0 0.0
        %370 = vmatprep.subr.mxu0 0.0
        %371 = vmatpush1.msra.mxu0 0.0
        %372 = vmatprep.subr.mxu0 0.0
        %373 = vmatpush1.msra.mxu0 0.0
        %374 = vmatprep.subr.mxu0 0.0
        %375 = vmatpush1.msra.mxu0 0.0
        %376 = vmatprep.subr.mxu0 0.0
        %377 = vmatpush1.msra.mxu0 0.0
        %378 = vmatprep.subr.mxu0 0.0
        %379 = vmatpush1.msra.mxu0 0.0
        %380 = vmatprep.subr.mxu0 0.0
        %381 = vmatpush1.msra.mxu0 0.0
        %382 = vmatprep.subr.mxu0 0.0
        %383 = vmatpush1.msra.mxu0 0.0
        %384 = vmatprep.subr.mxu0 0.0
        %385 = vmatpush1.msra.mxu0 0.0
        %386 = vmatprep.subr.mxu0 0.0
        %387 = vmatpush1.msra.mxu0 0.0
        %388 = vmatprep.subr.mxu0 0.0
        %389 = vmatpush1.msra.mxu0 0.0
        %390 = vmatprep.subr.mxu0 0.0
        %391 = vmatpush1.msra.mxu0 0.0
        %392 = vmatprep.subr.mxu0 0.0
        %393 = vmatpush1.msra.mxu0 0.0
        %394 = vmatprep.subr.mxu0 0.0
        %395 = vmatpush1.msra.mxu0 0.0
        %396 = vmatprep.subr.mxu0 0.0
        %397 = vmatpush1.msra.mxu0 0.0
        %398 = vmatprep.subr.mxu0 0.0
        %399 = vmatpush1.msra.mxu0 0.0
        %400 = vmatprep.subr.mxu0 0.0
        %401 = vmatpush1.msra.mxu0 0.0
        %402 = vmatprep.subr.mxu0 0.0
        %403 = vmatpush1.msra.mxu0 0.0
        %404 = vmatprep.subr.mxu0 0.0
        %405 = vmatpush1.msra.mxu0 0.0
        %406 = vmatprep.subr.mxu0 0.0
        %407 = vmatpush1.msra.mxu0 0.0
        %408 = vmatprep.subr.mxu0 0.0
        %409 = vmatpush1.msra.mxu0 0.0
        %410 = vmatprep.subr.mxu0 0.0
        %411 = vmatpush1.msra.mxu0 0.0
        %412 = vmatprep.subr.mxu0 0.0
        %413 = vmatpush1.msra.mxu0 0.0
        %414 = vmatprep.subr.mxu0 0.0
        %415 = vmatpush1.msra.mxu0 0.0
        %416 = vmatprep.subr.mxu0 0.0
        %417 = vmatpush1.msra.mxu0 0.0
        %418 = vmatprep.subr.mxu0 0.0
        %419 = vmatpush1.msra.mxu0 0.0
        %420 = vmatprep.subr.mxu0 0.0
        %421 = vmatpush1.msra.mxu0 0.0
        %422 = vmatprep.subr.mxu0 0.0
        %423 = vmatpush1.msra.mxu0 0.0
        %424 = vmatprep.subr.mxu0 0.0
        %425 = vmatpush1.msra.mxu0 0.0
        %426 = vmatprep.subr.mxu0 0.0
        %427 = vmatpush1.msra.mxu0 0.0
        %428 = vmatprep.subr.mxu0 0.0
        %429 = vmatpush1.msra.mxu0 0.0
        %430 = vmatprep.mubr.f32.mxu0 0.0
        %431 = vmatmul.mubr.f32.gmra.mrb[0].mxu0 %v349
        %v432 = vpop.f32.mrb[0].mxu0
        %v433 = vadd.f32 0.0, %v432
        %v434 = vpop.f32.mrb[0].mxu0
        %v435 = vadd.f32 0.0, %v434
        %436 = vmatprep.mubr.f32.mxu0 0.0
        %437 = vmatmul.mubr.f32.gmra.mrb[0].mxu0 %v352
        %v438 = vpop.f32.mrb[0].mxu0
        %v439 = vadd.f32 0.0, %v438
        %v440 = vpop.f32.mrb[0].mxu0
        %v441 = vadd.f32 0.0, %v440
        %442 = vmatprep.mubr.f32.mxu0 0.0
        %443 = vmatmul.mubr.f32.gmra.mrb[0].mxu0 %v355
        %v444 = vpop.f32.mrb[0].mxu0
        %v445 = vadd.f32 0.0, %v444
        %v446 = vpop.f32.mrb[0].mxu0
        %v447 = vadd.f32 0.0, %v446
        %448 = vmatprep.mubr.f32.mxu0 0.0
        %449 = vmatmul.mubr.f32.gmra.mrb[0].mxu0 %v358
        %v450 = vpop.f32.mrb[0].mxu0
        %v451 = vadd.f32 0.0, %v450
        %v452 = vpop.f32.mrb[0].mxu0
        %v453 = vadd.f32 0.0, %v452
        %454 = vdwg.mxu0
        %455 = vxpose.xlu0.b32.start [1/16] %v433, 128
        %456 = vxpose.xlu0.b32.cont [2/16] 0.0, 128
        %457 = vxpose.xlu0.b32.cont [3/16] 0.0, 128
        %458 = vxpose.xlu0.b32.cont [4/16] 0.0, 128
        %459 = vxpose.xlu0.b32.cont [5/16] 0.0, 128
        %460 = vxpose.xlu0.b32.cont [6/16] 0.0, 128
        %461 = vxpose.xlu0.b32.cont [7/16] 0.0, 128
        %462 = vxpose.xlu0.b32.cont [8/16] 0.0, 128
        %463 = vxpose.xlu0.b32.cont [9/16] 0.0, 128
        %464 = vxpose.xlu0.b32.cont [10/16] 0.0, 128
        %465 = vxpose.xlu0.b32.cont [11/16] 0.0, 128
        %466 = vxpose.xlu0.b32.cont [12/16] 0.0, 128
        %467 = vxpose.xlu0.b32.cont [13/16] 0.0, 128
        %468 = vxpose.xlu0.b32.cont [14/16] 0.0, 128
        %469 = vxpose.xlu0.b32.cont [15/16] 0.0, 128
        %470 = vxpose.xlu0.b32.end [16/16] 0.0, 128
        %v471 = vpop.trf.xlu0
        %v472 = vpop.trf.xlu0
        %v473 = vpop.trf.xlu0
        %v474 = vpop.trf.xlu0
        %v475 = vpop.trf.xlu0
        %v476 = vpop.trf.xlu0
        %v477 = vpop.trf.xlu0
        %v478 = vpop.trf.xlu0
        %v479 = vpop.trf.xlu0
        %v480 = vpop.trf.xlu0
        %v481 = vpop.trf.xlu0
        %v482 = vpop.trf.xlu0
        %v483 = vpop.trf.xlu0
        %v484 = vpop.trf.xlu0
        %v485 = vpop.trf.xlu0
        %v486 = vpop.trf.xlu0
        %487 = vxpose.xlu0.b32.start [1/16] %v435, 128
        %488 = vxpose.xlu0.b32.cont [2/16] 0.0, 128
        %489 = vxpose.xlu0.b32.cont [3/16] 0.0, 128
        %490 = vxpose.xlu0.b32.cont [4/16] 0.0, 128
        %491 = vxpose.xlu0.b32.cont [5/16] 0.0, 128
        %492 = vxpose.xlu0.b32.cont [6/16] 0.0, 128
        %493 = vxpose.xlu0.b32.cont [7/16] 0.0, 128
        %494 = vxpose.xlu0.b32.cont [8/16] 0.0, 128
        %495 = vxpose.xlu0.b32.cont [9/16] 0.0, 128
        %496 = vxpose.xlu0.b32.cont [10/16] 0.0, 128
        %497 = vxpose.xlu0.b32.cont [11/16] 0.0, 128
        %498 = vxpose.xlu0.b32.cont [12/16] 0.0, 128
        %499 = vxpose.xlu0.b32.cont [13/16] 0.0, 128
        %500 = vxpose.xlu0.b32.cont [14/16] 0.0, 128
        %501 = vxpose.xlu0.b32.cont [15/16] 0.0, 128
        %502 = vxpose.xlu0.b32.end [16/16] 0.0, 128
        %v503 = vpop.trf.xlu0
        %v504 = vpop.trf.xlu0
        %v505 = vpop.trf.xlu0
        %v506 = vpop.trf.xlu0
        %v507 = vpop.trf.xlu0
        %v508 = vpop.trf.xlu0
        %v509 = vpop.trf.xlu0
        %v510 = vpop.trf.xlu0
        %v511 = vpop.trf.xlu0
        %v512 = vpop.trf.xlu0
        %v513 = vpop.trf.xlu0
        %v514 = vpop.trf.xlu0
        %v515 = vpop.trf.xlu0
        %v516 = vpop.trf.xlu0
        %v517 = vpop.trf.xlu0
        %v518 = vpop.trf.xlu0
        %vm519 = vcmask 64512
        %v521 = vsel %vm519, %v471, 0
        %v524 = vsel %vm519, %v472, 0
        %v527 = vsel %vm519, %v473, 0
        %v530 = vsel %vm519, %v474, 0
        %v533 = vsel %vm519, %v475, 0
        %v536 = vsel %vm519, %v476, 0
        %v539 = vsel %vm519, %v477, 0
        %v542 = vsel %vm519, %v478, 0
        %v545 = vsel %vm519, %v479, 0
        %v548 = vsel %vm519, %v480, 0
        %v551 = vsel %vm519, %v481, 0
        %v554 = vsel %vm519, %v482, 0
        %v557 = vsel %vm519, %v483, 0
        %v560 = vsel %vm519, %v484, 0
        %v563 = vsel %vm519, %v485, 0
        %v566 = vsel %vm519, %v486, 0
        %v569 = vsel %vm519, %v503, 0
        %v572 = vsel %vm519, %v504, 0
        %v575 = vsel %vm519, %v505, 0
        %v578 = vsel %vm519, %v506, 0
        %v581 = vsel %vm519, %v507, 0
        %v584 = vsel %vm519, %v508, 0
        %v587 = vsel %vm519, %v509, 0
        %v590 = vsel %vm519, %v510, 0
        %v593 = vsel %vm519, %v511, 0
        %v596 = vsel %vm519, %v512, 0
        %v599 = vsel %vm519, %v513, 0
        %v602 = vsel %vm519, %v514, 0
        %v605 = vsel %vm519, %v515, 0
        %v608 = vsel %vm519, %v516, 0
        %v611 = vsel %vm519, %v517, 0
        %v614 = vsel %vm519, %v518, 0
        %616 = vmatprep.subr.mxu0 %v340
        %617 = vmatpush1.msra.mxu0 %v338
        %618 = vmatprep.subr.mxu0 0.0
        %619 = vmatpush1.msra.mxu0 0.0
        %620 = vmatprep.subr.mxu0 0.0
        %621 = vmatpush1.msra.mxu0 0.0
        %622 = vmatprep.subr.mxu0 0.0
        %623 = vmatpush1.msra.mxu0 0.0
        %624 = vmatprep.subr.mxu0 0.0
        %625 = vmatpush1.msra.mxu0 0.0
        %626 = vmatprep.subr.mxu0 0.0
        %627 = vmatpush1.msra.mxu0 0.0
        %628 = vmatprep.subr.mxu0 0.0
        %629 = vmatpush1.msra.mxu0 0.0
        %630 = vmatprep.subr.mxu0 0.0
        %631 = vmatpush1.msra.mxu0 0.0
        %632 = vmatprep.subr.mxu0 0.0
        %633 = vmatpush1.msra.mxu0 0.0
        %634 = vmatprep.subr.mxu0 0.0
        %635 = vmatpush1.msra.mxu0 0.0
        %636 = vmatprep.subr.mxu0 0.0
        %637 = vmatpush1.msra.mxu0 0.0
        %638 = vmatprep.subr.mxu0 0.0
        %639 = vmatpush1.msra.mxu0 0.0
        %640 = vmatprep.subr.mxu0 0.0
        %641 = vmatpush1.msra.mxu0 0.0
        %642 = vmatprep.subr.mxu0 0.0
        %643 = vmatpush1.msra.mxu0 0.0
        %644 = vmatprep.subr.mxu0 0.0
        %645 = vmatpush1.msra.mxu0 0.0
        %646 = vmatprep.subr.mxu0 0.0
        %647 = vmatpush1.msra.mxu0 0.0
        %648 = vmatprep.subr.mxu0 0.0
        %649 = vmatpush1.msra.mxu0 0.0
        %650 = vmatprep.subr.mxu0 0.0
        %651 = vmatpush1.msra.mxu0 0.0
        %652 = vmatprep.subr.mxu0 0.0
        %653 = vmatpush1.msra.mxu0 0.0
        %654 = vmatprep.subr.mxu0 0.0
        %655 = vmatpush1.msra.mxu0 0.0
        %656 = vmatprep.subr.mxu0 0.0
        %657 = vmatpush1.msra.mxu0 0.0
        %658 = vmatprep.subr.mxu0 0.0
        %659 = vmatpush1.msra.mxu0 0.0
        %660 = vmatprep.subr.mxu0 0.0
        %661 = vmatpush1.msra.mxu0 0.0
        %662 = vmatprep.subr.mxu0 0.0
        %663 = vmatpush1.msra.mxu0 0.0
        %664 = vmatprep.subr.mxu0 0.0
        %665 = vmatpush1.msra.mxu0 0.0
        %666 = vmatprep.subr.mxu0 0.0
        %667 = vmatpush1.msra.mxu0 0.0
        %668 = vmatprep.subr.mxu0 0.0
        %669 = vmatpush1.msra.mxu0 0.0
        %670 = vmatprep.subr.mxu0 0.0
        %671 = vmatpush1.msra.mxu0 0.0
        %672 = vmatprep.subr.mxu0 0.0
        %673 = vmatpush1.msra.mxu0 0.0
        %674 = vmatprep.subr.mxu0 0.0
        %675 = vmatpush1.msra.mxu0 0.0
        %676 = vmatprep.subr.mxu0 0.0
        %677 = vmatpush1.msra.mxu0 0.0
        %678 = vmatprep.subr.mxu0 0.0
        %679 = vmatpush1.msra.mxu0 0.0
        %680 = vmatprep.mubr.f32.mxu0 0.0
        %681 = vmatmul.mubr.f32.gmra.mrb[0].mxu0 %v521
        %v682 = vpop.f32.mrb[0].mxu0
        %v683 = vadd.f32 0.0, %v682
        %v684 = vpop.f32.mrb[0].mxu0
        %v685 = vadd.f32 0.0, %v684
        %686 = vmatprep.mubr.f32.mxu0 0.0
        %687 = vmatmul.mubr.f32.gmra.mrb[0].mxu0 %v524
        %v688 = vpop.f32.mrb[0].mxu0
        %v689 = vadd.f32 0.0, %v688
        %v690 = vpop.f32.mrb[0].mxu0
        %v691 = vadd.f32 0.0, %v690
        %692 = vmatprep.mubr.f32.mxu0 0.0
        %693 = vmatmul.mubr.f32.gmra.mrb[0].mxu0 %v527
        %v694 = vpop.f32.mrb[0].mxu0
        %v695 = vadd.f32 0.0, %v694
        %v696 = vpop.f32.mrb[0].mxu0
        %v697 = vadd.f32 0.0, %v696
        %698 = vmatprep.mubr.f32.mxu0 0.0
        %699 = vmatmul.mubr.f32.gmra.mrb[0].mxu0 %v530
        %v700 = vpop.f32.mrb[0].mxu0
        %v701 = vadd.f32 0.0, %v700
        %v702 = vpop.f32.mrb[0].mxu0
        %v703 = vadd.f32 0.0, %v702
        %704 = vmatprep.mubr.f32.mxu0 0.0
        %705 = vmatmul.mubr.f32.gmra.mrb[0].mxu0 %v533
        %v706 = vpop.f32.mrb[0].mxu0
        %v707 = vadd.f32 0.0, %v706
        %v708 = vpop.f32.mrb[0].mxu0
        %v709 = vadd.f32 0.0, %v708
        %710 = vmatprep.mubr.f32.mxu0 0.0
        %711 = vmatmul.mubr.f32.gmra.mrb[0].mxu0 %v536
        %v712 = vpop.f32.mrb[0].mxu0
        %v713 = vadd.f32 0.0, %v712
        %v714 = vpop.f32.mrb[0].mxu0
        %v715 = vadd.f32 0.0, %v714
        %716 = vmatprep.mubr.f32.mxu0 0.0
        %717 = vmatmul.mubr.f32.gmra.mrb[0].mxu0 %v539
        %v718 = vpop.f32.mrb[0].mxu0
        %v719 = vadd.f32 0.0, %v718
        %v720 = vpop.f32.mrb[0].mxu0
        %v721 = vadd.f32 0.0, %v720
        %722 = vmatprep.mubr.f32.mxu0 0.0
        %723 = vmatmul.mubr.f32.gmra.mrb[0].mxu0 %v542
        %v724 = vpop.f32.mrb[0].mxu0
        %v725 = vadd.f32 0.0, %v724
        %v726 = vpop.f32.mrb[0].mxu0
        %v727 = vadd.f32 0.0, %v726
        %728 = vmatprep.mubr.f32.mxu0 0.0
        %729 = vmatmul.mubr.f32.gmra.mrb[0].mxu0 %v545
        %v730 = vpop.f32.mrb[0].mxu0
        %v731 = vadd.f32 0.0, %v730
        %v732 = vpop.f32.mrb[0].mxu0
        %v733 = vadd.f32 0.0, %v732
        %734 = vmatprep.mubr.f32.mxu0 0.0
        %735 = vmatmul.mubr.f32.gmra.mrb[0].mxu0 %v548
        %v736 = vpop.f32.mrb[0].mxu0
        %v737 = vadd.f32 0.0, %v736
        %v738 = vpop.f32.mrb[0].mxu0
        %v739 = vadd.f32 0.0, %v738
        %740 = vmatprep.mubr.f32.mxu0 0.0
        %741 = vmatmul.mubr.f32.gmra.mrb[0].mxu0 %v551
        %v742 = vpop.f32.mrb[0].mxu0
        %v743 = vadd.f32 0.0, %v742
        %v744 = vpop.f32.mrb[0].mxu0
        %v745 = vadd.f32 0.0, %v744
        %746 = vmatprep.mubr.f32.mxu0 0.0
        %747 = vmatmul.mubr.f32.gmra.mrb[0].mxu0 %v554
        %v748 = vpop.f32.mrb[0].mxu0
        %v749 = vadd.f32 0.0, %v748
        %v750 = vpop.f32.mrb[0].mxu0
        %v751 = vadd.f32 0.0, %v750
        %752 = vmatprep.mubr.f32.mxu0 0.0
        %753 = vmatmul.mubr.f32.gmra.mrb[0].mxu0 %v557
        %v754 = vpop.f32.mrb[0].mxu0
        %v755 = vadd.f32 0.0, %v754
        %v756 = vpop.f32.mrb[0].mxu0
        %v757 = vadd.f32 0.0, %v756
        %758 = vmatprep.mubr.f32.mxu0 0.0
        %759 = vmatmul.mubr.f32.gmra.mrb[0].mxu0 %v560
        %v760 = vpop.f32.mrb[0].mxu0
        %v761 = vadd.f32 0.0, %v760
        %v762 = vpop.f32.mrb[0].mxu0
        %v763 = vadd.f32 0.0, %v762
        %764 = vmatprep.mubr.f32.mxu0 0.0
        %765 = vmatmul.mubr.f32.gmra.mrb[0].mxu0 %v563
        %v766 = vpop.f32.mrb[0].mxu0
        %v767 = vadd.f32 0.0, %v766
        %v768 = vpop.f32.mrb[0].mxu0
        %v769 = vadd.f32 0.0, %v768
        %770 = vmatprep.mubr.f32.mxu0 0.0
        %771 = vmatmul.mubr.f32.gmra.mrb[0].mxu0 %v566
        %v772 = vpop.f32.mrb[0].mxu0
        %v773 = vadd.f32 0.0, %v772
        %v774 = vpop.f32.mrb[0].mxu0
        %v775 = vadd.f32 0.0, %v774
        %776 = vmatprep.mubr.f32.mxu0 0.0
        %777 = vmatmul.mubr.f32.gmra.mrb[0].mxu0 %v569
        %v778 = vpop.f32.mrb[0].mxu0
        %v779 = vadd.f32 0.0, %v778
        %v780 = vpop.f32.mrb[0].mxu0
        %v781 = vadd.f32 0.0, %v780
        %782 = vmatprep.mubr.f32.mxu0 0.0
        %783 = vmatmul.mubr.f32.gmra.mrb[0].mxu0 %v572
        %v784 = vpop.f32.mrb[0].mxu0
        %v785 = vadd.f32 0.0, %v784
        %v786 = vpop.f32.mrb[0].mxu0
        %v787 = vadd.f32 0.0, %v786
        %788 = vmatprep.mubr.f32.mxu0 0.0
        %789 = vmatmul.mubr.f32.gmra.mrb[0].mxu0 %v575
        %v790 = vpop.f32.mrb[0].mxu0
        %v791 = vadd.f32 0.0, %v790
        %v792 = vpop.f32.mrb[0].mxu0
        %v793 = vadd.f32 0.0, %v792
        %794 = vmatprep.mubr.f32.mxu0 0.0
        %795 = vmatmul.mubr.f32.gmra.mrb[0].mxu0 %v578
        %v796 = vpop.f32.mrb[0].mxu0
        %v797 = vadd.f32 0.0, %v796
        %v798 = vpop.f32.mrb[0].mxu0
        %v799 = vadd.f32 0.0, %v798
        %800 = vmatprep.mubr.f32.mxu0 0.0
        %801 = vmatmul.mubr.f32.gmra.mrb[0].mxu0 %v581
        %v802 = vpop.f32.mrb[0].mxu0
        %v803 = vadd.f32 0.0, %v802
        %v804 = vpop.f32.mrb[0].mxu0
        %v805 = vadd.f32 0.0, %v804
        %806 = vmatprep.mubr.f32.mxu0 0.0
        %807 = vmatmul.mubr.f32.gmra.mrb[0].mxu0 %v584
        %v808 = vpop.f32.mrb[0].mxu0
        %v809 = vadd.f32 0.0, %v808
        %v810 = vpop.f32.mrb[0].mxu0
        %v811 = vadd.f32 0.0, %v810
        %812 = vmatprep.mubr.f32.mxu0 0.0
        %813 = vmatmul.mubr.f32.gmra.mrb[0].mxu0 %v587
        %v814 = vpop.f32.mrb[0].mxu0
        %v815 = vadd.f32 0.0, %v814
        %v816 = vpop.f32.mrb[0].mxu0
        %v817 = vadd.f32 0.0, %v816
        %818 = vmatprep.mubr.f32.mxu0 0.0
        %819 = vmatmul.mubr.f32.gmra.mrb[0].mxu0 %v590
        %v820 = vpop.f32.mrb[0].mxu0
        %v821 = vadd.f32 0.0, %v820
        %v822 = vpop.f32.mrb[0].mxu0
        %v823 = vadd.f32 0.0, %v822
        %824 = vmatprep.mubr.f32.mxu0 0.0
        %825 = vmatmul.mubr.f32.gmra.mrb[0].mxu0 %v593
        %v826 = vpop.f32.mrb[0].mxu0
        %v827 = vadd.f32 0.0, %v826
        %v828 = vpop.f32.mrb[0].mxu0
        %v829 = vadd.f32 0.0, %v828
        %830 = vmatprep.mubr.f32.mxu0 0.0
        %831 = vmatmul.mubr.f32.gmra.mrb[0].mxu0 %v596
        %v832 = vpop.f32.mrb[0].mxu0
        %v833 = vadd.f32 0.0, %v832
        %v834 = vpop.f32.mrb[0].mxu0
        %v835 = vadd.f32 0.0, %v834
        %836 = vmatprep.mubr.f32.mxu0 0.0
        %837 = vmatmul.mubr.f32.gmra.mrb[0].mxu0 %v599
        %v838 = vpop.f32.mrb[0].mxu0
        %v839 = vadd.f32 0.0, %v838
        %v840 = vpop.f32.mrb[0].mxu0
        %v841 = vadd.f32 0.0, %v840
        %842 = vmatprep.mubr.f32.mxu0 0.0
        %843 = vmatmul.mubr.f32.gmra.mrb[0].mxu0 %v602
        %v844 = vpop.f32.mrb[0].mxu0
        %v845 = vadd.f32 0.0, %v844
        %v846 = vpop.f32.mrb[0].mxu0
        %v847 = vadd.f32 0.0, %v846
        %848 = vmatprep.mubr.f32.mxu0 0.0
        %849 = vmatmul.mubr.f32.gmra.mrb[0].mxu0 %v605
        %v850 = vpop.f32.mrb[0].mxu0
        %v851 = vadd.f32 0.0, %v850
        %v852 = vpop.f32.mrb[0].mxu0
        %v853 = vadd.f32 0.0, %v852
        %854 = vmatprep.mubr.f32.mxu0 0.0
        %855 = vmatmul.mubr.f32.gmra.mrb[0].mxu0 %v608
        %v856 = vpop.f32.mrb[0].mxu0
        %v857 = vadd.f32 0.0, %v856
        %v858 = vpop.f32.mrb[0].mxu0
        %v859 = vadd.f32 0.0, %v858
        %860 = vmatprep.mubr.f32.mxu0 0.0
        %861 = vmatmul.mubr.f32.gmra.mrb[0].mxu0 %v611
        %v862 = vpop.f32.mrb[0].mxu0
        %v863 = vadd.f32 0.0, %v862
        %v864 = vpop.f32.mrb[0].mxu0
        %v865 = vadd.f32 0.0, %v864
        %866 = vmatprep.mubr.f32.mxu0 0.0
        %867 = vmatmul.mubr.f32.gmra.mrb[0].mxu0 %v614
        %v868 = vpop.f32.mrb[0].mxu0
        %v869 = vadd.f32 0.0, %v868
        %v870 = vpop.f32.mrb[0].mxu0
        %v871 = vadd.f32 0.0, %v870
        %872 = vdwg.mxu0
        %v873 = vmax.f32 %v683, %v695
        %v874 = vmax.f32 %v689, %v701
        %v875 = vmax.f32 %v873, %v707
        %v876 = vmax.f32 %v874, %v713
        %v877 = vmax.f32 %v875, %v719
        %v878 = vmax.f32 %v876, %v725
        %v879 = vmax.f32 %v877, %v731
        %v880 = vmax.f32 %v878, %v737
        %v881 = vmax.f32 %v879, %v743
        %v882 = vmax.f32 %v880, %v749
        %v883 = vmax.f32 %v881, %v755
        %v884 = vmax.f32 %v882, %v761
        %v885 = vmax.f32 %v883, %v767
        %v886 = vmax.f32 %v884, %v773
        %v887 = vmax.f32 %v885, %v779
        %v888 = vmax.f32 %v886, %v785
        %v889 = vmax.f32 %v887, %v791
        %v890 = vmax.f32 %v888, %v797
        %v891 = vmax.f32 %v889, %v803
        %v892 = vmax.f32 %v890, %v809
        %v893 = vmax.f32 %v891, %v815
        %v894 = vmax.f32 %v892, %v821
        %v895 = vmax.f32 %v893, %v827
        %v896 = vmax.f32 %v894, %v833
        %v897 = vmax.f32 %v895, %v839
        %v898 = vmax.f32 %v896, %v845
        %v899 = vmax.f32 %v897, %v851
        %v900 = vmax.f32 %v898, %v857
        %v901 = vmax.f32 %v899, %v863
        %v902 = vmax.f32 %v900, %v869
        %v903 = vmax.f32 %v901, %v902
        %v904 = vrot.slane %v903, 4
        %v905 = vmax.f32 %v903, %v904
        %v906 = vrot.slane %v905, 2
        %v907 = vmax.f32 %v905, %v906
        %v908 = vrot.slane %v907, 1
        %v909 = vmax.f32 %v907, %v908
        %v910 = vmax.f32 %v685, %v697
        %v911 = vmax.f32 %v691, %v703
        %v912 = vmax.f32 %v910, %v709
        %v913 = vmax.f32 %v911, %v715
        %v914 = vmax.f32 %v912, %v721
        %v915 = vmax.f32 %v913, %v727
        %v916 = vmax.f32 %v914, %v733
        %v917 = vmax.f32 %v915, %v739
        %v918 = vmax.f32 %v916, %v745
        %v919 = vmax.f32 %v917, %v751
        %v920 = vmax.f32 %v918, %v757
        %v921 = vmax.f32 %v919, %v763
        %v922 = vmax.f32 %v920, %v769
        %v923 = vmax.f32 %v921, %v775
        %v924 = vmax.f32 %v922, %v781
        %v925 = vmax.f32 %v923, %v787
        %v926 = vmax.f32 %v924, %v793
        %v927 = vmax.f32 %v925, %v799
        %v928 = vmax.f32 %v926, %v805
        %v929 = vmax.f32 %v927, %v811
        %v930 = vmax.f32 %v928, %v817
        %v931 = vmax.f32 %v929, %v823
        %v932 = vmax.f32 %v930, %v829
        %v933 = vmax.f32 %v931, %v835
        %v934 = vmax.f32 %v932, %v841
        %v935 = vmax.f32 %v933, %v847
        %v936 = vmax.f32 %v934, %v853
        %v937 = vmax.f32 %v935, %v859
        %v938 = vmax.f32 %v936, %v865
        %v939 = vmax.f32 %v937, %v871
        %v940 = vmax.f32 %v938, %v939
        %v941 = vrot.slane %v940, 4
        %v942 = vmax.f32 %v940, %v941
        %v943 = vrot.slane %v942, 2
        %v944 = vmax.f32 %v942, %v943
        %v945 = vrot.slane %v944, 1
        %v946 = vmax.f32 %v944, %v945
        %v947 = vsub.f32 %v683, %v909
        %v948 = vsub.f32 %v685, %v946
        %v949 = vsub.f32 %v689, %v909
        %v950 = vsub.f32 %v691, %v946
        %v951 = vsub.f32 %v695, %v909
        %v952 = vsub.f32 %v697, %v946
        %v953 = vsub.f32 %v701, %v909
        %v954 = vsub.f32 %v703, %v946
        %v955 = vsub.f32 %v707, %v909
        %v956 = vsub.f32 %v709, %v946
        %v957 = vsub.f32 %v713, %v909
        %v958 = vsub.f32 %v715, %v946
        %v959 = vsub.f32 %v719, %v909
        %v960 = vsub.f32 %v721, %v946
        %v961 = vsub.f32 %v725, %v909
        %v962 = vsub.f32 %v727, %v946
        %v963 = vsub.f32 %v731, %v909
        %v964 = vsub.f32 %v733, %v946
        %v965 = vsub.f32 %v737, %v909
        %v966 = vsub.f32 %v739, %v946
        %v967 = vsub.f32 %v743, %v909
        %v968 = vsub.f32 %v745, %v946
        %v969 = vsub.f32 %v749, %v909
        %v970 = vsub.f32 %v751, %v946
        %v971 = vsub.f32 %v755, %v909
        %v972 = vsub.f32 %v757, %v946
        %v973 = vsub.f32 %v761, %v909
        %v974 = vsub.f32 %v763, %v946
        %v975 = vsub.f32 %v767, %v909
        %v976 = vsub.f32 %v769, %v946
        %v977 = vsub.f32 %v773, %v909
        %v978 = vsub.f32 %v775, %v946
        %v979 = vsub.f32 %v779, %v909
        %v980 = vsub.f32 %v781, %v946
        %v981 = vsub.f32 %v785, %v909
        %v982 = vsub.f32 %v787, %v946
        %v983 = vsub.f32 %v791, %v909
        %v984 = vsub.f32 %v793, %v946
        %v985 = vsub.f32 %v797, %v909
        %v986 = vsub.f32 %v799, %v946
        %v987 = vsub.f32 %v803, %v909
        %v988 = vsub.f32 %v805, %v946
        %v989 = vsub.f32 %v809, %v909
        %v990 = vsub.f32 %v811, %v946
        %v991 = vsub.f32 %v815, %v909
        %v992 = vsub.f32 %v817, %v946
        %v993 = vsub.f32 %v821, %v909
        %v994 = vsub.f32 %v823, %v946
        %v995 = vsub.f32 %v827, %v909
        %v996 = vsub.f32 %v829, %v946
        %v997 = vsub.f32 %v833, %v909
        %v998 = vsub.f32 %v835, %v946
        %v999 = vsub.f32 %v839, %v909
        %v1000 = vsub.f32 %v841, %v946
        %v1001 = vsub.f32 %v845, %v909
        %v1002 = vsub.f32 %v847, %v946
        %v1003 = vsub.f32 %v851, %v909
        %v1004 = vsub.f32 %v853, %v946
        %v1005 = vsub.f32 %v857, %v909
        %v1006 = vsub.f32 %v859, %v946
        %v1007 = vsub.f32 %v863, %v909
        %v1008 = vsub.f32 %v865, %v946
        %v1009 = vsub.f32 %v869, %v909
        %v1010 = vsub.f32 %v871, %v946
        %v1011 = vmul.f32 %v947, 1.442695
        %v1012 = vpow.pop %v1011
        %v1013 = vmul.f32 %v948, 1.442695
        %v1014 = vpow.pop %v1013
        %v1015 = vmul.f32 %v949, 1.442695
        %v1016 = vpow.pop %v1015
        %v1017 = vmul.f32 %v950, 1.442695
        %v1018 = vpow.pop %v1017
        %v1019 = vmul.f32 %v951, 1.442695
        %v1020 = vpow.pop %v1019
        %v1021 = vmul.f32 %v952, 1.442695
        %v1022 = vpow.pop %v1021
        %v1023 = vmul.f32 %v953, 1.442695
        %v1024 = vpow.pop %v1023
        %v1025 = vmul.f32 %v954, 1.442695
        %v1026 = vpow.pop %v1025
        %v1027 = vmul.f32 %v955, 1.442695
        %v1028 = vpow.pop %v1027
        %v1029 = vmul.f32 %v956, 1.442695
        %v1030 = vpow.pop %v1029
        %v1031 = vmul.f32 %v957, 1.442695
        %v1032 = vpow.pop %v1031
        %v1033 = vmul.f32 %v958, 1.442695
        %v1034 = vpow.pop %v1033
        %v1035 = vmul.f32 %v959, 1.442695
        %v1036 = vpow.pop %v1035
        %v1037 = vmul.f32 %v960, 1.442695
        %v1038 = vpow.pop %v1037
        %v1039 = vmul.f32 %v961, 1.442695
        %v1040 = vpow.pop %v1039
        %v1041 = vmul.f32 %v962, 1.442695
        %v1042 = vpow.pop %v1041
        %v1043 = vmul.f32 %v963, 1.442695
        %v1044 = vpow.pop %v1043
        %v1045 = vmul.f32 %v964, 1.442695
        %v1046 = vpow.pop %v1045
        %v1047 = vmul.f32 %v965, 1.442695
        %v1048 = vpow.pop %v1047
        %v1049 = vmul.f32 %v966, 1.442695
        %v1050 = vpow.pop %v1049
        %v1051 = vmul.f32 %v967, 1.442695
        %v1052 = vpow.pop %v1051
        %v1053 = vmul.f32 %v968, 1.442695
        %v1054 = vpow.pop %v1053
        %v1055 = vmul.f32 %v969, 1.442695
        %v1056 = vpow.pop %v1055
        %v1057 = vmul.f32 %v970, 1.442695
        %v1058 = vpow.pop %v1057
        %v1059 = vmul.f32 %v971, 1.442695
        %v1060 = vpow.pop %v1059
        %v1061 = vmul.f32 %v972, 1.442695
        %v1062 = vpow.pop %v1061
        %v1063 = vmul.f32 %v973, 1.442695
        %v1064 = vpow.pop %v1063
        %v1065 = vmul.f32 %v974, 1.442695
        %v1066 = vpow.pop %v1065
        %v1067 = vmul.f32 %v975, 1.442695
        %v1068 = vpow.pop %v1067
        %v1069 = vmul.f32 %v976, 1.442695
        %v1070 = vpow.pop %v1069
        %v1071 = vmul.f32 %v977, 1.442695
        %v1072 = vpow.pop %v1071
        %v1073 = vmul.f32 %v978, 1.442695
        %v1074 = vpow.pop %v1073
        %v1075 = vmul.f32 %v979, 1.442695
        %v1076 = vpow.pop %v1075
        %v1077 = vmul.f32 %v980, 1.442695
        %v1078 = vpow.pop %v1077
        %v1079 = vmul.f32 %v981, 1.442695
        %v1080 = vpow.pop %v1079
        %v1081 = vmul.f32 %v982, 1.442695
        %v1082 = vpow.pop %v1081
        %v1083 = vmul.f32 %v983, 1.442695
        %v1084 = vpow.pop %v1083
        %v1085 = vmul.f32 %v984, 1.442695
        %v1086 = vpow.pop %v1085
        %v1087 = vmul.f32 %v985, 1.442695
        %v1088 = vpow.pop %v1087
        %v1089 = vmul.f32 %v986, 1.442695
        %v1090 = vpow.pop %v1089
        %v1091 = vmul.f32 %v987, 1.442695
        %v1092 = vpow.pop %v1091
        %v1093 = vmul.f32 %v988, 1.442695
        %v1094 = vpow.pop %v1093
        %v1095 = vmul.f32 %v989, 1.442695
        %v1096 = vpow.pop %v1095
        %v1097 = vmul.f32 %v990, 1.442695
        %v1098 = vpow.pop %v1097
        %v1099 = vmul.f32 %v991, 1.442695
        %v1100 = vpow.pop %v1099
        %v1101 = vmul.f32 %v992, 1.442695
        %v1102 = vpow.pop %v1101
        %v1103 = vmul.f32 %v993, 1.442695
        %v1104 = vpow.pop %v1103
        %v1105 = vmul.f32 %v994, 1.442695
        %v1106 = vpow.pop %v1105
        %v1107 = vmul.f32 %v995, 1.442695
        %v1108 = vpow.pop %v1107
        %v1109 = vmul.f32 %v996, 1.442695
        %v1110 = vpow.pop %v1109
        %v1111 = vmul.f32 %v997, 1.442695
        %v1112 = vpow.pop %v1111
        %v1113 = vmul.f32 %v998, 1.442695
        %v1114 = vpow.pop %v1113
        %v1115 = vmul.f32 %v999, 1.442695
        %v1116 = vpow.pop %v1115
        %v1117 = vmul.f32 %v1000, 1.442695
        %v1118 = vpow.pop %v1117
        %v1119 = vmul.f32 %v1001, 1.442695
        %v1120 = vpow.pop %v1119
        %v1121 = vmul.f32 %v1002, 1.442695
        %v1122 = vpow.pop %v1121
        %v1123 = vmul.f32 %v1003, 1.442695
        %v1124 = vpow.pop %v1123
        %v1125 = vmul.f32 %v1004, 1.442695
        %v1126 = vpow.pop %v1125
        %v1127 = vmul.f32 %v1005, 1.442695
        %v1128 = vpow.pop %v1127
        %v1129 = vmul.f32 %v1006, 1.442695
        %v1130 = vpow.pop %v1129
        %v1131 = vmul.f32 %v1007, 1.442695
        %v1132 = vpow.pop %v1131
        %v1133 = vmul.f32 %v1008, 1.442695
        %v1134 = vpow.pop %v1133
        %v1135 = vmul.f32 %v1009, 1.442695
        %v1136 = vpow.pop %v1135
        %v1137 = vmul.f32 %v1010, 1.442695
        %v1138 = vpow.pop %v1137
        %v1139 = vpack.c.bf16 %v1016, %v1012
        %v1140 = vpack.c.bf16 %v1018, %v1014
        %v1141 = vpack.c.bf16 %v1024, %v1020
        %v1142 = vpack.c.bf16 %v1026, %v1022
        %v1143 = vpack.c.bf16 %v1032, %v1028
        %v1144 = vpack.c.bf16 %v1034, %v1030
        %v1145 = vpack.c.bf16 %v1040, %v1036
        %v1146 = vpack.c.bf16 %v1042, %v1038
        %v1147 = vpack.c.bf16 %v1048, %v1044
        %v1148 = vpack.c.bf16 %v1050, %v1046
        %v1149 = vpack.c.bf16 %v1056, %v1052
        %v1150 = vpack.c.bf16 %v1058, %v1054
        %v1151 = vpack.c.bf16 %v1064, %v1060
        %v1152 = vpack.c.bf16 %v1066, %v1062
        %v1153 = vpack.c.bf16 %v1072, %v1068
        %v1154 = vpack.c.bf16 %v1074, %v1070
        %v1155 = vpack.c.bf16 %v1080, %v1076
        %v1156 = vpack.c.bf16 %v1082, %v1078
        %v1157 = vpack.c.bf16 %v1088, %v1084
        %v1158 = vpack.c.bf16 %v1090, %v1086
        %v1159 = vpack.c.bf16 %v1096, %v1092
        %v1160 = vpack.c.bf16 %v1098, %v1094
        %v1161 = vpack.c.bf16 %v1104, %v1100
        %v1162 = vpack.c.bf16 %v1106, %v1102
        %v1163 = vpack.c.bf16 %v1112, %v1108
        %v1164 = vpack.c.bf16 %v1114, %v1110
        %v1165 = vpack.c.bf16 %v1120, %v1116
        %v1166 = vpack.c.bf16 %v1122, %v1118
        %v1167 = vpack.c.bf16 %v1128, %v1124
        %v1168 = vpack.c.bf16 %v1130, %v1126
        %v1169 = vpack.c.bf16 %v1136, %v1132
        %v1170 = vpack.c.bf16 %v1138, %v1134
        %v1171 = vpack.c.bf16 %v445, %v445
        %v1172 = vpack.c.bf16 %v447, %v447
        %1173 = vmatprep.subr.bf16.mxu0 %v1140
        %1174 = vmatpush1.bf16.msra.mxu0 %v1139
        %1175 = vmatprep.subr.bf16.mxu0 %v1142
        %1176 = vmatpush1.bf16.msra.mxu0 %v1141
        %1177 = vmatprep.subr.bf16.mxu0 %v1144
        %1178 = vmatpush1.bf16.msra.mxu0 %v1143
        %1179 = vmatprep.subr.bf16.mxu0 %v1146
        %1180 = vmatpush1.bf16.msra.mxu0 %v1145
        %1181 = vmatprep.subr.bf16.mxu0 %v1148
        %1182 = vmatpush1.bf16.msra.mxu0 %v1147
        %1183 = vmatprep.subr.bf16.mxu0 %v1150
        %1184 = vmatpush1.bf16.msra.mxu0 %v1149
        %1185 = vmatprep.subr.bf16.mxu0 %v1152
        %1186 = vmatpush1.bf16.msra.mxu0 %v1151
        %1187 = vmatprep.subr.bf16.mxu0 %v1154
        %1188 = vmatpush1.bf16.msra.mxu0 %v1153
        %1189 = vmatprep.subr.bf16.mxu0 %v1156
        %1190 = vmatpush1.bf16.msra.mxu0 %v1155
        %1191 = vmatprep.subr.bf16.mxu0 %v1158
        %1192 = vmatpush1.bf16.msra.mxu0 %v1157
        %1193 = vmatprep.subr.bf16.mxu0 %v1160
        %1194 = vmatpush1.bf16.msra.mxu0 %v1159
        %1195 = vmatprep.subr.bf16.mxu0 %v1162
        %1196 = vmatpush1.bf16.msra.mxu0 %v1161
        %1197 = vmatprep.subr.bf16.mxu0 %v1164
        %1198 = vmatpush1.bf16.msra.mxu0 %v1163
        %1199 = vmatprep.subr.bf16.mxu0 %v1166
        %1200 = vmatpush1.bf16.msra.mxu0 %v1165
        %1201 = vmatprep.subr.bf16.mxu0 %v1168
        %1202 = vmatpush1.bf16.msra.mxu0 %v1167
        %1203 = vmatprep.subr.bf16.mxu0 %v1170
        %1204 = vmatpush1.bf16.msra.mxu0 %v1169
        %1205 = vmatprep.mubr.bf16.mxu0 %v1172
        %1206 = vmatmul.mubr.bf16.gmra.mrb[0].mxu0 %v1171
        %v1207 = vpop.f32.mrb[0].mxu0
        %v1208 = vadd.f32 0.0, %v1207
        %v1209 = vpop.f32.mrb[0].mxu0
        %v1210 = vadd.f32 0.0, %v1209
        %v1211 = vpop.f32.mrb[0].mxu0
        %v1212 = vpop.f32.mrb[0].mxu0
        %1213 = vdwg.mxu0
        %v1214 = vrcp.pop %v1208
        %v1215 = vrcp.pop %v1210
        %v1216 = vlaneseq
        %v1217 = vshrl.u32 %v1216, 7
        %v1218 = vsub.s32 4, %v1217
        %v1219 = vrot.slane %v1214, %v1218
        %v1220 = vlaneseq
        %v1221 = vshrl.u32 %v1220, 7
        %v1222 = vsub.s32 4, %v1221
        %v1223 = vrot.slane %v1215, %v1222
        %v1224 = vmul.f32 %v1208, %v1219
        %v1225 = vmul.f32 %v1210, %v1223
        %1226 = vxpose.xlu0.b32.start [1/16] %v439, 128
        %1227 = vxpose.xlu0.b32.cont [2/16] 0.0, 128
        %1228 = vxpose.xlu0.b32.cont [3/16] 0.0, 128
        %1229 = vxpose.xlu0.b32.cont [4/16] 0.0, 128
        %1230 = vxpose.xlu0.b32.cont [5/16] 0.0, 128
        %1231 = vxpose.xlu0.b32.cont [6/16] 0.0, 128
        %1232 = vxpose.xlu0.b32.cont [7/16] 0.0, 128
        %1233 = vxpose.xlu0.b32.cont [8/16] 0.0, 128
        %1234 = vxpose.xlu0.b32.cont [9/16] 0.0, 128
        %1235 = vxpose.xlu0.b32.cont [10/16] 0.0, 128
        %1236 = vxpose.xlu0.b32.cont [11/16] 0.0, 128
        %1237 = vxpose.xlu0.b32.cont [12/16] 0.0, 128
        %1238 = vxpose.xlu0.b32.cont [13/16] 0.0, 128
        %1239 = vxpose.xlu0.b32.cont [14/16] 0.0, 128
        %1240 = vxpose.xlu0.b32.cont [15/16] 0.0, 128
        %1241 = vxpose.xlu0.b32.end [16/16] 0.0, 128
        %v1242 = vpop.trf.xlu0
        %v1243 = vpop.trf.xlu0
        %v1244 = vpop.trf.xlu0
        %v1245 = vpop.trf.xlu0
        %v1246 = vpop.trf.xlu0
        %v1247 = vpop.trf.xlu0
        %v1248 = vpop.trf.xlu0
        %v1249 = vpop.trf.xlu0
        %v1250 = vpop.trf.xlu0
        %v1251 = vpop.trf.xlu0
        %v1252 = vpop.trf.xlu0
        %v1253 = vpop.trf.xlu0
        %v1254 = vpop.trf.xlu0
        %v1255 = vpop.trf.xlu0
        %v1256 = vpop.trf.xlu0
        %v1257 = vpop.trf.xlu0
        %1258 = vxpose.xlu0.b32.start [1/16] %v441, 128
        %1259 = vxpose.xlu0.b32.cont [2/16] 0.0, 128
        %1260 = vxpose.xlu0.b32.cont [3/16] 0.0, 128
        %1261 = vxpose.xlu0.b32.cont [4/16] 0.0, 128
        %1262 = vxpose.xlu0.b32.cont [5/16] 0.0, 128
        %1263 = vxpose.xlu0.b32.cont [6/16] 0.0, 128
        %1264 = vxpose.xlu0.b32.cont [7/16] 0.0, 128
        %1265 = vxpose.xlu0.b32.cont [8/16] 0.0, 128
        %1266 = vxpose.xlu0.b32.cont [9/16] 0.0, 128
        %1267 = vxpose.xlu0.b32.cont [10/16] 0.0, 128
        %1268 = vxpose.xlu0.b32.cont [11/16] 0.0, 128
        %1269 = vxpose.xlu0.b32.cont [12/16] 0.0, 128
        %1270 = vxpose.xlu0.b32.cont [13/16] 0.0, 128
        %1271 = vxpose.xlu0.b32.cont [14/16] 0.0, 128
        %1272 = vxpose.xlu0.b32.cont [15/16] 0.0, 128
        %1273 = vxpose.xlu0.b32.end [16/16] 0.0, 128
        %v1274 = vpop.trf.xlu0
        %v1275 = vpop.trf.xlu0
        %v1276 = vpop.trf.xlu0
        %v1277 = vpop.trf.xlu0
        %v1278 = vpop.trf.xlu0
        %v1279 = vpop.trf.xlu0
        %v1280 = vpop.trf.xlu0
        %v1281 = vpop.trf.xlu0
        %v1282 = vpop.trf.xlu0
        %v1283 = vpop.trf.xlu0
        %v1284 = vpop.trf.xlu0
        %v1285 = vpop.trf.xlu0
        %v1286 = vpop.trf.xlu0
        %v1287 = vpop.trf.xlu0
        %v1288 = vpop.trf.xlu0
        %v1289 = vpop.trf.xlu0
        %v1291 = vsel %vm519, %v1242, 0
        %v1294 = vsel %vm519, %v1243, 0
        %v1297 = vsel %vm519, %v1244, 0
        %v1300 = vsel %vm519, %v1245, 0
        %v1303 = vsel %vm519, %v1246, 0
        %v1306 = vsel %vm519, %v1247, 0
        %v1309 = vsel %vm519, %v1248, 0
        %v1312 = vsel %vm519, %v1249, 0
        %v1315 = vsel %vm519, %v1250, 0
        %v1318 = vsel %vm519, %v1251, 0
        %v1321 = vsel %vm519, %v1252, 0
        %v1324 = vsel %vm519, %v1253, 0
        %v1327 = vsel %vm519, %v1254, 0
        %v1330 = vsel %vm519, %v1255, 0
        %v1333 = vsel %vm519, %v1256, 0
        %v1336 = vsel %vm519, %v1257, 0
        %v1339 = vsel %vm519, %v1274, 0
        %v1342 = vsel %vm519, %v1275, 0
        %v1345 = vsel %vm519, %v1276, 0
        %v1348 = vsel %vm519, %v1277, 0
        %v1351 = vsel %vm519, %v1278, 0
        %v1354 = vsel %vm519, %v1279, 0
        %v1357 = vsel %vm519, %v1280, 0
        %v1360 = vsel %vm519, %v1281, 0
        %v1363 = vsel %vm519, %v1282, 0
        %v1366 = vsel %vm519, %v1283, 0
        %v1369 = vsel %vm519, %v1284, 0
        %v1372 = vsel %vm519, %v1285, 0
        %v1375 = vsel %vm519, %v1286, 0
        %v1378 = vsel %vm519, %v1287, 0
        %v1381 = vsel %vm519, %v1288, 0
        %v1384 = vsel %vm519, %v1289, 0
        %1386 = vmatprep.subr.mxu0 %v346
        %1387 = vmatpush1.msra.mxu0 %v344
        %1388 = vmatprep.subr.mxu0 0.0
        %1389 = vmatpush1.msra.mxu0 0.0
        %1390 = vmatprep.subr.mxu0 0.0
        %1391 = vmatpush1.msra.mxu0 0.0
        %1392 = vmatprep.subr.mxu0 0.0
        %1393 = vmatpush1.msra.mxu0 0.0
        %1394 = vmatprep.subr.mxu0 0.0
        %1395 = vmatpush1.msra.mxu0 0.0
        %1396 = vmatprep.subr.mxu0 0.0
        %1397 = vmatpush1.msra.mxu0 0.0
        %1398 = vmatprep.subr.mxu0 0.0
        %1399 = vmatpush1.msra.mxu0 0.0
        %1400 = vmatprep.subr.mxu0 0.0
        %1401 = vmatpush1.msra.mxu0 0.0
        %1402 = vmatprep.subr.mxu0 0.0
        %1403 = vmatpush1.msra.mxu0 0.0
        %1404 = vmatprep.subr.mxu0 0.0
        %1405 = vmatpush1.msra.mxu0 0.0
        %1406 = vmatprep.subr.mxu0 0.0
        %1407 = vmatpush1.msra.mxu0 0.0
        %1408 = vmatprep.subr.mxu0 0.0
        %1409 = vmatpush1.msra.mxu0 0.0
        %1410 = vmatprep.subr.mxu0 0.0
        %1411 = vmatpush1.msra.mxu0 0.0
        %1412 = vmatprep.subr.mxu0 0.0
        %1413 = vmatpush1.msra.mxu0 0.0
        %1414 = vmatprep.subr.mxu0 0.0
        %1415 = vmatpush1.msra.mxu0 0.0
        %1416 = vmatprep.subr.mxu0 0.0
        %1417 = vmatpush1.msra.mxu0 0.0
        %1418 = vmatprep.subr.mxu0 0.0
        %1419 = vmatpush1.msra.mxu0 0.0
        %1420 = vmatprep.subr.mxu0 0.0
        %1421 = vmatpush1.msra.mxu0 0.0
        %1422 = vmatprep.subr.mxu0 0.0
        %1423 = vmatpush1.msra.mxu0 0.0
        %1424 = vmatprep.subr.mxu0 0.0
        %1425 = vmatpush1.msra.mxu0 0.0
        %1426 = vmatprep.subr.mxu0 0.0
        %1427 = vmatpush1.msra.mxu0 0.0
        %1428 = vmatprep.subr.mxu0 0.0
        %1429 = vmatpush1.msra.mxu0 0.0
        %1430 = vmatprep.subr.mxu0 0.0
        %1431 = vmatpush1.msra.mxu0 0.0
        %1432 = vmatprep.subr.mxu0 0.0
        %1433 = vmatpush1.msra.mxu0 0.0
        %1434 = vmatprep.subr.mxu0 0.0
        %1435 = vmatpush1.msra.mxu0 0.0
        %1436 = vmatprep.subr.mxu0 0.0
        %1437 = vmatpush1.msra.mxu0 0.0
        %1438 = vmatprep.subr.mxu0 0.0
        %1439 = vmatpush1.msra.mxu0 0.0
        %1440 = vmatprep.subr.mxu0 0.0
        %1441 = vmatpush1.msra.mxu0 0.0
        %1442 = vmatprep.subr.mxu0 0.0
        %1443 = vmatpush1.msra.mxu0 0.0
        %1444 = vmatprep.subr.mxu0 0.0
        %1445 = vmatpush1.msra.mxu0 0.0
        %1446 = vmatprep.subr.mxu0 0.0
        %1447 = vmatpush1.msra.mxu0 0.0
        %1448 = vmatprep.subr.mxu0 0.0
        %1449 = vmatpush1.msra.mxu0 0.0
        %1450 = vmatprep.mubr.f32.mxu0 0.0
        %1451 = vmatmul.mubr.f32.gmra.mrb[0].mxu0 %v1291
        %v1452 = vpop.f32.mrb[0].mxu0
        %v1453 = vadd.f32 0.0, %v1452
        %v1454 = vpop.f32.mrb[0].mxu0
        %v1455 = vadd.f32 0.0, %v1454
        %1456 = vmatprep.mubr.f32.mxu0 0.0
        %1457 = vmatmul.mubr.f32.gmra.mrb[0].mxu0 %v1294
        %v1458 = vpop.f32.mrb[0].mxu0
        %v1459 = vadd.f32 0.0, %v1458
        %v1460 = vpop.f32.mrb[0].mxu0
        %v1461 = vadd.f32 0.0, %v1460
        %1462 = vmatprep.mubr.f32.mxu0 0.0
        %1463 = vmatmul.mubr.f32.gmra.mrb[0].mxu0 %v1297
        %v1464 = vpop.f32.mrb[0].mxu0
        %v1465 = vadd.f32 0.0, %v1464
        %v1466 = vpop.f32.mrb[0].mxu0
        %v1467 = vadd.f32 0.0, %v1466
        %1468 = vmatprep.mubr.f32.mxu0 0.0
        %1469 = vmatmul.mubr.f32.gmra.mrb[0].mxu0 %v1300
        %v1470 = vpop.f32.mrb[0].mxu0
        %v1471 = vadd.f32 0.0, %v1470
        %v1472 = vpop.f32.mrb[0].mxu0
        %v1473 = vadd.f32 0.0, %v1472
        %1474 = vmatprep.mubr.f32.mxu0 0.0
        %1475 = vmatmul.mubr.f32.gmra.mrb[0].mxu0 %v1303
        %v1476 = vpop.f32.mrb[0].mxu0
        %v1477 = vadd.f32 0.0, %v1476
        %v1478 = vpop.f32.mrb[0].mxu0
        %v1479 = vadd.f32 0.0, %v1478
        %1480 = vmatprep.mubr.f32.mxu0 0.0
        %1481 = vmatmul.mubr.f32.gmra.mrb[0].mxu0 %v1306
        %v1482 = vpop.f32.mrb[0].mxu0
        %v1483 = vadd.f32 0.0, %v1482
        %v1484 = vpop.f32.mrb[0].mxu0
        %v1485 = vadd.f32 0.0, %v1484
        %1486 = vmatprep.mubr.f32.mxu0 0.0
        %1487 = vmatmul.mubr.f32.gmra.mrb[0].mxu0 %v1309
        %v1488 = vpop.f32.mrb[0].mxu0
        %v1489 = vadd.f32 0.0, %v1488
        %v1490 = vpop.f32.mrb[0].mxu0
        %v1491 = vadd.f32 0.0, %v1490
        %1492 = vmatprep.mubr.f32.mxu0 0.0
        %1493 = vmatmul.mubr.f32.gmra.mrb[0].mxu0 %v1312
        %v1494 = vpop.f32.mrb[0].mxu0
        %v1495 = vadd.f32 0.0, %v1494
        %v1496 = vpop.f32.mrb[0].mxu0
        %v1497 = vadd.f32 0.0, %v1496
        %1498 = vmatprep.mubr.f32.mxu0 0.0
        %1499 = vmatmul.mubr.f32.gmra.mrb[0].mxu0 %v1315
        %v1500 = vpop.f32.mrb[0].mxu0
        %v1501 = vadd.f32 0.0, %v1500
        %v1502 = vpop.f32.mrb[0].mxu0
        %v1503 = vadd.f32 0.0, %v1502
        %1504 = vmatprep.mubr.f32.mxu0 0.0
        %1505 = vmatmul.mubr.f32.gmra.mrb[0].mxu0 %v1318
        %v1506 = vpop.f32.mrb[0].mxu0
        %v1507 = vadd.f32 0.0, %v1506
        %v1508 = vpop.f32.mrb[0].mxu0
        %v1509 = vadd.f32 0.0, %v1508
        %1510 = vmatprep.mubr.f32.mxu0 0.0
        %1511 = vmatmul.mubr.f32.gmra.mrb[0].mxu0 %v1321
        %v1512 = vpop.f32.mrb[0].mxu0
        %v1513 = vadd.f32 0.0, %v1512
        %v1514 = vpop.f32.mrb[0].mxu0
        %v1515 = vadd.f32 0.0, %v1514
        %1516 = vmatprep.mubr.f32.mxu0 0.0
        %1517 = vmatmul.mubr.f32.gmra.mrb[0].mxu0 %v1324
        %v1518 = vpop.f32.mrb[0].mxu0
        %v1519 = vadd.f32 0.0, %v1518
        %v1520 = vpop.f32.mrb[0].mxu0
        %v1521 = vadd.f32 0.0, %v1520
        %1522 = vmatprep.mubr.f32.mxu0 0.0
        %1523 = vmatmul.mubr.f32.gmra.mrb[0].mxu0 %v1327
        %v1524 = vpop.f32.mrb[0].mxu0
        %v1525 = vadd.f32 0.0, %v1524
        %v1526 = vpop.f32.mrb[0].mxu0
        %v1527 = vadd.f32 0.0, %v1526
        %1528 = vmatprep.mubr.f32.mxu0 0.0
        %1529 = vmatmul.mubr.f32.gmra.mrb[0].mxu0 %v1330
        %v1530 = vpop.f32.mrb[0].mxu0
        %v1531 = vadd.f32 0.0, %v1530
        %v1532 = vpop.f32.mrb[0].mxu0
        %v1533 = vadd.f32 0.0, %v1532
        %1534 = vmatprep.mubr.f32.mxu0 0.0
        %1535 = vmatmul.mubr.f32.gmra.mrb[0].mxu0 %v1333
        %v1536 = vpop.f32.mrb[0].mxu0
        %v1537 = vadd.f32 0.0, %v1536
        %v1538 = vpop.f32.mrb[0].mxu0
        %v1539 = vadd.f32 0.0, %v1538
        %1540 = vmatprep.mubr.f32.mxu0 0.0
        %1541 = vmatmul.mubr.f32.gmra.mrb[0].mxu0 %v1336
        %v1542 = vpop.f32.mrb[0].mxu0
        %v1543 = vadd.f32 0.0, %v1542
        %v1544 = vpop.f32.mrb[0].mxu0
        %v1545 = vadd.f32 0.0, %v1544
        %1546 = vmatprep.mubr.f32.mxu0 0.0
        %1547 = vmatmul.mubr.f32.gmra.mrb[0].mxu0 %v1339
        %v1548 = vpop.f32.mrb[0].mxu0
        %v1549 = vadd.f32 0.0, %v1548
        %v1550 = vpop.f32.mrb[0].mxu0
        %v1551 = vadd.f32 0.0, %v1550
        %1552 = vmatprep.mubr.f32.mxu0 0.0
        %1553 = vmatmul.mubr.f32.gmra.mrb[0].mxu0 %v1342
        %v1554 = vpop.f32.mrb[0].mxu0
        %v1555 = vadd.f32 0.0, %v1554
        %v1556 = vpop.f32.mrb[0].mxu0
        %v1557 = vadd.f32 0.0, %v1556
        %1558 = vmatprep.mubr.f32.mxu0 0.0
        %1559 = vmatmul.mubr.f32.gmra.mrb[0].mxu0 %v1345
        %v1560 = vpop.f32.mrb[0].mxu0
        %v1561 = vadd.f32 0.0, %v1560
        %v1562 = vpop.f32.mrb[0].mxu0
        %v1563 = vadd.f32 0.0, %v1562
        %1564 = vmatprep.mubr.f32.mxu0 0.0
        %1565 = vmatmul.mubr.f32.gmra.mrb[0].mxu0 %v1348
        %v1566 = vpop.f32.mrb[0].mxu0
        %v1567 = vadd.f32 0.0, %v1566
        %v1568 = vpop.f32.mrb[0].mxu0
        %v1569 = vadd.f32 0.0, %v1568
        %1570 = vmatprep.mubr.f32.mxu0 0.0
        %1571 = vmatmul.mubr.f32.gmra.mrb[0].mxu0 %v1351
        %v1572 = vpop.f32.mrb[0].mxu0
        %v1573 = vadd.f32 0.0, %v1572
        %v1574 = vpop.f32.mrb[0].mxu0
        %v1575 = vadd.f32 0.0, %v1574
        %1576 = vmatprep.mubr.f32.mxu0 0.0
        %1577 = vmatmul.mubr.f32.gmra.mrb[0].mxu0 %v1354
        %v1578 = vpop.f32.mrb[0].mxu0
        %v1579 = vadd.f32 0.0, %v1578
        %v1580 = vpop.f32.mrb[0].mxu0
        %v1581 = vadd.f32 0.0, %v1580
        %1582 = vmatprep.mubr.f32.mxu0 0.0
        %1583 = vmatmul.mubr.f32.gmra.mrb[0].mxu0 %v1357
        %v1584 = vpop.f32.mrb[0].mxu0
        %v1585 = vadd.f32 0.0, %v1584
        %v1586 = vpop.f32.mrb[0].mxu0
        %v1587 = vadd.f32 0.0, %v1586
        %1588 = vmatprep.mubr.f32.mxu0 0.0
        %1589 = vmatmul.mubr.f32.gmra.mrb[0].mxu0 %v1360
        %v1590 = vpop.f32.mrb[0].mxu0
        %v1591 = vadd.f32 0.0, %v1590
        %v1592 = vpop.f32.mrb[0].mxu0
        %v1593 = vadd.f32 0.0, %v1592
        %1594 = vmatprep.mubr.f32.mxu0 0.0
        %1595 = vmatmul.mubr.f32.gmra.mrb[0].mxu0 %v1363
        %v1596 = vpop.f32.mrb[0].mxu0
        %v1597 = vadd.f32 0.0, %v1596
        %v1598 = vpop.f32.mrb[0].mxu0
        %v1599 = vadd.f32 0.0, %v1598
        %1600 = vmatprep.mubr.f32.mxu0 0.0
        %1601 = vmatmul.mubr.f32.gmra.mrb[0].mxu0 %v1366
        %v1602 = vpop.f32.mrb[0].mxu0
        %v1603 = vadd.f32 0.0, %v1602
        %v1604 = vpop.f32.mrb[0].mxu0
        %v1605 = vadd.f32 0.0, %v1604
        %1606 = vmatprep.mubr.f32.mxu0 0.0
        %1607 = vmatmul.mubr.f32.gmra.mrb[0].mxu0 %v1369
        %v1608 = vpop.f32.mrb[0].mxu0
        %v1609 = vadd.f32 0.0, %v1608
        %v1610 = vpop.f32.mrb[0].mxu0
        %v1611 = vadd.f32 0.0, %v1610
        %1612 = vmatprep.mubr.f32.mxu0 0.0
        %1613 = vmatmul.mubr.f32.gmra.mrb[0].mxu0 %v1372
        %v1614 = vpop.f32.mrb[0].mxu0
        %v1615 = vadd.f32 0.0, %v1614
        %v1616 = vpop.f32.mrb[0].mxu0
        %v1617 = vadd.f32 0.0, %v1616
        %1618 = vmatprep.mubr.f32.mxu0 0.0
        %1619 = vmatmul.mubr.f32.gmra.mrb[0].mxu0 %v1375
        %v1620 = vpop.f32.mrb[0].mxu0
        %v1621 = vadd.f32 0.0, %v1620
        %v1622 = vpop.f32.mrb[0].mxu0
        %v1623 = vadd.f32 0.0, %v1622
        %1624 = vmatprep.mubr.f32.mxu0 0.0
        %1625 = vmatmul.mubr.f32.gmra.mrb[0].mxu0 %v1378
        %v1626 = vpop.f32.mrb[0].mxu0
        %v1627 = vadd.f32 0.0, %v1626
        %v1628 = vpop.f32.mrb[0].mxu0
        %v1629 = vadd.f32 0.0, %v1628
        %1630 = vmatprep.mubr.f32.mxu0 0.0
        %1631 = vmatmul.mubr.f32.gmra.mrb[0].mxu0 %v1381
        %v1632 = vpop.f32.mrb[0].mxu0
        %v1633 = vadd.f32 0.0, %v1632
        %v1634 = vpop.f32.mrb[0].mxu0
        %v1635 = vadd.f32 0.0, %v1634
        %1636 = vmatprep.mubr.f32.mxu0 0.0
        %1637 = vmatmul.mubr.f32.gmra.mrb[0].mxu0 %v1384
        %v1638 = vpop.f32.mrb[0].mxu0
        %v1639 = vadd.f32 0.0, %v1638
        %v1640 = vpop.f32.mrb[0].mxu0
        %v1641 = vadd.f32 0.0, %v1640
        %1642 = vdwg.mxu0
        %v1643 = vmax.f32 %v1453, %v1465
        %v1644 = vmax.f32 %v1459, %v1471
        %v1645 = vmax.f32 %v1643, %v1477
        %v1646 = vmax.f32 %v1644, %v1483
        %v1647 = vmax.f32 %v1645, %v1489
        %v1648 = vmax.f32 %v1646, %v1495
        %v1649 = vmax.f32 %v1647, %v1501
        %v1650 = vmax.f32 %v1648, %v1507
        %v1651 = vmax.f32 %v1649, %v1513
        %v1652 = vmax.f32 %v1650, %v1519
        %v1653 = vmax.f32 %v1651, %v1525
        %v1654 = vmax.f32 %v1652, %v1531
        %v1655 = vmax.f32 %v1653, %v1537
        %v1656 = vmax.f32 %v1654, %v1543
        %v1657 = vmax.f32 %v1655, %v1549
        %v1658 = vmax.f32 %v1656, %v1555
        %v1659 = vmax.f32 %v1657, %v1561
        %v1660 = vmax.f32 %v1658, %v1567
        %v1661 = vmax.f32 %v1659, %v1573
        %v1662 = vmax.f32 %v1660, %v1579
        %v1663 = vmax.f32 %v1661, %v1585
        %v1664 = vmax.f32 %v1662, %v1591
        %v1665 = vmax.f32 %v1663, %v1597
        %v1666 = vmax.f32 %v1664, %v1603
        %v1667 = vmax.f32 %v1665, %v1609
        %v1668 = vmax.f32 %v1666, %v1615
        %v1669 = vmax.f32 %v1667, %v1621
        %v1670 = vmax.f32 %v1668, %v1627
        %v1671 = vmax.f32 %v1669, %v1633
        %v1672 = vmax.f32 %v1670, %v1639
        %v1673 = vmax.f32 %v1671, %v1672
        %v1674 = vrot.slane %v1673, 4
        %v1675 = vmax.f32 %v1673, %v1674
        %v1676 = vrot.slane %v1675, 2
        %v1677 = vmax.f32 %v1675, %v1676
        %v1678 = vrot.slane %v1677, 1
        %v1679 = vmax.f32 %v1677, %v1678
        %v1680 = vmax.f32 %v1455, %v1467
        %v1681 = vmax.f32 %v1461, %v1473
        %v1682 = vmax.f32 %v1680, %v1479
        %v1683 = vmax.f32 %v1681, %v1485
        %v1684 = vmax.f32 %v1682, %v1491
        %v1685 = vmax.f32 %v1683, %v1497
        %v1686 = vmax.f32 %v1684, %v1503
        %v1687 = vmax.f32 %v1685, %v1509
        %v1688 = vmax.f32 %v1686, %v1515
        %v1689 = vmax.f32 %v1687, %v1521
        %v1690 = vmax.f32 %v1688, %v1527
        %v1691 = vmax.f32 %v1689, %v1533
        %v1692 = vmax.f32 %v1690, %v1539
        %v1693 = vmax.f32 %v1691, %v1545
        %v1694 = vmax.f32 %v1692, %v1551
        %v1695 = vmax.f32 %v1693, %v1557
        %v1696 = vmax.f32 %v1694, %v1563
        %v1697 = vmax.f32 %v1695, %v1569
        %v1698 = vmax.f32 %v1696, %v1575
        %v1699 = vmax.f32 %v1697, %v1581
        %v1700 = vmax.f32 %v1698, %v1587
        %v1701 = vmax.f32 %v1699, %v1593
        %v1702 = vmax.f32 %v1700, %v1599
        %v1703 = vmax.f32 %v1701, %v1605
        %v1704 = vmax.f32 %v1702, %v1611
        %v1705 = vmax.f32 %v1703, %v1617
        %v1706 = vmax.f32 %v1704, %v1623
        %v1707 = vmax.f32 %v1705, %v1629
        %v1708 = vmax.f32 %v1706, %v1635
        %v1709 = vmax.f32 %v1707, %v1641
        %v1710 = vmax.f32 %v1708, %v1709
        %v1711 = vrot.slane %v1710, 4
        %v1712 = vmax.f32 %v1710, %v1711
        %v1713 = vrot.slane %v1712, 2
        %v1714 = vmax.f32 %v1712, %v1713
        %v1715 = vrot.slane %v1714, 1
        %v1716 = vmax.f32 %v1714, %v1715
        %v1717 = vsub.f32 %v1453, %v1679
        %v1718 = vsub.f32 %v1455, %v1716
        %v1719 = vsub.f32 %v1459, %v1679
        %v1720 = vsub.f32 %v1461, %v1716
        %v1721 = vsub.f32 %v1465, %v1679
        %v1722 = vsub.f32 %v1467, %v1716
        %v1723 = vsub.f32 %v1471, %v1679
        %v1724 = vsub.f32 %v1473, %v1716
        %v1725 = vsub.f32 %v1477, %v1679
        %v1726 = vsub.f32 %v1479, %v1716
        %v1727 = vsub.f32 %v1483, %v1679
        %v1728 = vsub.f32 %v1485, %v1716
        %v1729 = vsub.f32 %v1489, %v1679
        %v1730 = vsub.f32 %v1491, %v1716
        %v1731 = vsub.f32 %v1495, %v1679
        %v1732 = vsub.f32 %v1497, %v1716
        %v1733 = vsub.f32 %v1501, %v1679
        %v1734 = vsub.f32 %v1503, %v1716
        %v1735 = vsub.f32 %v1507, %v1679
        %v1736 = vsub.f32 %v1509, %v1716
        %v1737 = vsub.f32 %v1513, %v1679
        %v1738 = vsub.f32 %v1515, %v1716
        %v1739 = vsub.f32 %v1519, %v1679
        %v1740 = vsub.f32 %v1521, %v1716
        %v1741 = vsub.f32 %v1525, %v1679
        %v1742 = vsub.f32 %v1527, %v1716
        %v1743 = vsub.f32 %v1531, %v1679
        %v1744 = vsub.f32 %v1533, %v1716
        %v1745 = vsub.f32 %v1537, %v1679
        %v1746 = vsub.f32 %v1539, %v1716
        %v1747 = vsub.f32 %v1543, %v1679
        %v1748 = vsub.f32 %v1545, %v1716
        %v1749 = vsub.f32 %v1549, %v1679
        %v1750 = vsub.f32 %v1551, %v1716
        %v1751 = vsub.f32 %v1555, %v1679
        %v1752 = vsub.f32 %v1557, %v1716
        %v1753 = vsub.f32 %v1561, %v1679
        %v1754 = vsub.f32 %v1563, %v1716
        %v1755 = vsub.f32 %v1567, %v1679
        %v1756 = vsub.f32 %v1569, %v1716
        %v1757 = vsub.f32 %v1573, %v1679
        %v1758 = vsub.f32 %v1575, %v1716
        %v1759 = vsub.f32 %v1579, %v1679
        %v1760 = vsub.f32 %v1581, %v1716
        %v1761 = vsub.f32 %v1585, %v1679
        %v1762 = vsub.f32 %v1587, %v1716
        %v1763 = vsub.f32 %v1591, %v1679
        %v1764 = vsub.f32 %v1593, %v1716
        %v1765 = vsub.f32 %v1597, %v1679
        %v1766 = vsub.f32 %v1599, %v1716
        %v1767 = vsub.f32 %v1603, %v1679
        %v1768 = vsub.f32 %v1605, %v1716
        %v1769 = vsub.f32 %v1609, %v1679
        %v1770 = vsub.f32 %v1611, %v1716
        %v1771 = vsub.f32 %v1615, %v1679
        %v1772 = vsub.f32 %v1617, %v1716
        %v1773 = vsub.f32 %v1621, %v1679
        %v1774 = vsub.f32 %v1623, %v1716
        %v1775 = vsub.f32 %v1627, %v1679
        %v1776 = vsub.f32 %v1629, %v1716
        %v1777 = vsub.f32 %v1633, %v1679
        %v1778 = vsub.f32 %v1635, %v1716
        %v1779 = vsub.f32 %v1639, %v1679
        %v1780 = vsub.f32 %v1641, %v1716
        %v1781 = vmul.f32 %v1717, 1.442695
        %v1782 = vpow.pop %v1781
        %v1783 = vmul.f32 %v1718, 1.442695
        %v1784 = vpow.pop %v1783
        %v1785 = vmul.f32 %v1719, 1.442695
        %v1786 = vpow.pop %v1785
        %v1787 = vmul.f32 %v1720, 1.442695
        %v1788 = vpow.pop %v1787
        %v1789 = vmul.f32 %v1721, 1.442695
        %v1790 = vpow.pop %v1789
        %v1791 = vmul.f32 %v1722, 1.442695
        %v1792 = vpow.pop %v1791
        %v1793 = vmul.f32 %v1723, 1.442695
        %v1794 = vpow.pop %v1793
        %v1795 = vmul.f32 %v1724, 1.442695
        %v1796 = vpow.pop %v1795
        %v1797 = vmul.f32 %v1725, 1.442695
        %v1798 = vpow.pop %v1797
        %v1799 = vmul.f32 %v1726, 1.442695
        %v1800 = vpow.pop %v1799
        %v1801 = vmul.f32 %v1727, 1.442695
        %v1802 = vpow.pop %v1801
        %v1803 = vmul.f32 %v1728, 1.442695
        %v1804 = vpow.pop %v1803
        %v1805 = vmul.f32 %v1729, 1.442695
        %v1806 = vpow.pop %v1805
        %v1807 = vmul.f32 %v1730, 1.442695
        %v1808 = vpow.pop %v1807
        %v1809 = vmul.f32 %v1731, 1.442695
        %v1810 = vpow.pop %v1809
        %v1811 = vmul.f32 %v1732, 1.442695
        %v1812 = vpow.pop %v1811
        %v1813 = vmul.f32 %v1733, 1.442695
        %v1814 = vpow.pop %v1813
        %v1815 = vmul.f32 %v1734, 1.442695
        %v1816 = vpow.pop %v1815
        %v1817 = vmul.f32 %v1735, 1.442695
        %v1818 = vpow.pop %v1817
        %v1819 = vmul.f32 %v1736, 1.442695
        %v1820 = vpow.pop %v1819
        %v1821 = vmul.f32 %v1737, 1.442695
        %v1822 = vpow.pop %v1821
        %v1823 = vmul.f32 %v1738, 1.442695
        %v1824 = vpow.pop %v1823
        %v1825 = vmul.f32 %v1739, 1.442695
        %v1826 = vpow.pop %v1825
        %v1827 = vmul.f32 %v1740, 1.442695
        %v1828 = vpow.pop %v1827
        %v1829 = vmul.f32 %v1741, 1.442695
        %v1830 = vpow.pop %v1829
        %v1831 = vmul.f32 %v1742, 1.442695
        %v1832 = vpow.pop %v1831
        %v1833 = vmul.f32 %v1743, 1.442695
        %v1834 = vpow.pop %v1833
        %v1835 = vmul.f32 %v1744, 1.442695
        %v1836 = vpow.pop %v1835
        %v1837 = vmul.f32 %v1745, 1.442695
        %v1838 = vpow.pop %v1837
        %v1839 = vmul.f32 %v1746, 1.442695
        %v1840 = vpow.pop %v1839
        %v1841 = vmul.f32 %v1747, 1.442695
        %v1842 = vpow.pop %v1841
        %v1843 = vmul.f32 %v1748, 1.442695
        %v1844 = vpow.pop %v1843
        %v1845 = vmul.f32 %v1749, 1.442695
        %v1846 = vpow.pop %v1845
        %v1847 = vmul.f32 %v1750, 1.442695
        %v1848 = vpow.pop %v1847
        %v1849 = vmul.f32 %v1751, 1.442695
        %v1850 = vpow.pop %v1849
        %v1851 = vmul.f32 %v1752, 1.442695
        %v1852 = vpow.pop %v1851
        %v1853 = vmul.f32 %v1753, 1.442695
        %v1854 = vpow.pop %v1853
        %v1855 = vmul.f32 %v1754, 1.442695
        %v1856 = vpow.pop %v1855
        %v1857 = vmul.f32 %v1755, 1.442695
        %v1858 = vpow.pop %v1857
        %v1859 = vmul.f32 %v1756, 1.442695
        %v1860 = vpow.pop %v1859
        %v1861 = vmul.f32 %v1757, 1.442695
        %v1862 = vpow.pop %v1861
        %v1863 = vmul.f32 %v1758, 1.442695
        %v1864 = vpow.pop %v1863
        %v1865 = vmul.f32 %v1759, 1.442695
        %v1866 = vpow.pop %v1865
        %v1867 = vmul.f32 %v1760, 1.442695
        %v1868 = vpow.pop %v1867
        %v1869 = vmul.f32 %v1761, 1.442695
        %v1870 = vpow.pop %v1869
        %v1871 = vmul.f32 %v1762, 1.442695
        %v1872 = vpow.pop %v1871
        %v1873 = vmul.f32 %v1763, 1.442695
        %v1874 = vpow.pop %v1873
        %v1875 = vmul.f32 %v1764, 1.442695
        %v1876 = vpow.pop %v1875
        %v1877 = vmul.f32 %v1765, 1.442695
        %v1878 = vpow.pop %v1877
        %v1879 = vmul.f32 %v1766, 1.442695
        %v1880 = vpow.pop %v1879
        %v1881 = vmul.f32 %v1767, 1.442695
        %v1882 = vpow.pop %v1881
        %v1883 = vmul.f32 %v1768, 1.442695
        %v1884 = vpow.pop %v1883
        %v1885 = vmul.f32 %v1769, 1.442695
        %v1886 = vpow.pop %v1885
        %v1887 = vmul.f32 %v1770, 1.442695
        %v1888 = vpow.pop %v1887
        %v1889 = vmul.f32 %v1771, 1.442695
        %v1890 = vpow.pop %v1889
        %v1891 = vmul.f32 %v1772, 1.442695
        %v1892 = vpow.pop %v1891
        %v1893 = vmul.f32 %v1773, 1.442695
        %v1894 = vpow.pop %v1893
        %v1895 = vmul.f32 %v1774, 1.442695
        %v1896 = vpow.pop %v1895
        %v1897 = vmul.f32 %v1775, 1.442695
        %v1898 = vpow.pop %v1897
        %v1899 = vmul.f32 %v1776, 1.442695
        %v1900 = vpow.pop %v1899
        %v1901 = vmul.f32 %v1777, 1.442695
        %v1902 = vpow.pop %v1901
        %v1903 = vmul.f32 %v1778, 1.442695
        %v1904 = vpow.pop %v1903
        %v1905 = vmul.f32 %v1779, 1.442695
        %v1906 = vpow.pop %v1905
        %v1907 = vmul.f32 %v1780, 1.442695
        %v1908 = vpow.pop %v1907
        %v1909 = vpack.c.bf16 %v1786, %v1782
        %v1910 = vpack.c.bf16 %v1788, %v1784
        %v1911 = vpack.c.bf16 %v1794, %v1790
        %v1912 = vpack.c.bf16 %v1796, %v1792
        %v1913 = vpack.c.bf16 %v1802, %v1798
        %v1914 = vpack.c.bf16 %v1804, %v1800
        %v1915 = vpack.c.bf16 %v1810, %v1806
        %v1916 = vpack.c.bf16 %v1812, %v1808
        %v1917 = vpack.c.bf16 %v1818, %v1814
        %v1918 = vpack.c.bf16 %v1820, %v1816
        %v1919 = vpack.c.bf16 %v1826, %v1822
        %v1920 = vpack.c.bf16 %v1828, %v1824
        %v1921 = vpack.c.bf16 %v1834, %v1830
        %v1922 = vpack.c.bf16 %v1836, %v1832
        %v1923 = vpack.c.bf16 %v1842, %v1838
        %v1924 = vpack.c.bf16 %v1844, %v1840
        %v1925 = vpack.c.bf16 %v1850, %v1846
        %v1926 = vpack.c.bf16 %v1852, %v1848
        %v1927 = vpack.c.bf16 %v1858, %v1854
        %v1928 = vpack.c.bf16 %v1860, %v1856
        %v1929 = vpack.c.bf16 %v1866, %v1862
        %v1930 = vpack.c.bf16 %v1868, %v1864
        %v1931 = vpack.c.bf16 %v1874, %v1870
        %v1932 = vpack.c.bf16 %v1876, %v1872
        %v1933 = vpack.c.bf16 %v1882, %v1878
        %v1934 = vpack.c.bf16 %v1884, %v1880
        %v1935 = vpack.c.bf16 %v1890, %v1886
        %v1936 = vpack.c.bf16 %v1892, %v1888
        %v1937 = vpack.c.bf16 %v1898, %v1894
        %v1938 = vpack.c.bf16 %v1900, %v1896
        %v1939 = vpack.c.bf16 %v1906, %v1902
        %v1940 = vpack.c.bf16 %v1908, %v1904
        %v1941 = vpack.c.bf16 %v451, %v451
        %v1942 = vpack.c.bf16 %v453, %v453
        %1943 = vmatprep.subr.bf16.mxu0 %v1910
        %1944 = vmatpush1.bf16.msra.mxu0 %v1909
        %1945 = vmatprep.subr.bf16.mxu0 %v1912
        %1946 = vmatpush1.bf16.msra.mxu0 %v1911
        %1947 = vmatprep.subr.bf16.mxu0 %v1914
        %1948 = vmatpush1.bf16.msra.mxu0 %v1913
        %1949 = vmatprep.subr.bf16.mxu0 %v1916
        %1950 = vmatpush1.bf16.msra.mxu0 %v1915
        %1951 = vmatprep.subr.bf16.mxu0 %v1918
        %1952 = vmatpush1.bf16.msra.mxu0 %v1917
        %1953 = vmatprep.subr.bf16.mxu0 %v1920
        %1954 = vmatpush1.bf16.msra.mxu0 %v1919
        %1955 = vmatprep.subr.bf16.mxu0 %v1922
        %1956 = vmatpush1.bf16.msra.mxu0 %v1921
        %1957 = vmatprep.subr.bf16.mxu0 %v1924
        %1958 = vmatpush1.bf16.msra.mxu0 %v1923
        %1959 = vmatprep.subr.bf16.mxu0 %v1926
        %1960 = vmatpush1.bf16.msra.mxu0 %v1925
        %1961 = vmatprep.subr.bf16.mxu0 %v1928
        %1962 = vmatpush1.bf16.msra.mxu0 %v1927
        %1963 = vmatprep.subr.bf16.mxu0 %v1930
        %1964 = vmatpush1.bf16.msra.mxu0 %v1929
        %1965 = vmatprep.subr.bf16.mxu0 %v1932
        %1966 = vmatpush1.bf16.msra.mxu0 %v1931
        %1967 = vmatprep.subr.bf16.mxu0 %v1934
        %1968 = vmatpush1.bf16.msra.mxu0 %v1933
        %1969 = vmatprep.subr.bf16.mxu0 %v1936
        %1970 = vmatpush1.bf16.msra.mxu0 %v1935
        %1971 = vmatprep.subr.bf16.mxu0 %v1938
        %1972 = vmatpush1.bf16.msra.mxu0 %v1937
        %1973 = vmatprep.subr.bf16.mxu0 %v1940
        %1974 = vmatpush1.bf16.msra.mxu0 %v1939
        %1975 = vmatprep.mubr.bf16.mxu0 %v1942
        %1976 = vmatmul.mubr.bf16.gmra.mrb[0].mxu0 %v1941
        %v1977 = vpop.f32.mrb[0].mxu0
        %v1978 = vadd.f32 0.0, %v1977
        %v1979 = vpop.f32.mrb[0].mxu0
        %v1980 = vadd.f32 0.0, %v1979
        %v1981 = vpop.f32.mrb[0].mxu0
        %v1982 = vpop.f32.mrb[0].mxu0
        %1983 = vdwg.mxu0
        %v1984 = vrcp.pop %v1978
        %v1985 = vrcp.pop %v1980
        %v1986 = vlaneseq
        %v1987 = vshrl.u32 %v1986, 7
        %v1988 = vsub.s32 4, %v1987
        %v1989 = vrot.slane %v1984, %v1988
        %v1990 = vlaneseq
        %v1991 = vshrl.u32 %v1990, 7
        %v1992 = vsub.s32 4, %v1991
        %v1993 = vrot.slane %v1985, %v1992
        %v1994 = vmul.f32 %v1978, %v1989
        %v1995 = vmul.f32 %v1980, %v1993
        %v1996 = vadd.f32 %v1224, %v1994
        %v1997 = vadd.f32 %v1225, %v1995
        %v1998 = vld [vmem:[%s3] sm:$0xf]
        %2000 = vset.pattern.permute.xlu0 0
        %2001 = vperm.xlu0 %2000, %v1998
        %v2002 = vpop.permute.xlu0 %2001
        %v2004 = vadd.f32 %v1996, %v2002
        %v2005 = vadd.f32 %v1997, %v2002
        %v2008 = vcombine.low %v2004, %v2005
        %2010 = vst [vmem:[%s230] sm:$0xff] %v2008
        %s2011 = sand.u32 %s136, 1
        %s2012 = scalar_lea.sflag [#allocation3], %s2011
        %s2013 = sand.u32 %s136, 1
        %s2014 = smul.addr %s2013, 8
        %s2015 = scalar_lea.vmem [#allocation2], %s2014
        // Predicated region
        $region37: #{tpu_custom_call.1} parent=35 // pred_check
          %p2016 = pneg %p146
        $region38: #{tpu_custom_call.1} parent=35 // pred_check_branch
          %2018 = sbr.rel (%p2016) target = $region40
        $region39: #{tpu_custom_call.1} parent=35 // pred_region
          %s2019 = smul.u32 2, %s23
          %s2021 = ssub.s32 128, 128
          %2022 = vsyncadd %s2012, %s2021
          %s2023 = smul.addr %s22, 2
          %s2024 = sadd.s32 %s2019, %s2023
          %s2025 = smul.addr %s2024, 64
          %s2026 = scalar_lea.hbm %s4, %s2025
          %s2028 = sshll.u32 %s2015, 4
          %s2029 = int_to_ptr.vmem [resolvable:$true] %s2028
          %2031 = dma.vmem_to_hbm [thread:$0]  %s2029, 128, %s2026, %s2012
        $region40: #{tpu_custom_call.1} parent=35 // pred_fallthru
          _
      $region36: #{tpu_custom_call.1} parent=5 // pred_fallthru
        _
      %p2032 = scmp.le.s32.totalorder 2, %s13
      // Predicated region
      $region41: #{tpu_custom_call.1} parent=5 // pred_check
        %p2033 = pneg %p2032
      $region42: #{tpu_custom_call.1} parent=5 // pred_check_branch
        %2035 = sbr.rel (%p2033) target = $region44
      $region43: #{tpu_custom_call.1} parent=5 // pred_region
        %s2036 = ssub.s32 %s13, 2
        // Predicated region
        $region45: #{tpu_custom_call.1} parent=43 // pred_check
          %p2037 = pneg %p152
        $region46: #{tpu_custom_call.1} parent=43 // pred_check_branch
          %2039 = sbr.rel (%p2037) target = $region48
        $region47: #{tpu_custom_call.1} parent=43 // pred_region
          %s2040 = sand.u32 %s137, 1
          %s2041 = scalar_lea.sflag [#allocation3], %s2040
          %s2042 = sand.u32 %s137, 1
          %s2043 = smul.addr %s2042, 8
          %s2044 = scalar_lea.vmem [#allocation2], %s2043
          %2045 = dma.done %s2041, 128
        $region48: #{tpu_custom_call.1} parent=43 // pred_fallthru
          _
      $region44: #{tpu_custom_call.1} parent=5 // pred_fallthru
        _
    $region6: #{tpu_custom_call.1} parent=1 // loop_footer
      %s17 = sadd.s32 1, %s13
    $region7: #{tpu_custom_call.1} parent=1 // loop_footer_branch
      %12 = sbr.rel target = $region3
    $region8: #{tpu_custom_call.1} parent=1 // loop_exit
      _
    %2046 = vsyncpa [#allocation3], 1
    %s2047 = scalar_lea.sflag [#allocation3], 1
    %2048 = vsyncpa %s2047, 1

// kernel: tpu_custom_call.1
$region0: #{tpu_custom_call.1}
  #allocation0 [shape = 'u32[]', space=smem, size = 0x4, offset = 0x4, fixed_abs, tag = 'smem constant byte address 0x4 - core index']
  #allocation1 [shape = 'u32[144,128]{1,0:T(1,128)}', space=vmem, size = 0x12000, scoped, tag = 'internal scratch']
  %s0 = inlined_call_operand.vmem [shape: f32[2,5,256], index: 0, kind: input, shape index: {}]
  %s1 = inlined_call_operand.vmem [shape: f32[2,5,256], index: 1, kind: input, shape index: {}]
  %s2 = inlined_call_operand.vmem [shape: f32[48,5], index: 2, kind: input, shape index: {}]
  %s3 = inlined_call_operand.vmem [shape: f32[4,1], index: 3, kind: input, shape index: {}]
  %s4 = inlined_call_operand.hbm [shape: f32[2,4,256], index: 4, kind: output, shape index: {}]
  %s5 = sld [smem:[#allocation0]]
  $region49: #{tpu_custom_call.1} parent=0
    _
  %s7 = ssub.s32 1, %s5
  %s8 = scalar_select 0, %s7, %s5
  $region1: #{tpu_custom_call.1} parent=0
    #allocation2 [shape = 'u8[8192]{0}', space=vmem, size = 0x2000, scoped, tag = 'output window, operand 0']
    #allocation3 [shape = 's32[2]{0}', space=sflag, size = 0x8, scoped, tag = 'scoped memory for tpu_custom_call.1']
    %9 = vsyncpa [#allocation3], 0
    %s10 = scalar_lea.sflag [#allocation3], 1
    %11 = vsyncpa %s10, 0
    loop: start=0, step=1, limit=4
    $region2: #{tpu_custom_call.1} parent=1 // loop_pre_header
      _
    $region3: #{tpu_custom_call.1} parent=1 // loop_header
      %s13 = sphi 0, %s17
      %p14 = scmp.ge.s32.totalorder %s13, 4
      %s20 = sphi 0, %s32
      %s21 = sphi 0, %s28
      %s22 = sphi 0, %s20
      %s23 = sphi 0, %s21
      %s24 = sphi 0, %s22
      %s25 = sphi 0, %s23
      %s35 = sphi 0, %s37
      %s38 = sphi 0, %s35
      %s39 = sphi 0, %s38
      %s55 = sphi 0, %s39
      %s63 = sphi 0, %s65
      %s66 = sphi 0, %s63
      %s67 = sphi 0, %s66
      %s83 = sphi 0, %s67
      %s87 = sphi 0, %s87
      %s89 = sphi 0, %s87
      %s90 = sphi 0, %s89
      %s104 = sphi 0, %s90
      %s108 = sphi 0, %s108
      %s110 = sphi 0, %s108
      %s111 = sphi 0, %s110
      %s125 = sphi 0, %s111
      %s133 = sphi 0, %s135
      %s136 = sphi 0, %s133
      %s137 = sphi 0, %s136
      %s153 = sphi 0, %s137
    $region4: #{tpu_custom_call.1} parent=1 // loop_header_branch
      %16 = sbr.rel (%p14) target = $region8
    $region5: #{tpu_custom_call.1} parent=1 // loop_body
      %s18 = ssub.s32 %s13, 1
      %s19 = ssub.s32 %s13, 2
      %s26 = sadd.s32 1, %s21
      %p27 = scmp.ge.s32.totalorder %s26, 1
      %s28 = scalar_select %p27, 0, %s26
      %s29 = sadd.s32 1, %s20
      %s30 = scalar_select %p27, %s29, %s20
      %p31 = scmp.ge.s32.totalorder %s30, 2
      %s32 = scalar_select %p31, 0, %s30
      %s33 = ssub.s32 %s20, %s32
      %p34 = scmp.eq.s32.totalorder %s33, 0
      %s36 = sadd.s32 %s35, 1
      %s37 = scalar_select %p34, %s35, %s36
      %p40 = pneg %p34
      %p41 = scmp.eq.s32.totalorder %s13, 1
      %p42 = por %p40, %p41
      %p43 = scmp.ne.s32.totalorder %s35, %s38
      %p44 = scmp.eq.s32.totalorder %s13, 0
      %p45 = por %p43, %p44
      %p46 = scmp.ne.s32.totalorder %s35, %s38
      %p47 = scmp.eq.s32.totalorder %s18, 1
      %p48 = por %p46, %p47
      %p49 = scmp.ne.s32.totalorder %s38, %s39
      %p50 = scmp.eq.s32.totalorder %s18, 0
      %p51 = por %p49, %p50
      %p52 = scmp.ne.s32.totalorder %s38, %s39
      %p53 = scmp.eq.s32.totalorder %s19, 1
      %p54 = por %p52, %p53
      %p56 = scmp.ne.s32.totalorder %s39, %s55
      %p57 = scmp.eq.s32.totalorder %s19, 0
      %p58 = por %p56, %p57
      %s59 = ssub.s32 %s20, %s32
      %s60 = ssub.s32 %s21, %s28
      %s61 = sor.u32 %s59, %s60
      %p62 = scmp.eq.s32.totalorder %s61, 0
      %s64 = sadd.s32 %s63, 1
      %s65 = scalar_select %p62, %s63, %s64
      %p68 = pneg %p62
      %p69 = scmp.eq.s32.totalorder %s13, 1
      %p70 = por %p68, %p69
      %p71 = scmp.ne.s32.totalorder %s63, %s66
      %p72 = scmp.eq.s32.totalorder %s13, 0
      %p73 = por %p71, %p72
      %p74 = scmp.ne.s32.totalorder %s63, %s66
      %p75 = scmp.eq.s32.totalorder %s18, 1
      %p76 = por %p74, %p75
      %p77 = scmp.ne.s32.totalorder %s66, %s67
      %p78 = scmp.eq.s32.totalorder %s18, 0
      %p79 = por %p77, %p78
      %p80 = scmp.ne.s32.totalorder %s66, %s67
      %p81 = scmp.eq.s32.totalorder %s19, 1
      %p82 = por %p80, %p81
      %p84 = scmp.ne.s32.totalorder %s67, %s83
      %p85 = scmp.eq.s32.totalorder %s19, 0
      %p86 = por %p84, %p85
      %s88 = sadd.s32 %s87, 1
      %p91 = scmp.eq.s32.totalorder %s13, 1
      %p92 = scmp.ne.s32.totalorder %s87, %s89
      %p93 = scmp.eq.s32.totalorder %s13, 0
      %p94 = por %p92, %p93
      %p95 = scmp.ne.s32.totalorder %s87, %s89
      %p96 = scmp.eq.s32.totalorder %s18, 1
      %p97 = por %p95, %p96
      %p98 = scmp.ne.s32.totalorder %s89, %s90
      %p99 = scmp.eq.s32.totalorder %s18, 0
      %p100 = por %p98, %p99
      %p101 = scmp.ne.s32.totalorder %s89, %s90
      %p102 = scmp.eq.s32.totalorder %s19, 1
      %p103 = por %p101, %p102
      %p105 = scmp.ne.s32.totalorder %s90, %s104
      %p106 = scmp.eq.s32.totalorder %s19, 0
      %p107 = por %p105, %p106
      %s109 = sadd.s32 %s108, 1
      %p112 = scmp.eq.s32.totalorder %s13, 1
      %p113 = scmp.ne.s32.totalorder %s108, %s110
      %p114 = scmp.eq.s32.totalorder %s13, 0
      %p115 = por %p113, %p114
      %p116 = scmp.ne.s32.totalorder %s108, %s110
      %p117 = scmp.eq.s32.totalorder %s18, 1
      %p118 = por %p116, %p117
      %p119 = scmp.ne.s32.totalorder %s110, %s111
      %p120 = scmp.eq.s32.totalorder %s18, 0
      %p121 = por %p119, %p120
      %p122 = scmp.ne.s32.totalorder %s110, %s111
      %p123 = scmp.eq.s32.totalorder %s19, 1
      %p124 = por %p122, %p123
      %p126 = scmp.ne.s32.totalorder %s111, %s125
      %p127 = scmp.eq.s32.totalorder %s19, 0
      %p128 = por %p126, %p127
      %s129 = ssub.s32 %s20, %s32
      %s130 = ssub.s32 %s21, %s28
      %s131 = sor.u32 %s129, %s130
      %p132 = scmp.eq.s32.totalorder %s131, 0
      %s134 = sadd.s32 %s133, 1
      %s135 = scalar_select %p132, %s133, %s134
      %p138 = pneg %p132
      %p139 = scmp.eq.s32.totalorder %s13, 1
      %p140 = por %p138, %p139
      %p141 = scmp.ne.s32.totalorder %s133, %s136
      %p142 = scmp.eq.s32.totalorder %s13, 0
      %p143 = por %p141, %p142
      %p144 = scmp.ne.s32.totalorder %s133, %s136
      %p145 = scmp.eq.s32.totalorder %s18, 1
      %p146 = por %p144, %p145
      %p147 = scmp.ne.s32.totalorder %s136, %s137
      %p148 = scmp.eq.s32.totalorder %s18, 0
      %p149 = por %p147, %p148
      %p150 = scmp.ne.s32.totalorder %s136, %s137
      %p151 = scmp.eq.s32.totalorder %s19, 1
      %p152 = por %p150, %p151
      %p154 = scmp.ne.s32.totalorder %s137, %s153
      %p155 = scmp.eq.s32.totalorder %s19, 0
      %p156 = por %p154, %p155
      %p157 = scmp.le.s32.totalorder 1, %s13
      %p158 = scmp.lt.s32.totalorder %s13, 3
      %p159 = pnand %p157, %p158
      %p160 = pneg %p159
      // Predicated region
      $region9: #{tpu_custom_call.1} parent=5 // pred_check
        _
      $region10: #{tpu_custom_call.1} parent=5 // pred_check_branch
        %162 = sbr.rel (%p159) target = $region12
      $region11: #{tpu_custom_call.1} parent=5 // pred_region
        %s163 = ssub.s32 %s13, 1
        // Predicated region
        $region13: #{tpu_custom_call.1} parent=11 // pred_check
          %p164 = pneg %p100
        $region14: #{tpu_custom_call.1} parent=11 // pred_check_branch
          %166 = sbr.rel (%p164) target = $region16
        $region15: #{tpu_custom_call.1} parent=11 // pred_region
          _
        $region16: #{tpu_custom_call.1} parent=11 // pred_fallthru
          _
        // Predicated region
        $region17: #{tpu_custom_call.1} parent=11 // pred_check
          %p167 = pneg %p121
        $region18: #{tpu_custom_call.1} parent=11 // pred_check_branch
          %169 = sbr.rel (%p167) target = $region20
        $region19: #{tpu_custom_call.1} parent=11 // pred_region
          _
        $region20: #{tpu_custom_call.1} parent=11 // pred_fallthru
          _
      $region12: #{tpu_custom_call.1} parent=5 // pred_fallthru
        _
      %p170 = scmp.lt.s32.totalorder %s13, 2
      // Predicated region
      $region21: #{tpu_custom_call.1} parent=5 // pred_check
        %p171 = pneg %p170
      $region22: #{tpu_custom_call.1} parent=5 // pred_check_branch
        %173 = sbr.rel (%p171) target = $region24
      $region23: #{tpu_custom_call.1} parent=5 // pred_region
        // Predicated region
        $region25: #{tpu_custom_call.1} parent=23 // pred_check
          %p174 = pneg %p45
        $region26: #{tpu_custom_call.1} parent=23 // pred_check_branch
          %176 = sbr.rel (%p174) target = $region28
        $region27: #{tpu_custom_call.1} parent=23 // pred_region
          %p177 = scmp.lt.s32.totalorder %s20, 1
          %s178 = scalar_select %p177, %s20, 1
          %s179 = smul.addr %s178, 2
          %s180 = smul.addr %s179, 8
          %s181 = scalar_lea.vmem %s0, %s180
        $region28: #{tpu_custom_call.1} parent=23 // pred_fallthru
          _
        // Predicated region
        $region29: #{tpu_custom_call.1} parent=23 // pred_check
          %p182 = pneg %p73
        $region30: #{tpu_custom_call.1} parent=23 // pred_check_branch
          %184 = sbr.rel (%p182) target = $region32
        $region31: #{tpu_custom_call.1} parent=23 // pred_region
          %s185 = smul.u32 2, %s21
          %p186 = scmp.lt.s32.totalorder %s20, 1
          %s187 = scalar_select %p186, %s20, 1
          %p188 = scmp.lt.s32.totalorder %s185, 1
          %s189 = scalar_select %p188, %s185, 1
          %s190 = smul.addr %s187, 2
          %s191 = sadd.s32 %s189, %s190
          %s192 = smul.addr %s191, 8
          %s193 = scalar_lea.vmem %s1, %s192
          %s194 = smul.u32 2, %s21
        $region32: #{tpu_custom_call.1} parent=23 // pred_fallthru
          _
      $region24: #{tpu_custom_call.1} parent=5 // pred_fallthru
        _
      %p195 = scmp.le.s32.totalorder 1, %s13
      %p196 = scmp.lt.s32.totalorder %s13, 3
      %p197 = pnand %p195, %p196
      %p198 = pneg %p197
      // Predicated region
      $region33: #{tpu_custom_call.1} parent=5 // pred_check
        _
      $region34: #{tpu_custom_call.1} parent=5 // pred_check_branch
        %200 = sbr.rel (%p197) target = $region36
      $region35: #{tpu_custom_call.1} parent=5 // pred_region
        %s201 = ssub.s32 %s13, 1
        %p202 = scmp.lt.s32.totalorder %s22, 1
        %s203 = scalar_select %p202, %s22, 1
        %s204 = smul.addr %s203, 2
        %s205 = smul.addr %s204, 8
        %s206 = scalar_lea.vmem %s0, %s205
        %p207 = pneg %p51
        %p208 = pneg %p48
        %s209 = smul.u32 2, %s23
        %p210 = scmp.lt.s32.totalorder %s22, 1
        %s211 = scalar_select %p210, %s22, 1
        %p212 = scmp.lt.s32.totalorder %s209, 1
        %s213 = scalar_select %p212, %s209, 1
        %s214 = smul.addr %s211, 2
        %s215 = sadd.s32 %s213, %s214
        %s216 = smul.addr %s215, 8
        %s217 = scalar_lea.vmem %s1, %s216
        %p218 = pneg %p79
        %p219 = pneg %p76
        %p220 = pneg %p100
        %p221 = pneg %p97
        %p222 = pneg %p121
        %p223 = pneg %p118
        %p224 = pneg %p149
        %p225 = pneg %p146
        %s226 = sand.u32 %s136, 1
        %s227 = scalar_lea.sflag [#allocation3], %s226
        %s228 = sand.u32 %s136, 1
        %s229 = smul.addr %s228, 8
        %s230 = scalar_lea.vmem [#allocation2], %s229
        %p231 = scmp.lt.s32.totalorder %s22, 1
        %s232 = scalar_select %p231, %s22, 1
        %s233 = smul.addr %s232, 2
        %s234 = smul.addr %s233, 8
        %s235 = scalar_lea.vmem %s0, %s234
        %s236 = smul.u32 2, %s23
        %p237 = scmp.lt.s32.totalorder %s22, 1
        %s238 = scalar_select %p237, %s22, 1
        %p239 = scmp.lt.s32.totalorder %s236, 1
        %s240 = scalar_select %p239, %s236, 1
        %s241 = smul.addr %s238, 2
        %s242 = sadd.s32 %s240, %s241
        %s243 = smul.addr %s242, 8
        %s244 = scalar_lea.vmem %s1, %s243
        %s245 = smul.u32 2, %s23
        %s246 = smul.u32 2, %s23
        %v247 = vld [vmem:[%s235] sm:$0x1f]
        %v248 = vld [vmem:[%s235 + $0x8] sm:$0x1f]
        %v249 = vld [vmem:[%s244] sm:$0x1f]
        %v250 = vld [vmem:[%s244 + $0x8] sm:$0x1f]
        %v251 = vld [vmem:[%s2] sm:$0xff]
        %v252 = vld [vmem:[%s2 + $0x8] sm:$0xff]
        %v253 = vld [vmem:[%s2 + $0x10] sm:$0xff]
        %v254 = vld [vmem:[%s2 + $0x18] sm:$0xff]
        %v255 = vld [vmem:[%s2 + $0x20] sm:$0xff]
        %v256 = vld [vmem:[%s2 + $0x28] sm:$0xff]
        %vm257 = vcmask 39936
        %v259 = vsel %vm257, %v251, 0
        %v262 = vsel %vm257, %v252, 0
        %vm264 = vcmask 1044480
        %v266 = vsel %vm264, %v249, 0
        %v269 = vsel %vm264, %v250, 0
        %271 = vmatprep.subr.mxu0 %v269
        %272 = vmatpush1.msra.mxu0 %v266
        %273 = vmatprep.subr.mxu0 0.0
        %274 = vmatpush1.msra.mxu0 0.0
        %275 = vmatprep.subr.mxu0 0.0
        %276 = vmatpush1.msra.mxu0 0.0
        %277 = vmatprep.subr.mxu0 0.0
        %278 = vmatpush1.msra.mxu0 0.0
        %279 = vmatprep.subr.mxu0 0.0
        %280 = vmatpush1.msra.mxu0 0.0
        %281 = vmatprep.subr.mxu0 0.0
        %282 = vmatpush1.msra.mxu0 0.0
        %283 = vmatprep.subr.mxu0 0.0
        %284 = vmatpush1.msra.mxu0 0.0
        %285 = vmatprep.subr.mxu0 0.0
        %286 = vmatpush1.msra.mxu0 0.0
        %287 = vmatprep.subr.mxu0 0.0
        %288 = vmatpush1.msra.mxu0 0.0
        %289 = vmatprep.subr.mxu0 0.0
        %290 = vmatpush1.msra.mxu0 0.0
        %291 = vmatprep.subr.mxu0 0.0
        %292 = vmatpush1.msra.mxu0 0.0
        %293 = vmatprep.subr.mxu0 0.0
        %294 = vmatpush1.msra.mxu0 0.0
        %295 = vmatprep.subr.mxu0 0.0
        %296 = vmatpush1.msra.mxu0 0.0
        %297 = vmatprep.subr.mxu0 0.0
        %298 = vmatpush1.msra.mxu0 0.0
        %299 = vmatprep.subr.mxu0 0.0
        %300 = vmatpush1.msra.mxu0 0.0
        %301 = vmatprep.subr.mxu0 0.0
        %302 = vmatpush1.msra.mxu0 0.0
        %303 = vmatprep.subr.mxu0 0.0
        %304 = vmatpush1.msra.mxu0 0.0
        %305 = vmatprep.subr.mxu0 0.0
        %306 = vmatpush1.msra.mxu0 0.0
        %307 = vmatprep.subr.mxu0 0.0
        %308 = vmatpush1.msra.mxu0 0.0
        %309 = vmatprep.subr.mxu0 0.0
        %310 = vmatpush1.msra.mxu0 0.0
        %311 = vmatprep.subr.mxu0 0.0
        %312 = vmatpush1.msra.mxu0 0.0
        %313 = vmatprep.subr.mxu0 0.0
        %314 = vmatpush1.msra.mxu0 0.0
        %315 = vmatprep.subr.mxu0 0.0
        %316 = vmatpush1.msra.mxu0 0.0
        %317 = vmatprep.subr.mxu0 0.0
        %318 = vmatpush1.msra.mxu0 0.0
        %319 = vmatprep.subr.mxu0 0.0
        %320 = vmatpush1.msra.mxu0 0.0
        %321 = vmatprep.subr.mxu0 0.0
        %322 = vmatpush1.msra.mxu0 0.0
        %323 = vmatprep.subr.mxu0 0.0
        %324 = vmatpush1.msra.mxu0 0.0
        %325 = vmatprep.subr.mxu0 0.0
        %326 = vmatpush1.msra.mxu0 0.0
        %327 = vmatprep.subr.mxu0 0.0
        %328 = vmatpush1.msra.mxu0 0.0
        %329 = vmatprep.subr.mxu0 0.0
        %330 = vmatpush1.msra.mxu0 0.0
        %331 = vmatprep.subr.mxu0 0.0
        %332 = vmatpush1.msra.mxu0 0.0
        %333 = vmatprep.subr.mxu0 0.0
        %334 = vmatpush1.msra.mxu0 0.0
        %335 = vmatprep.mubr.f32.mxu0 0.0
        %336 = vmatmul.mubr.f32.gmra.mrb[0].mxu0 %v259
        %v337 = vpop.f32.mrb[0].mxu0
        %v338 = vadd.f32 0.0, %v337
        %v339 = vpop.f32.mrb[0].mxu0
        %v340 = vadd.f32 0.0, %v339
        %341 = vmatprep.mubr.f32.mxu0 0.0
        %342 = vmatmul.mubr.f32.gmra.mrb[0].mxu0 %v262
        %v343 = vpop.f32.mrb[0].mxu0
        %v344 = vadd.f32 0.0, %v343
        %v345 = vpop.f32.mrb[0].mxu0
        %v346 = vadd.f32 0.0, %v345
        %347 = vdwg.mxu0
        %v349 = vsel %vm257, %v253, 0
        %v352 = vsel %vm257, %v254, 0
        %v355 = vsel %vm257, %v255, 0
        %v358 = vsel %vm257, %v256, 0
        %v361 = vsel %vm264, %v247, 0
        %v364 = vsel %vm264, %v248, 0
        %366 = vmatprep.subr.mxu0 %v364
        %367 = vmatpush1.msra.mxu0 %v361
        %368 = vmatprep.subr.mxu0 0.0
        %369 = vmatpush1.msra.mxu0 0.0
        %370 = vmatprep.subr.mxu0 0.0
        %371 = vmatpush1.msra.mxu0 0.0
        %372 = vmatprep.subr.mxu0 0.0
        %373 = vmatpush1.msra.mxu0 0.0
        %374 = vmatprep.subr.mxu0 0.0
        %375 = vmatpush1.msra.mxu0 0.0
        %376 = vmatprep.subr.mxu0 0.0
        %377 = vmatpush1.msra.mxu0 0.0
        %378 = vmatprep.subr.mxu0 0.0
        %379 = vmatpush1.msra.mxu0 0.0
        %380 = vmatprep.subr.mxu0 0.0
        %381 = vmatpush1.msra.mxu0 0.0
        %382 = vmatprep.subr.mxu0 0.0
        %383 = vmatpush1.msra.mxu0 0.0
        %384 = vmatprep.subr.mxu0 0.0
        %385 = vmatpush1.msra.mxu0 0.0
        %386 = vmatprep.subr.mxu0 0.0
        %387 = vmatpush1.msra.mxu0 0.0
        %388 = vmatprep.subr.mxu0 0.0
        %389 = vmatpush1.msra.mxu0 0.0
        %390 = vmatprep.subr.mxu0 0.0
        %391 = vmatpush1.msra.mxu0 0.0
        %392 = vmatprep.subr.mxu0 0.0
        %393 = vmatpush1.msra.mxu0 0.0
        %394 = vmatprep.subr.mxu0 0.0
        %395 = vmatpush1.msra.mxu0 0.0
        %396 = vmatprep.subr.mxu0 0.0
        %397 = vmatpush1.msra.mxu0 0.0
        %398 = vmatprep.subr.mxu0 0.0
        %399 = vmatpush1.msra.mxu0 0.0
        %400 = vmatprep.subr.mxu0 0.0
        %401 = vmatpush1.msra.mxu0 0.0
        %402 = vmatprep.subr.mxu0 0.0
        %403 = vmatpush1.msra.mxu0 0.0
        %404 = vmatprep.subr.mxu0 0.0
        %405 = vmatpush1.msra.mxu0 0.0
        %406 = vmatprep.subr.mxu0 0.0
        %407 = vmatpush1.msra.mxu0 0.0
        %408 = vmatprep.subr.mxu0 0.0
        %409 = vmatpush1.msra.mxu0 0.0
        %410 = vmatprep.subr.mxu0 0.0
        %411 = vmatpush1.msra.mxu0 0.0
        %412 = vmatprep.subr.mxu0 0.0
        %413 = vmatpush1.msra.mxu0 0.0
        %414 = vmatprep.subr.mxu0 0.0
        %415 = vmatpush1.msra.mxu0 0.0
        %416 = vmatprep.subr.mxu0 0.0
        %417 = vmatpush1.msra.mxu0 0.0
        %418 = vmatprep.subr.mxu0 0.0
        %419 = vmatpush1.msra.mxu0 0.0
        %420 = vmatprep.subr.mxu0 0.0
        %421 = vmatpush1.msra.mxu0 0.0
        %422 = vmatprep.subr.mxu0 0.0
        %423 = vmatpush1.msra.mxu0 0.0
        %424 = vmatprep.subr.mxu0 0.0
        %425 = vmatpush1.msra.mxu0 0.0
        %426 = vmatprep.subr.mxu0 0.0
        %427 = vmatpush1.msra.mxu0 0.0
        %428 = vmatprep.subr.mxu0 0.0
        %429 = vmatpush1.msra.mxu0 0.0
        %430 = vmatprep.mubr.f32.mxu0 0.0
        %431 = vmatmul.mubr.f32.gmra.mrb[0].mxu0 %v349
        %v432 = vpop.f32.mrb[0].mxu0
        %v433 = vadd.f32 0.0, %v432
        %v434 = vpop.f32.mrb[0].mxu0
        %v435 = vadd.f32 0.0, %v434
        %436 = vmatprep.mubr.f32.mxu0 0.0
        %437 = vmatmul.mubr.f32.gmra.mrb[0].mxu0 %v352
        %v438 = vpop.f32.mrb[0].mxu0
        %v439 = vadd.f32 0.0, %v438
        %v440 = vpop.f32.mrb[0].mxu0
        %v441 = vadd.f32 0.0, %v440
        %442 = vmatprep.mubr.f32.mxu0 0.0
        %443 = vmatmul.mubr.f32.gmra.mrb[0].mxu0 %v355
        %v444 = vpop.f32.mrb[0].mxu0
        %v445 = vadd.f32 0.0, %v444
        %v446 = vpop.f32.mrb[0].mxu0
        %v447 = vadd.f32 0.0, %v446
        %448 = vmatprep.mubr.f32.mxu0 0.0
        %449 = vmatmul.mubr.f32.gmra.mrb[0].mxu0 %v358
        %v450 = vpop.f32.mrb[0].mxu0
        %v451 = vadd.f32 0.0, %v450
        %v452 = vpop.f32.mrb[0].mxu0
        %v453 = vadd.f32 0.0, %v452
        %454 = vdwg.mxu0
        %455 = vxpose.xlu0.b32.start [1/16] %v433, 128
        %456 = vxpose.xlu0.b32.cont [2/16] 0.0, 128
        %457 = vxpose.xlu0.b32.cont [3/16] 0.0, 128
        %458 = vxpose.xlu0.b32.cont [4/16] 0.0, 128
        %459 = vxpose.xlu0.b32.cont [5/16] 0.0, 128
        %460 = vxpose.xlu0.b32.cont [6/16] 0.0, 128
        %461 = vxpose.xlu0.b32.cont [7/16] 0.0, 128
        %462 = vxpose.xlu0.b32.cont [8/16] 0.0, 128
        %463 = vxpose.xlu0.b32.cont [9/16] 0.0, 128
        %464 = vxpose.xlu0.b32.cont [10/16] 0.0, 128
        %465 = vxpose.xlu0.b32.cont [11/16] 0.0, 128
        %466 = vxpose.xlu0.b32.cont [12/16] 0.0, 128
        %467 = vxpose.xlu0.b32.cont [13/16] 0.0, 128
        %468 = vxpose.xlu0.b32.cont [14/16] 0.0, 128
        %469 = vxpose.xlu0.b32.cont [15/16] 0.0, 128
        %470 = vxpose.xlu0.b32.end [16/16] 0.0, 128
        %v471 = vpop.trf.xlu0
        %v472 = vpop.trf.xlu0
        %v473 = vpop.trf.xlu0
        %v474 = vpop.trf.xlu0
        %v475 = vpop.trf.xlu0
        %v476 = vpop.trf.xlu0
        %v477 = vpop.trf.xlu0
        %v478 = vpop.trf.xlu0
        %v479 = vpop.trf.xlu0
        %v480 = vpop.trf.xlu0
        %v481 = vpop.trf.xlu0
        %v482 = vpop.trf.xlu0
        %v483 = vpop.trf.xlu0
        %v484 = vpop.trf.xlu0
        %v485 = vpop.trf.xlu0
        %v486 = vpop.trf.xlu0
        %487 = vxpose.xlu0.b32.start [1/16] %v435, 128
        %488 = vxpose.xlu0.b32.cont [2/16] 0.0, 128
        %489 = vxpose.xlu0.b32.cont [3/16] 0.0, 128
        %490 = vxpose.xlu0.b32.cont [4/16] 0.0, 128
        %491 = vxpose.xlu0.b32.cont [5/16] 0.0, 128
        %492 = vxpose.xlu0.b32.cont [6/16] 0.0, 128
        %493 = vxpose.xlu0.b32.cont [7/16] 0.0, 128
        %494 = vxpose.xlu0.b32.cont [8/16] 0.0, 128
        %495 = vxpose.xlu0.b32.cont [9/16] 0.0, 128
        %496 = vxpose.xlu0.b32.cont [10/16] 0.0, 128
        %497 = vxpose.xlu0.b32.cont [11/16] 0.0, 128
        %498 = vxpose.xlu0.b32.cont [12/16] 0.0, 128
        %499 = vxpose.xlu0.b32.cont [13/16] 0.0, 128
        %500 = vxpose.xlu0.b32.cont [14/16] 0.0, 128
        %501 = vxpose.xlu0.b32.cont [15/16] 0.0, 128
        %502 = vxpose.xlu0.b32.end [16/16] 0.0, 128
        %v503 = vpop.trf.xlu0
        %v504 = vpop.trf.xlu0
        %v505 = vpop.trf.xlu0
        %v506 = vpop.trf.xlu0
        %v507 = vpop.trf.xlu0
        %v508 = vpop.trf.xlu0
        %v509 = vpop.trf.xlu0
        %v510 = vpop.trf.xlu0
        %v511 = vpop.trf.xlu0
        %v512 = vpop.trf.xlu0
        %v513 = vpop.trf.xlu0
        %v514 = vpop.trf.xlu0
        %v515 = vpop.trf.xlu0
        %v516 = vpop.trf.xlu0
        %v517 = vpop.trf.xlu0
        %v518 = vpop.trf.xlu0
        %vm519 = vcmask 64512
        %v521 = vsel %vm519, %v471, 0
        %v524 = vsel %vm519, %v472, 0
        %v527 = vsel %vm519, %v473, 0
        %v530 = vsel %vm519, %v474, 0
        %v533 = vsel %vm519, %v475, 0
        %v536 = vsel %vm519, %v476, 0
        %v539 = vsel %vm519, %v477, 0
        %v542 = vsel %vm519, %v478, 0
        %v545 = vsel %vm519, %v479, 0
        %v548 = vsel %vm519, %v480, 0
        %v551 = vsel %vm519, %v481, 0
        %v554 = vsel %vm519, %v482, 0
        %v557 = vsel %vm519, %v483, 0
        %v560 = vsel %vm519, %v484, 0
        %v563 = vsel %vm519, %v485, 0
        %v566 = vsel %vm519, %v486, 0
        %v569 = vsel %vm519, %v503, 0
        %v572 = vsel %vm519, %v504, 0
        %v575 = vsel %vm519, %v505, 0
        %v578 = vsel %vm519, %v506, 0
        %v581 = vsel %vm519, %v507, 0
        %v584 = vsel %vm519, %v508, 0
        %v587 = vsel %vm519, %v509, 0
        %v590 = vsel %vm519, %v510, 0
        %v593 = vsel %vm519, %v511, 0
        %v596 = vsel %vm519, %v512, 0
        %v599 = vsel %vm519, %v513, 0
        %v602 = vsel %vm519, %v514, 0
        %v605 = vsel %vm519, %v515, 0
        %v608 = vsel %vm519, %v516, 0
        %v611 = vsel %vm519, %v517, 0
        %v614 = vsel %vm519, %v518, 0
        %616 = vmatprep.subr.mxu0 %v340
        %617 = vmatpush1.msra.mxu0 %v338
        %618 = vmatprep.subr.mxu0 0.0
        %619 = vmatpush1.msra.mxu0 0.0
        %620 = vmatprep.subr.mxu0 0.0
        %621 = vmatpush1.msra.mxu0 0.0
        %622 = vmatprep.subr.mxu0 0.0
        %623 = vmatpush1.msra.mxu0 0.0
        %624 = vmatprep.subr.mxu0 0.0
        %625 = vmatpush1.msra.mxu0 0.0
        %626 = vmatprep.subr.mxu0 0.0
        %627 = vmatpush1.msra.mxu0 0.0
        %628 = vmatprep.subr.mxu0 0.0
        %629 = vmatpush1.msra.mxu0 0.0
        %630 = vmatprep.subr.mxu0 0.0
        %631 = vmatpush1.msra.mxu0 0.0
        %632 = vmatprep.subr.mxu0 0.0
        %633 = vmatpush1.msra.mxu0 0.0
        %634 = vmatprep.subr.mxu0 0.0
        %635 = vmatpush1.msra.mxu0 0.0
        %636 = vmatprep.subr.mxu0 0.0
        %637 = vmatpush1.msra.mxu0 0.0
        %638 = vmatprep.subr.mxu0 0.0
        %639 = vmatpush1.msra.mxu0 0.0
        %640 = vmatprep.subr.mxu0 0.0
        %641 = vmatpush1.msra.mxu0 0.0
        %642 = vmatprep.subr.mxu0 0.0
        %643 = vmatpush1.msra.mxu0 0.0
        %644 = vmatprep.subr.mxu0 0.0
        %645 = vmatpush1.msra.mxu0 0.0
        %646 = vmatprep.subr.mxu0 0.0
        %647 = vmatpush1.msra.mxu0 0.0
        %648 = vmatprep.subr.mxu0 0.0
        %649 = vmatpush1.msra.mxu0 0.0
        %650 = vmatprep.subr.mxu0 0.0
        %651 = vmatpush1.msra.mxu0 0.0
        %652 = vmatprep.subr.mxu0 0.0
        %653 = vmatpush1.msra.mxu0 0.0
        %654 = vmatprep.subr.mxu0 0.0
        %655 = vmatpush1.msra.mxu0 0.0
        %656 = vmatprep.subr.mxu0 0.0
        %657 = vmatpush1.msra.mxu0 0.0
        %658 = vmatprep.subr.mxu0 0.0
        %659 = vmatpush1.msra.mxu0 0.0
        %660 = vmatprep.subr.mxu0 0.0
        %661 = vmatpush1.msra.mxu0 0.0
        %662 = vmatprep.subr.mxu0 0.0
        %663 = vmatpush1.msra.mxu0 0.0
        %664 = vmatprep.subr.mxu0 0.0
        %665 = vmatpush1.msra.mxu0 0.0
        %666 = vmatprep.subr.mxu0 0.0
        %667 = vmatpush1.msra.mxu0 0.0
        %668 = vmatprep.subr.mxu0 0.0
        %669 = vmatpush1.msra.mxu0 0.0
        %670 = vmatprep.subr.mxu0 0.0
        %671 = vmatpush1.msra.mxu0 0.0
        %672 = vmatprep.subr.mxu0 0.0
        %673 = vmatpush1.msra.mxu0 0.0
        %674 = vmatprep.subr.mxu0 0.0
        %675 = vmatpush1.msra.mxu0 0.0
        %676 = vmatprep.subr.mxu0 0.0
        %677 = vmatpush1.msra.mxu0 0.0
        %678 = vmatprep.subr.mxu0 0.0
        %679 = vmatpush1.msra.mxu0 0.0
        %680 = vmatprep.mubr.f32.mxu0 0.0
        %681 = vmatmul.mubr.f32.gmra.mrb[0].mxu0 %v521
        %v682 = vpop.f32.mrb[0].mxu0
        %v683 = vadd.f32 0.0, %v682
        %v684 = vpop.f32.mrb[0].mxu0
        %v685 = vadd.f32 0.0, %v684
        %686 = vmatprep.mubr.f32.mxu0 0.0
        %687 = vmatmul.mubr.f32.gmra.mrb[0].mxu0 %v524
        %v688 = vpop.f32.mrb[0].mxu0
        %v689 = vadd.f32 0.0, %v688
        %v690 = vpop.f32.mrb[0].mxu0
        %v691 = vadd.f32 0.0, %v690
        %692 = vmatprep.mubr.f32.mxu0 0.0
        %693 = vmatmul.mubr.f32.gmra.mrb[0].mxu0 %v527
        %v694 = vpop.f32.mrb[0].mxu0
        %v695 = vadd.f32 0.0, %v694
        %v696 = vpop.f32.mrb[0].mxu0
        %v697 = vadd.f32 0.0, %v696
        %698 = vmatprep.mubr.f32.mxu0 0.0
        %699 = vmatmul.mubr.f32.gmra.mrb[0].mxu0 %v530
        %v700 = vpop.f32.mrb[0].mxu0
        %v701 = vadd.f32 0.0, %v700
        %v702 = vpop.f32.mrb[0].mxu0
        %v703 = vadd.f32 0.0, %v702
        %704 = vmatprep.mubr.f32.mxu0 0.0
        %705 = vmatmul.mubr.f32.gmra.mrb[0].mxu0 %v533
        %v706 = vpop.f32.mrb[0].mxu0
        %v707 = vadd.f32 0.0, %v706
        %v708 = vpop.f32.mrb[0].mxu0
        %v709 = vadd.f32 0.0, %v708
        %710 = vmatprep.mubr.f32.mxu0 0.0
        %711 = vmatmul.mubr.f32.gmra.mrb[0].mxu0 %v536
        %v712 = vpop.f32.mrb[0].mxu0
        %v713 = vadd.f32 0.0, %v712
        %v714 = vpop.f32.mrb[0].mxu0
        %v715 = vadd.f32 0.0, %v714
        %716 = vmatprep.mubr.f32.mxu0 0.0
        %717 = vmatmul.mubr.f32.gmra.mrb[0].mxu0 %v539
        %v718 = vpop.f32.mrb[0].mxu0
        %v719 = vadd.f32 0.0, %v718
        %v720 = vpop.f32.mrb[0].mxu0
        %v721 = vadd.f32 0.0, %v720
        %722 = vmatprep.mubr.f32.mxu0 0.0
        %723 = vmatmul.mubr.f32.gmra.mrb[0].mxu0 %v542
        %v724 = vpop.f32.mrb[0].mxu0
        %v725 = vadd.f32 0.0, %v724
        %v726 = vpop.f32.mrb[0].mxu0
        %v727 = vadd.f32 0.0, %v726
        %728 = vmatprep.mubr.f32.mxu0 0.0
        %729 = vmatmul.mubr.f32.gmra.mrb[0].mxu0 %v545
        %v730 = vpop.f32.mrb[0].mxu0
        %v731 = vadd.f32 0.0, %v730
        %v732 = vpop.f32.mrb[0].mxu0
        %v733 = vadd.f32 0.0, %v732
        %734 = vmatprep.mubr.f32.mxu0 0.0
        %735 = vmatmul.mubr.f32.gmra.mrb[0].mxu0 %v548
        %v736 = vpop.f32.mrb[0].mxu0
        %v737 = vadd.f32 0.0, %v736
        %v738 = vpop.f32.mrb[0].mxu0
        %v739 = vadd.f32 0.0, %v738
        %740 = vmatprep.mubr.f32.mxu0 0.0
        %741 = vmatmul.mubr.f32.gmra.mrb[0].mxu0 %v551
        %v742 = vpop.f32.mrb[0].mxu0
        %v743 = vadd.f32 0.0, %v742
        %v744 = vpop.f32.mrb[0].mxu0
        %v745 = vadd.f32 0.0, %v744
        %746 = vmatprep.mubr.f32.mxu0 0.0
        %747 = vmatmul.mubr.f32.gmra.mrb[0].mxu0 %v554
        %v748 = vpop.f32.mrb[0].mxu0
        %v749 = vadd.f32 0.0, %v748
        %v750 = vpop.f32.mrb[0].mxu0
        %v751 = vadd.f32 0.0, %v750
        %752 = vmatprep.mubr.f32.mxu0 0.0
        %753 = vmatmul.mubr.f32.gmra.mrb[0].mxu0 %v557
        %v754 = vpop.f32.mrb[0].mxu0
        %v755 = vadd.f32 0.0, %v754
        %v756 = vpop.f32.mrb[0].mxu0
        %v757 = vadd.f32 0.0, %v756
        %758 = vmatprep.mubr.f32.mxu0 0.0
        %759 = vmatmul.mubr.f32.gmra.mrb[0].mxu0 %v560
        %v760 = vpop.f32.mrb[0].mxu0
        %v761 = vadd.f32 0.0, %v760
        %v762 = vpop.f32.mrb[0].mxu0
        %v763 = vadd.f32 0.0, %v762
        %764 = vmatprep.mubr.f32.mxu0 0.0
        %765 = vmatmul.mubr.f32.gmra.mrb[0].mxu0 %v563
        %v766 = vpop.f32.mrb[0].mxu0
        %v767 = vadd.f32 0.0, %v766
        %v768 = vpop.f32.mrb[0].mxu0
        %v769 = vadd.f32 0.0, %v768
        %770 = vmatprep.mubr.f32.mxu0 0.0
        %771 = vmatmul.mubr.f32.gmra.mrb[0].mxu0 %v566
        %v772 = vpop.f32.mrb[0].mxu0
        %v773 = vadd.f32 0.0, %v772
        %v774 = vpop.f32.mrb[0].mxu0
        %v775 = vadd.f32 0.0, %v774
        %776 = vmatprep.mubr.f32.mxu0 0.0
        %777 = vmatmul.mubr.f32.gmra.mrb[0].mxu0 %v569
        %v778 = vpop.f32.mrb[0].mxu0
        %v779 = vadd.f32 0.0, %v778
        %v780 = vpop.f32.mrb[0].mxu0
        %v781 = vadd.f32 0.0, %v780
        %782 = vmatprep.mubr.f32.mxu0 0.0
        %783 = vmatmul.mubr.f32.gmra.mrb[0].mxu0 %v572
        %v784 = vpop.f32.mrb[0].mxu0
        %v785 = vadd.f32 0.0, %v784
        %v786 = vpop.f32.mrb[0].mxu0
        %v787 = vadd.f32 0.0, %v786
        %788 = vmatprep.mubr.f32.mxu0 0.0
        %789 = vmatmul.mubr.f32.gmra.mrb[0].mxu0 %v575
        %v790 = vpop.f32.mrb[0].mxu0
        %v791 = vadd.f32 0.0, %v790
        %v792 = vpop.f32.mrb[0].mxu0
        %v793 = vadd.f32 0.0, %v792
        %794 = vmatprep.mubr.f32.mxu0 0.0
        %795 = vmatmul.mubr.f32.gmra.mrb[0].mxu0 %v578
        %v796 = vpop.f32.mrb[0].mxu0
        %v797 = vadd.f32 0.0, %v796
        %v798 = vpop.f32.mrb[0].mxu0
        %v799 = vadd.f32 0.0, %v798
        %800 = vmatprep.mubr.f32.mxu0 0.0
        %801 = vmatmul.mubr.f32.gmra.mrb[0].mxu0 %v581
        %v802 = vpop.f32.mrb[0].mxu0
        %v803 = vadd.f32 0.0, %v802
        %v804 = vpop.f32.mrb[0].mxu0
        %v805 = vadd.f32 0.0, %v804
        %806 = vmatprep.mubr.f32.mxu0 0.0
        %807 = vmatmul.mubr.f32.gmra.mrb[0].mxu0 %v584
        %v808 = vpop.f32.mrb[0].mxu0
        %v809 = vadd.f32 0.0, %v808
        %v810 = vpop.f32.mrb[0].mxu0
        %v811 = vadd.f32 0.0, %v810
        %812 = vmatprep.mubr.f32.mxu0 0.0
        %813 = vmatmul.mubr.f32.gmra.mrb[0].mxu0 %v587
        %v814 = vpop.f32.mrb[0].mxu0
        %v815 = vadd.f32 0.0, %v814
        %v816 = vpop.f32.mrb[0].mxu0
        %v817 = vadd.f32 0.0, %v816
        %818 = vmatprep.mubr.f32.mxu0 0.0
        %819 = vmatmul.mubr.f32.gmra.mrb[0].mxu0 %v590
        %v820 = vpop.f32.mrb[0].mxu0
        %v821 = vadd.f32 0.0, %v820
        %v822 = vpop.f32.mrb[0].mxu0
        %v823 = vadd.f32 0.0, %v822
        %824 = vmatprep.mubr.f32.mxu0 0.0
        %825 = vmatmul.mubr.f32.gmra.mrb[0].mxu0 %v593
        %v826 = vpop.f32.mrb[0].mxu0
        %v827 = vadd.f32 0.0, %v826
        %v828 = vpop.f32.mrb[0].mxu0
        %v829 = vadd.f32 0.0, %v828
        %830 = vmatprep.mubr.f32.mxu0 0.0
        %831 = vmatmul.mubr.f32.gmra.mrb[0].mxu0 %v596
        %v832 = vpop.f32.mrb[0].mxu0
        %v833 = vadd.f32 0.0, %v832
        %v834 = vpop.f32.mrb[0].mxu0
        %v835 = vadd.f32 0.0, %v834
        %836 = vmatprep.mubr.f32.mxu0 0.0
        %837 = vmatmul.mubr.f32.gmra.mrb[0].mxu0 %v599
        %v838 = vpop.f32.mrb[0].mxu0
        %v839 = vadd.f32 0.0, %v838
        %v840 = vpop.f32.mrb[0].mxu0
        %v841 = vadd.f32 0.0, %v840
        %842 = vmatprep.mubr.f32.mxu0 0.0
        %843 = vmatmul.mubr.f32.gmra.mrb[0].mxu0 %v602
        %v844 = vpop.f32.mrb[0].mxu0
        %v845 = vadd.f32 0.0, %v844
        %v846 = vpop.f32.mrb[0].mxu0
        %v847 = vadd.f32 0.0, %v846
        %848 = vmatprep.mubr.f32.mxu0 0.0
        %849 = vmatmul.mubr.f32.gmra.mrb[0].mxu0 %v605
        %v850 = vpop.f32.mrb[0].mxu0
        %v851 = vadd.f32 0.0, %v850
        %v852 = vpop.f32.mrb[0].mxu0
        %v853 = vadd.f32 0.0, %v852
        %854 = vmatprep.mubr.f32.mxu0 0.0
        %855 = vmatmul.mubr.f32.gmra.mrb[0].mxu0 %v608
        %v856 = vpop.f32.mrb[0].mxu0
        %v857 = vadd.f32 0.0, %v856
        %v858 = vpop.f32.mrb[0].mxu0
        %v859 = vadd.f32 0.0, %v858
        %860 = vmatprep.mubr.f32.mxu0 0.0
        %861 = vmatmul.mubr.f32.gmra.mrb[0].mxu0 %v611
        %v862 = vpop.f32.mrb[0].mxu0
        %v863 = vadd.f32 0.0, %v862
        %v864 = vpop.f32.mrb[0].mxu0
        %v865 = vadd.f32 0.0, %v864
        %866 = vmatprep.mubr.f32.mxu0 0.0
        %867 = vmatmul.mubr.f32.gmra.mrb[0].mxu0 %v614
        %v868 = vpop.f32.mrb[0].mxu0
        %v869 = vadd.f32 0.0, %v868
        %v870 = vpop.f32.mrb[0].mxu0
        %v871 = vadd.f32 0.0, %v870
        %872 = vdwg.mxu0
        %v873 = vmax.f32 %v683, %v695
        %v874 = vmax.f32 %v689, %v701
        %v875 = vmax.f32 %v873, %v707
        %v876 = vmax.f32 %v874, %v713
        %v877 = vmax.f32 %v875, %v719
        %v878 = vmax.f32 %v876, %v725
        %v879 = vmax.f32 %v877, %v731
        %v880 = vmax.f32 %v878, %v737
        %v881 = vmax.f32 %v879, %v743
        %v882 = vmax.f32 %v880, %v749
        %v883 = vmax.f32 %v881, %v755
        %v884 = vmax.f32 %v882, %v761
        %v885 = vmax.f32 %v883, %v767
        %v886 = vmax.f32 %v884, %v773
        %v887 = vmax.f32 %v885, %v779
        %v888 = vmax.f32 %v886, %v785
        %v889 = vmax.f32 %v887, %v791
        %v890 = vmax.f32 %v888, %v797
        %v891 = vmax.f32 %v889, %v803
        %v892 = vmax.f32 %v890, %v809
        %v893 = vmax.f32 %v891, %v815
        %v894 = vmax.f32 %v892, %v821
        %v895 = vmax.f32 %v893, %v827
        %v896 = vmax.f32 %v894, %v833
        %v897 = vmax.f32 %v895, %v839
        %v898 = vmax.f32 %v896, %v845
        %v899 = vmax.f32 %v897, %v851
        %v900 = vmax.f32 %v898, %v857
        %v901 = vmax.f32 %v899, %v863
        %v902 = vmax.f32 %v900, %v869
        %v903 = vmax.f32 %v901, %v902
        %v904 = vrot.slane %v903, 4
        %v905 = vmax.f32 %v903, %v904
        %v906 = vrot.slane %v905, 2
        %v907 = vmax.f32 %v905, %v906
        %v908 = vrot.slane %v907, 1
        %v909 = vmax.f32 %v907, %v908
        %v910 = vmax.f32 %v685, %v697
        %v911 = vmax.f32 %v691, %v703
        %v912 = vmax.f32 %v910, %v709
        %v913 = vmax.f32 %v911, %v715
        %v914 = vmax.f32 %v912, %v721
        %v915 = vmax.f32 %v913, %v727
        %v916 = vmax.f32 %v914, %v733
        %v917 = vmax.f32 %v915, %v739
        %v918 = vmax.f32 %v916, %v745
        %v919 = vmax.f32 %v917, %v751
        %v920 = vmax.f32 %v918, %v757
        %v921 = vmax.f32 %v919, %v763
        %v922 = vmax.f32 %v920, %v769
        %v923 = vmax.f32 %v921, %v775
        %v924 = vmax.f32 %v922, %v781
        %v925 = vmax.f32 %v923, %v787
        %v926 = vmax.f32 %v924, %v793
        %v927 = vmax.f32 %v925, %v799
        %v928 = vmax.f32 %v926, %v805
        %v929 = vmax.f32 %v927, %v811
        %v930 = vmax.f32 %v928, %v817
        %v931 = vmax.f32 %v929, %v823
        %v932 = vmax.f32 %v930, %v829
        %v933 = vmax.f32 %v931, %v835
        %v934 = vmax.f32 %v932, %v841
        %v935 = vmax.f32 %v933, %v847
        %v936 = vmax.f32 %v934, %v853
        %v937 = vmax.f32 %v935, %v859
        %v938 = vmax.f32 %v936, %v865
        %v939 = vmax.f32 %v937, %v871
        %v940 = vmax.f32 %v938, %v939
        %v941 = vrot.slane %v940, 4
        %v942 = vmax.f32 %v940, %v941
        %v943 = vrot.slane %v942, 2
        %v944 = vmax.f32 %v942, %v943
        %v945 = vrot.slane %v944, 1
        %v946 = vmax.f32 %v944, %v945
        %v947 = vsub.f32 %v683, %v909
        %v948 = vsub.f32 %v685, %v946
        %v949 = vsub.f32 %v689, %v909
        %v950 = vsub.f32 %v691, %v946
        %v951 = vsub.f32 %v695, %v909
        %v952 = vsub.f32 %v697, %v946
        %v953 = vsub.f32 %v701, %v909
        %v954 = vsub.f32 %v703, %v946
        %v955 = vsub.f32 %v707, %v909
        %v956 = vsub.f32 %v709, %v946
        %v957 = vsub.f32 %v713, %v909
        %v958 = vsub.f32 %v715, %v946
        %v959 = vsub.f32 %v719, %v909
        %v960 = vsub.f32 %v721, %v946
        %v961 = vsub.f32 %v725, %v909
        %v962 = vsub.f32 %v727, %v946
        %v963 = vsub.f32 %v731, %v909
        %v964 = vsub.f32 %v733, %v946
        %v965 = vsub.f32 %v737, %v909
        %v966 = vsub.f32 %v739, %v946
        %v967 = vsub.f32 %v743, %v909
        %v968 = vsub.f32 %v745, %v946
        %v969 = vsub.f32 %v749, %v909
        %v970 = vsub.f32 %v751, %v946
        %v971 = vsub.f32 %v755, %v909
        %v972 = vsub.f32 %v757, %v946
        %v973 = vsub.f32 %v761, %v909
        %v974 = vsub.f32 %v763, %v946
        %v975 = vsub.f32 %v767, %v909
        %v976 = vsub.f32 %v769, %v946
        %v977 = vsub.f32 %v773, %v909
        %v978 = vsub.f32 %v775, %v946
        %v979 = vsub.f32 %v779, %v909
        %v980 = vsub.f32 %v781, %v946
        %v981 = vsub.f32 %v785, %v909
        %v982 = vsub.f32 %v787, %v946
        %v983 = vsub.f32 %v791, %v909
        %v984 = vsub.f32 %v793, %v946
        %v985 = vsub.f32 %v797, %v909
        %v986 = vsub.f32 %v799, %v946
        %v987 = vsub.f32 %v803, %v909
        %v988 = vsub.f32 %v805, %v946
        %v989 = vsub.f32 %v809, %v909
        %v990 = vsub.f32 %v811, %v946
        %v991 = vsub.f32 %v815, %v909
        %v992 = vsub.f32 %v817, %v946
        %v993 = vsub.f32 %v821, %v909
        %v994 = vsub.f32 %v823, %v946
        %v995 = vsub.f32 %v827, %v909
        %v996 = vsub.f32 %v829, %v946
        %v997 = vsub.f32 %v833, %v909
        %v998 = vsub.f32 %v835, %v946
        %v999 = vsub.f32 %v839, %v909
        %v1000 = vsub.f32 %v841, %v946
        %v1001 = vsub.f32 %v845, %v909
        %v1002 = vsub.f32 %v847, %v946
        %v1003 = vsub.f32 %v851, %v909
        %v1004 = vsub.f32 %v853, %v946
        %v1005 = vsub.f32 %v857, %v909
        %v1006 = vsub.f32 %v859, %v946
        %v1007 = vsub.f32 %v863, %v909
        %v1008 = vsub.f32 %v865, %v946
        %v1009 = vsub.f32 %v869, %v909
        %v1010 = vsub.f32 %v871, %v946
        %v1011 = vmul.f32 %v947, 1.442695
        %v1012 = vpow.pop %v1011
        %v1013 = vmul.f32 %v948, 1.442695
        %v1014 = vpow.pop %v1013
        %v1015 = vmul.f32 %v949, 1.442695
        %v1016 = vpow.pop %v1015
        %v1017 = vmul.f32 %v950, 1.442695
        %v1018 = vpow.pop %v1017
        %v1019 = vmul.f32 %v951, 1.442695
        %v1020 = vpow.pop %v1019
        %v1021 = vmul.f32 %v952, 1.442695
        %v1022 = vpow.pop %v1021
        %v1023 = vmul.f32 %v953, 1.442695
        %v1024 = vpow.pop %v1023
        %v1025 = vmul.f32 %v954, 1.442695
        %v1026 = vpow.pop %v1025
        %v1027 = vmul.f32 %v955, 1.442695
        %v1028 = vpow.pop %v1027
        %v1029 = vmul.f32 %v956, 1.442695
        %v1030 = vpow.pop %v1029
        %v1031 = vmul.f32 %v957, 1.442695
        %v1032 = vpow.pop %v1031
        %v1033 = vmul.f32 %v958, 1.442695
        %v1034 = vpow.pop %v1033
        %v1035 = vmul.f32 %v959, 1.442695
        %v1036 = vpow.pop %v1035
        %v1037 = vmul.f32 %v960, 1.442695
        %v1038 = vpow.pop %v1037
        %v1039 = vmul.f32 %v961, 1.442695
        %v1040 = vpow.pop %v1039
        %v1041 = vmul.f32 %v962, 1.442695
        %v1042 = vpow.pop %v1041
        %v1043 = vmul.f32 %v963, 1.442695
        %v1044 = vpow.pop %v1043
        %v1045 = vmul.f32 %v964, 1.442695
        %v1046 = vpow.pop %v1045
        %v1047 = vmul.f32 %v965, 1.442695
        %v1048 = vpow.pop %v1047
        %v1049 = vmul.f32 %v966, 1.442695
        %v1050 = vpow.pop %v1049
        %v1051 = vmul.f32 %v967, 1.442695
        %v1052 = vpow.pop %v1051
        %v1053 = vmul.f32 %v968, 1.442695
        %v1054 = vpow.pop %v1053
        %v1055 = vmul.f32 %v969, 1.442695
        %v1056 = vpow.pop %v1055
        %v1057 = vmul.f32 %v970, 1.442695
        %v1058 = vpow.pop %v1057
        %v1059 = vmul.f32 %v971, 1.442695
        %v1060 = vpow.pop %v1059
        %v1061 = vmul.f32 %v972, 1.442695
        %v1062 = vpow.pop %v1061
        %v1063 = vmul.f32 %v973, 1.442695
        %v1064 = vpow.pop %v1063
        %v1065 = vmul.f32 %v974, 1.442695
        %v1066 = vpow.pop %v1065
        %v1067 = vmul.f32 %v975, 1.442695
        %v1068 = vpow.pop %v1067
        %v1069 = vmul.f32 %v976, 1.442695
        %v1070 = vpow.pop %v1069
        %v1071 = vmul.f32 %v977, 1.442695
        %v1072 = vpow.pop %v1071
        %v1073 = vmul.f32 %v978, 1.442695
        %v1074 = vpow.pop %v1073
        %v1075 = vmul.f32 %v979, 1.442695
        %v1076 = vpow.pop %v1075
        %v1077 = vmul.f32 %v980, 1.442695
        %v1078 = vpow.pop %v1077
        %v1079 = vmul.f32 %v981, 1.442695
        %v1080 = vpow.pop %v1079
        %v1081 = vmul.f32 %v982, 1.442695
        %v1082 = vpow.pop %v1081
        %v1083 = vmul.f32 %v983, 1.442695
        %v1084 = vpow.pop %v1083
        %v1085 = vmul.f32 %v984, 1.442695
        %v1086 = vpow.pop %v1085
        %v1087 = vmul.f32 %v985, 1.442695
        %v1088 = vpow.pop %v1087
        %v1089 = vmul.f32 %v986, 1.442695
        %v1090 = vpow.pop %v1089
        %v1091 = vmul.f32 %v987, 1.442695
        %v1092 = vpow.pop %v1091
        %v1093 = vmul.f32 %v988, 1.442695
        %v1094 = vpow.pop %v1093
        %v1095 = vmul.f32 %v989, 1.442695
        %v1096 = vpow.pop %v1095
        %v1097 = vmul.f32 %v990, 1.442695
        %v1098 = vpow.pop %v1097
        %v1099 = vmul.f32 %v991, 1.442695
        %v1100 = vpow.pop %v1099
        %v1101 = vmul.f32 %v992, 1.442695
        %v1102 = vpow.pop %v1101
        %v1103 = vmul.f32 %v993, 1.442695
        %v1104 = vpow.pop %v1103
        %v1105 = vmul.f32 %v994, 1.442695
        %v1106 = vpow.pop %v1105
        %v1107 = vmul.f32 %v995, 1.442695
        %v1108 = vpow.pop %v1107
        %v1109 = vmul.f32 %v996, 1.442695
        %v1110 = vpow.pop %v1109
        %v1111 = vmul.f32 %v997, 1.442695
        %v1112 = vpow.pop %v1111
        %v1113 = vmul.f32 %v998, 1.442695
        %v1114 = vpow.pop %v1113
        %v1115 = vmul.f32 %v999, 1.442695
        %v1116 = vpow.pop %v1115
        %v1117 = vmul.f32 %v1000, 1.442695
        %v1118 = vpow.pop %v1117
        %v1119 = vmul.f32 %v1001, 1.442695
        %v1120 = vpow.pop %v1119
        %v1121 = vmul.f32 %v1002, 1.442695
        %v1122 = vpow.pop %v1121
        %v1123 = vmul.f32 %v1003, 1.442695
        %v1124 = vpow.pop %v1123
        %v1125 = vmul.f32 %v1004, 1.442695
        %v1126 = vpow.pop %v1125
        %v1127 = vmul.f32 %v1005, 1.442695
        %v1128 = vpow.pop %v1127
        %v1129 = vmul.f32 %v1006, 1.442695
        %v1130 = vpow.pop %v1129
        %v1131 = vmul.f32 %v1007, 1.442695
        %v1132 = vpow.pop %v1131
        %v1133 = vmul.f32 %v1008, 1.442695
        %v1134 = vpow.pop %v1133
        %v1135 = vmul.f32 %v1009, 1.442695
        %v1136 = vpow.pop %v1135
        %v1137 = vmul.f32 %v1010, 1.442695
        %v1138 = vpow.pop %v1137
        %1139 = vmatprep.subr.mxu0 %v1014
        %1140 = vmatpush1.msra.mxu0 %v1012
        %1141 = vmatprep.subr.mxu0 %v1018
        %1142 = vmatpush1.msra.mxu0 %v1016
        %1143 = vmatprep.subr.mxu0 %v1022
        %1144 = vmatpush1.msra.mxu0 %v1020
        %1145 = vmatprep.subr.mxu0 %v1026
        %1146 = vmatpush1.msra.mxu0 %v1024
        %1147 = vmatprep.subr.mxu0 %v1030
        %1148 = vmatpush1.msra.mxu0 %v1028
        %1149 = vmatprep.subr.mxu0 %v1034
        %1150 = vmatpush1.msra.mxu0 %v1032
        %1151 = vmatprep.subr.mxu0 %v1038
        %1152 = vmatpush1.msra.mxu0 %v1036
        %1153 = vmatprep.subr.mxu0 %v1042
        %1154 = vmatpush1.msra.mxu0 %v1040
        %1155 = vmatprep.subr.mxu0 %v1046
        %1156 = vmatpush1.msra.mxu0 %v1044
        %1157 = vmatprep.subr.mxu0 %v1050
        %1158 = vmatpush1.msra.mxu0 %v1048
        %1159 = vmatprep.subr.mxu0 %v1054
        %1160 = vmatpush1.msra.mxu0 %v1052
        %1161 = vmatprep.subr.mxu0 %v1058
        %1162 = vmatpush1.msra.mxu0 %v1056
        %1163 = vmatprep.subr.mxu0 %v1062
        %1164 = vmatpush1.msra.mxu0 %v1060
        %1165 = vmatprep.subr.mxu0 %v1066
        %1166 = vmatpush1.msra.mxu0 %v1064
        %1167 = vmatprep.subr.mxu0 %v1070
        %1168 = vmatpush1.msra.mxu0 %v1068
        %1169 = vmatprep.subr.mxu0 %v1074
        %1170 = vmatpush1.msra.mxu0 %v1072
        %1171 = vmatprep.subr.mxu0 %v1078
        %1172 = vmatpush1.msra.mxu0 %v1076
        %1173 = vmatprep.subr.mxu0 %v1082
        %1174 = vmatpush1.msra.mxu0 %v1080
        %1175 = vmatprep.subr.mxu0 %v1086
        %1176 = vmatpush1.msra.mxu0 %v1084
        %1177 = vmatprep.subr.mxu0 %v1090
        %1178 = vmatpush1.msra.mxu0 %v1088
        %1179 = vmatprep.subr.mxu0 %v1094
        %1180 = vmatpush1.msra.mxu0 %v1092
        %1181 = vmatprep.subr.mxu0 %v1098
        %1182 = vmatpush1.msra.mxu0 %v1096
        %1183 = vmatprep.subr.mxu0 %v1102
        %1184 = vmatpush1.msra.mxu0 %v1100
        %1185 = vmatprep.subr.mxu0 %v1106
        %1186 = vmatpush1.msra.mxu0 %v1104
        %1187 = vmatprep.subr.mxu0 %v1110
        %1188 = vmatpush1.msra.mxu0 %v1108
        %1189 = vmatprep.subr.mxu0 %v1114
        %1190 = vmatpush1.msra.mxu0 %v1112
        %1191 = vmatprep.subr.mxu0 %v1118
        %1192 = vmatpush1.msra.mxu0 %v1116
        %1193 = vmatprep.subr.mxu0 %v1122
        %1194 = vmatpush1.msra.mxu0 %v1120
        %1195 = vmatprep.subr.mxu0 %v1126
        %1196 = vmatpush1.msra.mxu0 %v1124
        %1197 = vmatprep.subr.mxu0 %v1130
        %1198 = vmatpush1.msra.mxu0 %v1128
        %1199 = vmatprep.subr.mxu0 %v1134
        %1200 = vmatpush1.msra.mxu0 %v1132
        %1201 = vmatprep.subr.mxu0 %v1138
        %1202 = vmatpush1.msra.mxu0 %v1136
        %1203 = vmatprep.mubr.f32.mxu0 %v447
        %1204 = vmatmul.mubr.f32.gmra.mrb[0].mxu0 %v445
        %v1205 = vpop.f32.mrb[0].mxu0
        %v1206 = vadd.f32 0.0, %v1205
        %v1207 = vpop.f32.mrb[0].mxu0
        %v1208 = vadd.f32 0.0, %v1207
        %1209 = vdwg.mxu0
        %v1210 = vrcp.pop %v1206
        %v1211 = vrcp.pop %v1208
        %v1212 = vlaneseq
        %v1213 = vshrl.u32 %v1212, 7
        %v1214 = vsub.s32 4, %v1213
        %v1215 = vrot.slane %v1210, %v1214
        %v1216 = vlaneseq
        %v1217 = vshrl.u32 %v1216, 7
        %v1218 = vsub.s32 4, %v1217
        %v1219 = vrot.slane %v1211, %v1218
        %v1220 = vmul.f32 %v1206, %v1215
        %v1221 = vmul.f32 %v1208, %v1219
        %1222 = vxpose.xlu0.b32.start [1/16] %v439, 128
        %1223 = vxpose.xlu0.b32.cont [2/16] 0.0, 128
        %1224 = vxpose.xlu0.b32.cont [3/16] 0.0, 128
        %1225 = vxpose.xlu0.b32.cont [4/16] 0.0, 128
        %1226 = vxpose.xlu0.b32.cont [5/16] 0.0, 128
        %1227 = vxpose.xlu0.b32.cont [6/16] 0.0, 128
        %1228 = vxpose.xlu0.b32.cont [7/16] 0.0, 128
        %1229 = vxpose.xlu0.b32.cont [8/16] 0.0, 128
        %1230 = vxpose.xlu0.b32.cont [9/16] 0.0, 128
        %1231 = vxpose.xlu0.b32.cont [10/16] 0.0, 128
        %1232 = vxpose.xlu0.b32.cont [11/16] 0.0, 128
        %1233 = vxpose.xlu0.b32.cont [12/16] 0.0, 128
        %1234 = vxpose.xlu0.b32.cont [13/16] 0.0, 128
        %1235 = vxpose.xlu0.b32.cont [14/16] 0.0, 128
        %1236 = vxpose.xlu0.b32.cont [15/16] 0.0, 128
        %1237 = vxpose.xlu0.b32.end [16/16] 0.0, 128
        %v1238 = vpop.trf.xlu0
        %v1239 = vpop.trf.xlu0
        %v1240 = vpop.trf.xlu0
        %v1241 = vpop.trf.xlu0
        %v1242 = vpop.trf.xlu0
        %v1243 = vpop.trf.xlu0
        %v1244 = vpop.trf.xlu0
        %v1245 = vpop.trf.xlu0
        %v1246 = vpop.trf.xlu0
        %v1247 = vpop.trf.xlu0
        %v1248 = vpop.trf.xlu0
        %v1249 = vpop.trf.xlu0
        %v1250 = vpop.trf.xlu0
        %v1251 = vpop.trf.xlu0
        %v1252 = vpop.trf.xlu0
        %v1253 = vpop.trf.xlu0
        %1254 = vxpose.xlu0.b32.start [1/16] %v441, 128
        %1255 = vxpose.xlu0.b32.cont [2/16] 0.0, 128
        %1256 = vxpose.xlu0.b32.cont [3/16] 0.0, 128
        %1257 = vxpose.xlu0.b32.cont [4/16] 0.0, 128
        %1258 = vxpose.xlu0.b32.cont [5/16] 0.0, 128
        %1259 = vxpose.xlu0.b32.cont [6/16] 0.0, 128
        %1260 = vxpose.xlu0.b32.cont [7/16] 0.0, 128
        %1261 = vxpose.xlu0.b32.cont [8/16] 0.0, 128
        %1262 = vxpose.xlu0.b32.cont [9/16] 0.0, 128
        %1263 = vxpose.xlu0.b32.cont [10/16] 0.0, 128
        %1264 = vxpose.xlu0.b32.cont [11/16] 0.0, 128
        %1265 = vxpose.xlu0.b32.cont [12/16] 0.0, 128
        %1266 = vxpose.xlu0.b32.cont [13/16] 0.0, 128
        %1267 = vxpose.xlu0.b32.cont [14/16] 0.0, 128
        %1268 = vxpose.xlu0.b32.cont [15/16] 0.0, 128
        %1269 = vxpose.xlu0.b32.end [16/16] 0.0, 128
        %v1270 = vpop.trf.xlu0
        %v1271 = vpop.trf.xlu0
        %v1272 = vpop.trf.xlu0
        %v1273 = vpop.trf.xlu0
        %v1274 = vpop.trf.xlu0
        %v1275 = vpop.trf.xlu0
        %v1276 = vpop.trf.xlu0
        %v1277 = vpop.trf.xlu0
        %v1278 = vpop.trf.xlu0
        %v1279 = vpop.trf.xlu0
        %v1280 = vpop.trf.xlu0
        %v1281 = vpop.trf.xlu0
        %v1282 = vpop.trf.xlu0
        %v1283 = vpop.trf.xlu0
        %v1284 = vpop.trf.xlu0
        %v1285 = vpop.trf.xlu0
        %v1287 = vsel %vm519, %v1238, 0
        %v1290 = vsel %vm519, %v1239, 0
        %v1293 = vsel %vm519, %v1240, 0
        %v1296 = vsel %vm519, %v1241, 0
        %v1299 = vsel %vm519, %v1242, 0
        %v1302 = vsel %vm519, %v1243, 0
        %v1305 = vsel %vm519, %v1244, 0
        %v1308 = vsel %vm519, %v1245, 0
        %v1311 = vsel %vm519, %v1246, 0
        %v1314 = vsel %vm519, %v1247, 0
        %v1317 = vsel %vm519, %v1248, 0
        %v1320 = vsel %vm519, %v1249, 0
        %v1323 = vsel %vm519, %v1250, 0
        %v1326 = vsel %vm519, %v1251, 0
        %v1329 = vsel %vm519, %v1252, 0
        %v1332 = vsel %vm519, %v1253, 0
        %v1335 = vsel %vm519, %v1270, 0
        %v1338 = vsel %vm519, %v1271, 0
        %v1341 = vsel %vm519, %v1272, 0
        %v1344 = vsel %vm519, %v1273, 0
        %v1347 = vsel %vm519, %v1274, 0
        %v1350 = vsel %vm519, %v1275, 0
        %v1353 = vsel %vm519, %v1276, 0
        %v1356 = vsel %vm519, %v1277, 0
        %v1359 = vsel %vm519, %v1278, 0
        %v1362 = vsel %vm519, %v1279, 0
        %v1365 = vsel %vm519, %v1280, 0
        %v1368 = vsel %vm519, %v1281, 0
        %v1371 = vsel %vm519, %v1282, 0
        %v1374 = vsel %vm519, %v1283, 0
        %v1377 = vsel %vm519, %v1284, 0
        %v1380 = vsel %vm519, %v1285, 0
        %1382 = vmatprep.subr.mxu0 %v346
        %1383 = vmatpush1.msra.mxu0 %v344
        %1384 = vmatprep.subr.mxu0 0.0
        %1385 = vmatpush1.msra.mxu0 0.0
        %1386 = vmatprep.subr.mxu0 0.0
        %1387 = vmatpush1.msra.mxu0 0.0
        %1388 = vmatprep.subr.mxu0 0.0
        %1389 = vmatpush1.msra.mxu0 0.0
        %1390 = vmatprep.subr.mxu0 0.0
        %1391 = vmatpush1.msra.mxu0 0.0
        %1392 = vmatprep.subr.mxu0 0.0
        %1393 = vmatpush1.msra.mxu0 0.0
        %1394 = vmatprep.subr.mxu0 0.0
        %1395 = vmatpush1.msra.mxu0 0.0
        %1396 = vmatprep.subr.mxu0 0.0
        %1397 = vmatpush1.msra.mxu0 0.0
        %1398 = vmatprep.subr.mxu0 0.0
        %1399 = vmatpush1.msra.mxu0 0.0
        %1400 = vmatprep.subr.mxu0 0.0
        %1401 = vmatpush1.msra.mxu0 0.0
        %1402 = vmatprep.subr.mxu0 0.0
        %1403 = vmatpush1.msra.mxu0 0.0
        %1404 = vmatprep.subr.mxu0 0.0
        %1405 = vmatpush1.msra.mxu0 0.0
        %1406 = vmatprep.subr.mxu0 0.0
        %1407 = vmatpush1.msra.mxu0 0.0
        %1408 = vmatprep.subr.mxu0 0.0
        %1409 = vmatpush1.msra.mxu0 0.0
        %1410 = vmatprep.subr.mxu0 0.0
        %1411 = vmatpush1.msra.mxu0 0.0
        %1412 = vmatprep.subr.mxu0 0.0
        %1413 = vmatpush1.msra.mxu0 0.0
        %1414 = vmatprep.subr.mxu0 0.0
        %1415 = vmatpush1.msra.mxu0 0.0
        %1416 = vmatprep.subr.mxu0 0.0
        %1417 = vmatpush1.msra.mxu0 0.0
        %1418 = vmatprep.subr.mxu0 0.0
        %1419 = vmatpush1.msra.mxu0 0.0
        %1420 = vmatprep.subr.mxu0 0.0
        %1421 = vmatpush1.msra.mxu0 0.0
        %1422 = vmatprep.subr.mxu0 0.0
        %1423 = vmatpush1.msra.mxu0 0.0
        %1424 = vmatprep.subr.mxu0 0.0
        %1425 = vmatpush1.msra.mxu0 0.0
        %1426 = vmatprep.subr.mxu0 0.0
        %1427 = vmatpush1.msra.mxu0 0.0
        %1428 = vmatprep.subr.mxu0 0.0
        %1429 = vmatpush1.msra.mxu0 0.0
        %1430 = vmatprep.subr.mxu0 0.0
        %1431 = vmatpush1.msra.mxu0 0.0
        %1432 = vmatprep.subr.mxu0 0.0
        %1433 = vmatpush1.msra.mxu0 0.0
        %1434 = vmatprep.subr.mxu0 0.0
        %1435 = vmatpush1.msra.mxu0 0.0
        %1436 = vmatprep.subr.mxu0 0.0
        %1437 = vmatpush1.msra.mxu0 0.0
        %1438 = vmatprep.subr.mxu0 0.0
        %1439 = vmatpush1.msra.mxu0 0.0
        %1440 = vmatprep.subr.mxu0 0.0
        %1441 = vmatpush1.msra.mxu0 0.0
        %1442 = vmatprep.subr.mxu0 0.0
        %1443 = vmatpush1.msra.mxu0 0.0
        %1444 = vmatprep.subr.mxu0 0.0
        %1445 = vmatpush1.msra.mxu0 0.0
        %1446 = vmatprep.mubr.f32.mxu0 0.0
        %1447 = vmatmul.mubr.f32.gmra.mrb[0].mxu0 %v1287
        %v1448 = vpop.f32.mrb[0].mxu0
        %v1449 = vadd.f32 0.0, %v1448
        %v1450 = vpop.f32.mrb[0].mxu0
        %v1451 = vadd.f32 0.0, %v1450
        %1452 = vmatprep.mubr.f32.mxu0 0.0
        %1453 = vmatmul.mubr.f32.gmra.mrb[0].mxu0 %v1290
        %v1454 = vpop.f32.mrb[0].mxu0
        %v1455 = vadd.f32 0.0, %v1454
        %v1456 = vpop.f32.mrb[0].mxu0
        %v1457 = vadd.f32 0.0, %v1456
        %1458 = vmatprep.mubr.f32.mxu0 0.0
        %1459 = vmatmul.mubr.f32.gmra.mrb[0].mxu0 %v1293
        %v1460 = vpop.f32.mrb[0].mxu0
        %v1461 = vadd.f32 0.0, %v1460
        %v1462 = vpop.f32.mrb[0].mxu0
        %v1463 = vadd.f32 0.0, %v1462
        %1464 = vmatprep.mubr.f32.mxu0 0.0
        %1465 = vmatmul.mubr.f32.gmra.mrb[0].mxu0 %v1296
        %v1466 = vpop.f32.mrb[0].mxu0
        %v1467 = vadd.f32 0.0, %v1466
        %v1468 = vpop.f32.mrb[0].mxu0
        %v1469 = vadd.f32 0.0, %v1468
        %1470 = vmatprep.mubr.f32.mxu0 0.0
        %1471 = vmatmul.mubr.f32.gmra.mrb[0].mxu0 %v1299
        %v1472 = vpop.f32.mrb[0].mxu0
        %v1473 = vadd.f32 0.0, %v1472
        %v1474 = vpop.f32.mrb[0].mxu0
        %v1475 = vadd.f32 0.0, %v1474
        %1476 = vmatprep.mubr.f32.mxu0 0.0
        %1477 = vmatmul.mubr.f32.gmra.mrb[0].mxu0 %v1302
        %v1478 = vpop.f32.mrb[0].mxu0
        %v1479 = vadd.f32 0.0, %v1478
        %v1480 = vpop.f32.mrb[0].mxu0
        %v1481 = vadd.f32 0.0, %v1480
        %1482 = vmatprep.mubr.f32.mxu0 0.0
        %1483 = vmatmul.mubr.f32.gmra.mrb[0].mxu0 %v1305
        %v1484 = vpop.f32.mrb[0].mxu0
        %v1485 = vadd.f32 0.0, %v1484
        %v1486 = vpop.f32.mrb[0].mxu0
        %v1487 = vadd.f32 0.0, %v1486
        %1488 = vmatprep.mubr.f32.mxu0 0.0
        %1489 = vmatmul.mubr.f32.gmra.mrb[0].mxu0 %v1308
        %v1490 = vpop.f32.mrb[0].mxu0
        %v1491 = vadd.f32 0.0, %v1490
        %v1492 = vpop.f32.mrb[0].mxu0
        %v1493 = vadd.f32 0.0, %v1492
        %1494 = vmatprep.mubr.f32.mxu0 0.0
        %1495 = vmatmul.mubr.f32.gmra.mrb[0].mxu0 %v1311
        %v1496 = vpop.f32.mrb[0].mxu0
        %v1497 = vadd.f32 0.0, %v1496
        %v1498 = vpop.f32.mrb[0].mxu0
        %v1499 = vadd.f32 0.0, %v1498
        %1500 = vmatprep.mubr.f32.mxu0 0.0
        %1501 = vmatmul.mubr.f32.gmra.mrb[0].mxu0 %v1314
        %v1502 = vpop.f32.mrb[0].mxu0
        %v1503 = vadd.f32 0.0, %v1502
        %v1504 = vpop.f32.mrb[0].mxu0
        %v1505 = vadd.f32 0.0, %v1504
        %1506 = vmatprep.mubr.f32.mxu0 0.0
        %1507 = vmatmul.mubr.f32.gmra.mrb[0].mxu0 %v1317
        %v1508 = vpop.f32.mrb[0].mxu0
        %v1509 = vadd.f32 0.0, %v1508
        %v1510 = vpop.f32.mrb[0].mxu0
        %v1511 = vadd.f32 0.0, %v1510
        %1512 = vmatprep.mubr.f32.mxu0 0.0
        %1513 = vmatmul.mubr.f32.gmra.mrb[0].mxu0 %v1320
        %v1514 = vpop.f32.mrb[0].mxu0
        %v1515 = vadd.f32 0.0, %v1514
        %v1516 = vpop.f32.mrb[0].mxu0
        %v1517 = vadd.f32 0.0, %v1516
        %1518 = vmatprep.mubr.f32.mxu0 0.0
        %1519 = vmatmul.mubr.f32.gmra.mrb[0].mxu0 %v1323
        %v1520 = vpop.f32.mrb[0].mxu0
        %v1521 = vadd.f32 0.0, %v1520
        %v1522 = vpop.f32.mrb[0].mxu0
        %v1523 = vadd.f32 0.0, %v1522
        %1524 = vmatprep.mubr.f32.mxu0 0.0
        %1525 = vmatmul.mubr.f32.gmra.mrb[0].mxu0 %v1326
        %v1526 = vpop.f32.mrb[0].mxu0
        %v1527 = vadd.f32 0.0, %v1526
        %v1528 = vpop.f32.mrb[0].mxu0
        %v1529 = vadd.f32 0.0, %v1528
        %1530 = vmatprep.mubr.f32.mxu0 0.0
        %1531 = vmatmul.mubr.f32.gmra.mrb[0].mxu0 %v1329
        %v1532 = vpop.f32.mrb[0].mxu0
        %v1533 = vadd.f32 0.0, %v1532
        %v1534 = vpop.f32.mrb[0].mxu0
        %v1535 = vadd.f32 0.0, %v1534
        %1536 = vmatprep.mubr.f32.mxu0 0.0
        %1537 = vmatmul.mubr.f32.gmra.mrb[0].mxu0 %v1332
        %v1538 = vpop.f32.mrb[0].mxu0
        %v1539 = vadd.f32 0.0, %v1538
        %v1540 = vpop.f32.mrb[0].mxu0
        %v1541 = vadd.f32 0.0, %v1540
        %1542 = vmatprep.mubr.f32.mxu0 0.0
        %1543 = vmatmul.mubr.f32.gmra.mrb[0].mxu0 %v1335
        %v1544 = vpop.f32.mrb[0].mxu0
        %v1545 = vadd.f32 0.0, %v1544
        %v1546 = vpop.f32.mrb[0].mxu0
        %v1547 = vadd.f32 0.0, %v1546
        %1548 = vmatprep.mubr.f32.mxu0 0.0
        %1549 = vmatmul.mubr.f32.gmra.mrb[0].mxu0 %v1338
        %v1550 = vpop.f32.mrb[0].mxu0
        %v1551 = vadd.f32 0.0, %v1550
        %v1552 = vpop.f32.mrb[0].mxu0
        %v1553 = vadd.f32 0.0, %v1552
        %1554 = vmatprep.mubr.f32.mxu0 0.0
        %1555 = vmatmul.mubr.f32.gmra.mrb[0].mxu0 %v1341
        %v1556 = vpop.f32.mrb[0].mxu0
        %v1557 = vadd.f32 0.0, %v1556
        %v1558 = vpop.f32.mrb[0].mxu0
        %v1559 = vadd.f32 0.0, %v1558
        %1560 = vmatprep.mubr.f32.mxu0 0.0
        %1561 = vmatmul.mubr.f32.gmra.mrb[0].mxu0 %v1344
        %v1562 = vpop.f32.mrb[0].mxu0
        %v1563 = vadd.f32 0.0, %v1562
        %v1564 = vpop.f32.mrb[0].mxu0
        %v1565 = vadd.f32 0.0, %v1564
        %1566 = vmatprep.mubr.f32.mxu0 0.0
        %1567 = vmatmul.mubr.f32.gmra.mrb[0].mxu0 %v1347
        %v1568 = vpop.f32.mrb[0].mxu0
        %v1569 = vadd.f32 0.0, %v1568
        %v1570 = vpop.f32.mrb[0].mxu0
        %v1571 = vadd.f32 0.0, %v1570
        %1572 = vmatprep.mubr.f32.mxu0 0.0
        %1573 = vmatmul.mubr.f32.gmra.mrb[0].mxu0 %v1350
        %v1574 = vpop.f32.mrb[0].mxu0
        %v1575 = vadd.f32 0.0, %v1574
        %v1576 = vpop.f32.mrb[0].mxu0
        %v1577 = vadd.f32 0.0, %v1576
        %1578 = vmatprep.mubr.f32.mxu0 0.0
        %1579 = vmatmul.mubr.f32.gmra.mrb[0].mxu0 %v1353
        %v1580 = vpop.f32.mrb[0].mxu0
        %v1581 = vadd.f32 0.0, %v1580
        %v1582 = vpop.f32.mrb[0].mxu0
        %v1583 = vadd.f32 0.0, %v1582
        %1584 = vmatprep.mubr.f32.mxu0 0.0
        %1585 = vmatmul.mubr.f32.gmra.mrb[0].mxu0 %v1356
        %v1586 = vpop.f32.mrb[0].mxu0
        %v1587 = vadd.f32 0.0, %v1586
        %v1588 = vpop.f32.mrb[0].mxu0
        %v1589 = vadd.f32 0.0, %v1588
        %1590 = vmatprep.mubr.f32.mxu0 0.0
        %1591 = vmatmul.mubr.f32.gmra.mrb[0].mxu0 %v1359
        %v1592 = vpop.f32.mrb[0].mxu0
        %v1593 = vadd.f32 0.0, %v1592
        %v1594 = vpop.f32.mrb[0].mxu0
        %v1595 = vadd.f32 0.0, %v1594
        %1596 = vmatprep.mubr.f32.mxu0 0.0
        %1597 = vmatmul.mubr.f32.gmra.mrb[0].mxu0 %v1362
        %v1598 = vpop.f32.mrb[0].mxu0
        %v1599 = vadd.f32 0.0, %v1598
        %v1600 = vpop.f32.mrb[0].mxu0
        %v1601 = vadd.f32 0.0, %v1600
        %1602 = vmatprep.mubr.f32.mxu0 0.0
        %1603 = vmatmul.mubr.f32.gmra.mrb[0].mxu0 %v1365
        %v1604 = vpop.f32.mrb[0].mxu0
        %v1605 = vadd.f32 0.0, %v1604
        %v1606 = vpop.f32.mrb[0].mxu0
        %v1607 = vadd.f32 0.0, %v1606
        %1608 = vmatprep.mubr.f32.mxu0 0.0
        %1609 = vmatmul.mubr.f32.gmra.mrb[0].mxu0 %v1368
        %v1610 = vpop.f32.mrb[0].mxu0
        %v1611 = vadd.f32 0.0, %v1610
        %v1612 = vpop.f32.mrb[0].mxu0
        %v1613 = vadd.f32 0.0, %v1612
        %1614 = vmatprep.mubr.f32.mxu0 0.0
        %1615 = vmatmul.mubr.f32.gmra.mrb[0].mxu0 %v1371
        %v1616 = vpop.f32.mrb[0].mxu0
        %v1617 = vadd.f32 0.0, %v1616
        %v1618 = vpop.f32.mrb[0].mxu0
        %v1619 = vadd.f32 0.0, %v1618
        %1620 = vmatprep.mubr.f32.mxu0 0.0
        %1621 = vmatmul.mubr.f32.gmra.mrb[0].mxu0 %v1374
        %v1622 = vpop.f32.mrb[0].mxu0
        %v1623 = vadd.f32 0.0, %v1622
        %v1624 = vpop.f32.mrb[0].mxu0
        %v1625 = vadd.f32 0.0, %v1624
        %1626 = vmatprep.mubr.f32.mxu0 0.0
        %1627 = vmatmul.mubr.f32.gmra.mrb[0].mxu0 %v1377
        %v1628 = vpop.f32.mrb[0].mxu0
        %v1629 = vadd.f32 0.0, %v1628
        %v1630 = vpop.f32.mrb[0].mxu0
        %v1631 = vadd.f32 0.0, %v1630
        %1632 = vmatprep.mubr.f32.mxu0 0.0
        %1633 = vmatmul.mubr.f32.gmra.mrb[0].mxu0 %v1380
        %v1634 = vpop.f32.mrb[0].mxu0
        %v1635 = vadd.f32 0.0, %v1634
        %v1636 = vpop.f32.mrb[0].mxu0
        %v1637 = vadd.f32 0.0, %v1636
        %1638 = vdwg.mxu0
        %v1639 = vmax.f32 %v1449, %v1461
        %v1640 = vmax.f32 %v1455, %v1467
        %v1641 = vmax.f32 %v1639, %v1473
        %v1642 = vmax.f32 %v1640, %v1479
        %v1643 = vmax.f32 %v1641, %v1485
        %v1644 = vmax.f32 %v1642, %v1491
        %v1645 = vmax.f32 %v1643, %v1497
        %v1646 = vmax.f32 %v1644, %v1503
        %v1647 = vmax.f32 %v1645, %v1509
        %v1648 = vmax.f32 %v1646, %v1515
        %v1649 = vmax.f32 %v1647, %v1521
        %v1650 = vmax.f32 %v1648, %v1527
        %v1651 = vmax.f32 %v1649, %v1533
        %v1652 = vmax.f32 %v1650, %v1539
        %v1653 = vmax.f32 %v1651, %v1545
        %v1654 = vmax.f32 %v1652, %v1551
        %v1655 = vmax.f32 %v1653, %v1557
        %v1656 = vmax.f32 %v1654, %v1563
        %v1657 = vmax.f32 %v1655, %v1569
        %v1658 = vmax.f32 %v1656, %v1575
        %v1659 = vmax.f32 %v1657, %v1581
        %v1660 = vmax.f32 %v1658, %v1587
        %v1661 = vmax.f32 %v1659, %v1593
        %v1662 = vmax.f32 %v1660, %v1599
        %v1663 = vmax.f32 %v1661, %v1605
        %v1664 = vmax.f32 %v1662, %v1611
        %v1665 = vmax.f32 %v1663, %v1617
        %v1666 = vmax.f32 %v1664, %v1623
        %v1667 = vmax.f32 %v1665, %v1629
        %v1668 = vmax.f32 %v1666, %v1635
        %v1669 = vmax.f32 %v1667, %v1668
        %v1670 = vrot.slane %v1669, 4
        %v1671 = vmax.f32 %v1669, %v1670
        %v1672 = vrot.slane %v1671, 2
        %v1673 = vmax.f32 %v1671, %v1672
        %v1674 = vrot.slane %v1673, 1
        %v1675 = vmax.f32 %v1673, %v1674
        %v1676 = vmax.f32 %v1451, %v1463
        %v1677 = vmax.f32 %v1457, %v1469
        %v1678 = vmax.f32 %v1676, %v1475
        %v1679 = vmax.f32 %v1677, %v1481
        %v1680 = vmax.f32 %v1678, %v1487
        %v1681 = vmax.f32 %v1679, %v1493
        %v1682 = vmax.f32 %v1680, %v1499
        %v1683 = vmax.f32 %v1681, %v1505
        %v1684 = vmax.f32 %v1682, %v1511
        %v1685 = vmax.f32 %v1683, %v1517
        %v1686 = vmax.f32 %v1684, %v1523
        %v1687 = vmax.f32 %v1685, %v1529
        %v1688 = vmax.f32 %v1686, %v1535
        %v1689 = vmax.f32 %v1687, %v1541
        %v1690 = vmax.f32 %v1688, %v1547
        %v1691 = vmax.f32 %v1689, %v1553
        %v1692 = vmax.f32 %v1690, %v1559
        %v1693 = vmax.f32 %v1691, %v1565
        %v1694 = vmax.f32 %v1692, %v1571
        %v1695 = vmax.f32 %v1693, %v1577
        %v1696 = vmax.f32 %v1694, %v1583
        %v1697 = vmax.f32 %v1695, %v1589
        %v1698 = vmax.f32 %v1696, %v1595
        %v1699 = vmax.f32 %v1697, %v1601
        %v1700 = vmax.f32 %v1698, %v1607
        %v1701 = vmax.f32 %v1699, %v1613
        %v1702 = vmax.f32 %v1700, %v1619
        %v1703 = vmax.f32 %v1701, %v1625
        %v1704 = vmax.f32 %v1702, %v1631
        %v1705 = vmax.f32 %v1703, %v1637
        %v1706 = vmax.f32 %v1704, %v1705
        %v1707 = vrot.slane %v1706, 4
        %v1708 = vmax.f32 %v1706, %v1707
        %v1709 = vrot.slane %v1708, 2
        %v1710 = vmax.f32 %v1708, %v1709
        %v1711 = vrot.slane %v1710, 1
        %v1712 = vmax.f32 %v1710, %v1711
        %v1713 = vsub.f32 %v1449, %v1675
        %v1714 = vsub.f32 %v1451, %v1712
        %v1715 = vsub.f32 %v1455, %v1675
        %v1716 = vsub.f32 %v1457, %v1712
        %v1717 = vsub.f32 %v1461, %v1675
        %v1718 = vsub.f32 %v1463, %v1712
        %v1719 = vsub.f32 %v1467, %v1675
        %v1720 = vsub.f32 %v1469, %v1712
        %v1721 = vsub.f32 %v1473, %v1675
        %v1722 = vsub.f32 %v1475, %v1712
        %v1723 = vsub.f32 %v1479, %v1675
        %v1724 = vsub.f32 %v1481, %v1712
        %v1725 = vsub.f32 %v1485, %v1675
        %v1726 = vsub.f32 %v1487, %v1712
        %v1727 = vsub.f32 %v1491, %v1675
        %v1728 = vsub.f32 %v1493, %v1712
        %v1729 = vsub.f32 %v1497, %v1675
        %v1730 = vsub.f32 %v1499, %v1712
        %v1731 = vsub.f32 %v1503, %v1675
        %v1732 = vsub.f32 %v1505, %v1712
        %v1733 = vsub.f32 %v1509, %v1675
        %v1734 = vsub.f32 %v1511, %v1712
        %v1735 = vsub.f32 %v1515, %v1675
        %v1736 = vsub.f32 %v1517, %v1712
        %v1737 = vsub.f32 %v1521, %v1675
        %v1738 = vsub.f32 %v1523, %v1712
        %v1739 = vsub.f32 %v1527, %v1675
        %v1740 = vsub.f32 %v1529, %v1712
        %v1741 = vsub.f32 %v1533, %v1675
        %v1742 = vsub.f32 %v1535, %v1712
        %v1743 = vsub.f32 %v1539, %v1675
        %v1744 = vsub.f32 %v1541, %v1712
        %v1745 = vsub.f32 %v1545, %v1675
        %v1746 = vsub.f32 %v1547, %v1712
        %v1747 = vsub.f32 %v1551, %v1675
        %v1748 = vsub.f32 %v1553, %v1712
        %v1749 = vsub.f32 %v1557, %v1675
        %v1750 = vsub.f32 %v1559, %v1712
        %v1751 = vsub.f32 %v1563, %v1675
        %v1752 = vsub.f32 %v1565, %v1712
        %v1753 = vsub.f32 %v1569, %v1675
        %v1754 = vsub.f32 %v1571, %v1712
        %v1755 = vsub.f32 %v1575, %v1675
        %v1756 = vsub.f32 %v1577, %v1712
        %v1757 = vsub.f32 %v1581, %v1675
        %v1758 = vsub.f32 %v1583, %v1712
        %v1759 = vsub.f32 %v1587, %v1675
        %v1760 = vsub.f32 %v1589, %v1712
        %v1761 = vsub.f32 %v1593, %v1675
        %v1762 = vsub.f32 %v1595, %v1712
        %v1763 = vsub.f32 %v1599, %v1675
        %v1764 = vsub.f32 %v1601, %v1712
        %v1765 = vsub.f32 %v1605, %v1675
        %v1766 = vsub.f32 %v1607, %v1712
        %v1767 = vsub.f32 %v1611, %v1675
        %v1768 = vsub.f32 %v1613, %v1712
        %v1769 = vsub.f32 %v1617, %v1675
        %v1770 = vsub.f32 %v1619, %v1712
        %v1771 = vsub.f32 %v1623, %v1675
        %v1772 = vsub.f32 %v1625, %v1712
        %v1773 = vsub.f32 %v1629, %v1675
        %v1774 = vsub.f32 %v1631, %v1712
        %v1775 = vsub.f32 %v1635, %v1675
        %v1776 = vsub.f32 %v1637, %v1712
        %v1777 = vmul.f32 %v1713, 1.442695
        %v1778 = vpow.pop %v1777
        %v1779 = vmul.f32 %v1714, 1.442695
        %v1780 = vpow.pop %v1779
        %v1781 = vmul.f32 %v1715, 1.442695
        %v1782 = vpow.pop %v1781
        %v1783 = vmul.f32 %v1716, 1.442695
        %v1784 = vpow.pop %v1783
        %v1785 = vmul.f32 %v1717, 1.442695
        %v1786 = vpow.pop %v1785
        %v1787 = vmul.f32 %v1718, 1.442695
        %v1788 = vpow.pop %v1787
        %v1789 = vmul.f32 %v1719, 1.442695
        %v1790 = vpow.pop %v1789
        %v1791 = vmul.f32 %v1720, 1.442695
        %v1792 = vpow.pop %v1791
        %v1793 = vmul.f32 %v1721, 1.442695
        %v1794 = vpow.pop %v1793
        %v1795 = vmul.f32 %v1722, 1.442695
        %v1796 = vpow.pop %v1795
        %v1797 = vmul.f32 %v1723, 1.442695
        %v1798 = vpow.pop %v1797
        %v1799 = vmul.f32 %v1724, 1.442695
        %v1800 = vpow.pop %v1799
        %v1801 = vmul.f32 %v1725, 1.442695
        %v1802 = vpow.pop %v1801
        %v1803 = vmul.f32 %v1726, 1.442695
        %v1804 = vpow.pop %v1803
        %v1805 = vmul.f32 %v1727, 1.442695
        %v1806 = vpow.pop %v1805
        %v1807 = vmul.f32 %v1728, 1.442695
        %v1808 = vpow.pop %v1807
        %v1809 = vmul.f32 %v1729, 1.442695
        %v1810 = vpow.pop %v1809
        %v1811 = vmul.f32 %v1730, 1.442695
        %v1812 = vpow.pop %v1811
        %v1813 = vmul.f32 %v1731, 1.442695
        %v1814 = vpow.pop %v1813
        %v1815 = vmul.f32 %v1732, 1.442695
        %v1816 = vpow.pop %v1815
        %v1817 = vmul.f32 %v1733, 1.442695
        %v1818 = vpow.pop %v1817
        %v1819 = vmul.f32 %v1734, 1.442695
        %v1820 = vpow.pop %v1819
        %v1821 = vmul.f32 %v1735, 1.442695
        %v1822 = vpow.pop %v1821
        %v1823 = vmul.f32 %v1736, 1.442695
        %v1824 = vpow.pop %v1823
        %v1825 = vmul.f32 %v1737, 1.442695
        %v1826 = vpow.pop %v1825
        %v1827 = vmul.f32 %v1738, 1.442695
        %v1828 = vpow.pop %v1827
        %v1829 = vmul.f32 %v1739, 1.442695
        %v1830 = vpow.pop %v1829
        %v1831 = vmul.f32 %v1740, 1.442695
        %v1832 = vpow.pop %v1831
        %v1833 = vmul.f32 %v1741, 1.442695
        %v1834 = vpow.pop %v1833
        %v1835 = vmul.f32 %v1742, 1.442695
        %v1836 = vpow.pop %v1835
        %v1837 = vmul.f32 %v1743, 1.442695
        %v1838 = vpow.pop %v1837
        %v1839 = vmul.f32 %v1744, 1.442695
        %v1840 = vpow.pop %v1839
        %v1841 = vmul.f32 %v1745, 1.442695
        %v1842 = vpow.pop %v1841
        %v1843 = vmul.f32 %v1746, 1.442695
        %v1844 = vpow.pop %v1843
        %v1845 = vmul.f32 %v1747, 1.442695
        %v1846 = vpow.pop %v1845
        %v1847 = vmul.f32 %v1748, 1.442695
        %v1848 = vpow.pop %v1847
        %v1849 = vmul.f32 %v1749, 1.442695
        %v1850 = vpow.pop %v1849
        %v1851 = vmul.f32 %v1750, 1.442695
        %v1852 = vpow.pop %v1851
        %v1853 = vmul.f32 %v1751, 1.442695
        %v1854 = vpow.pop %v1853
        %v1855 = vmul.f32 %v1752, 1.442695
        %v1856 = vpow.pop %v1855
        %v1857 = vmul.f32 %v1753, 1.442695
        %v1858 = vpow.pop %v1857
        %v1859 = vmul.f32 %v1754, 1.442695
        %v1860 = vpow.pop %v1859
        %v1861 = vmul.f32 %v1755, 1.442695
        %v1862 = vpow.pop %v1861
        %v1863 = vmul.f32 %v1756, 1.442695
        %v1864 = vpow.pop %v1863
        %v1865 = vmul.f32 %v1757, 1.442695
        %v1866 = vpow.pop %v1865
        %v1867 = vmul.f32 %v1758, 1.442695
        %v1868 = vpow.pop %v1867
        %v1869 = vmul.f32 %v1759, 1.442695
        %v1870 = vpow.pop %v1869
        %v1871 = vmul.f32 %v1760, 1.442695
        %v1872 = vpow.pop %v1871
        %v1873 = vmul.f32 %v1761, 1.442695
        %v1874 = vpow.pop %v1873
        %v1875 = vmul.f32 %v1762, 1.442695
        %v1876 = vpow.pop %v1875
        %v1877 = vmul.f32 %v1763, 1.442695
        %v1878 = vpow.pop %v1877
        %v1879 = vmul.f32 %v1764, 1.442695
        %v1880 = vpow.pop %v1879
        %v1881 = vmul.f32 %v1765, 1.442695
        %v1882 = vpow.pop %v1881
        %v1883 = vmul.f32 %v1766, 1.442695
        %v1884 = vpow.pop %v1883
        %v1885 = vmul.f32 %v1767, 1.442695
        %v1886 = vpow.pop %v1885
        %v1887 = vmul.f32 %v1768, 1.442695
        %v1888 = vpow.pop %v1887
        %v1889 = vmul.f32 %v1769, 1.442695
        %v1890 = vpow.pop %v1889
        %v1891 = vmul.f32 %v1770, 1.442695
        %v1892 = vpow.pop %v1891
        %v1893 = vmul.f32 %v1771, 1.442695
        %v1894 = vpow.pop %v1893
        %v1895 = vmul.f32 %v1772, 1.442695
        %v1896 = vpow.pop %v1895
        %v1897 = vmul.f32 %v1773, 1.442695
        %v1898 = vpow.pop %v1897
        %v1899 = vmul.f32 %v1774, 1.442695
        %v1900 = vpow.pop %v1899
        %v1901 = vmul.f32 %v1775, 1.442695
        %v1902 = vpow.pop %v1901
        %v1903 = vmul.f32 %v1776, 1.442695
        %v1904 = vpow.pop %v1903
        %1905 = vmatprep.subr.mxu0 %v1780
        %1906 = vmatpush1.msra.mxu0 %v1778
        %1907 = vmatprep.subr.mxu0 %v1784
        %1908 = vmatpush1.msra.mxu0 %v1782
        %1909 = vmatprep.subr.mxu0 %v1788
        %1910 = vmatpush1.msra.mxu0 %v1786
        %1911 = vmatprep.subr.mxu0 %v1792
        %1912 = vmatpush1.msra.mxu0 %v1790
        %1913 = vmatprep.subr.mxu0 %v1796
        %1914 = vmatpush1.msra.mxu0 %v1794
        %1915 = vmatprep.subr.mxu0 %v1800
        %1916 = vmatpush1.msra.mxu0 %v1798
        %1917 = vmatprep.subr.mxu0 %v1804
        %1918 = vmatpush1.msra.mxu0 %v1802
        %1919 = vmatprep.subr.mxu0 %v1808
        %1920 = vmatpush1.msra.mxu0 %v1806
        %1921 = vmatprep.subr.mxu0 %v1812
        %1922 = vmatpush1.msra.mxu0 %v1810
        %1923 = vmatprep.subr.mxu0 %v1816
        %1924 = vmatpush1.msra.mxu0 %v1814
        %1925 = vmatprep.subr.mxu0 %v1820
        %1926 = vmatpush1.msra.mxu0 %v1818
        %1927 = vmatprep.subr.mxu0 %v1824
        %1928 = vmatpush1.msra.mxu0 %v1822
        %1929 = vmatprep.subr.mxu0 %v1828
        %1930 = vmatpush1.msra.mxu0 %v1826
        %1931 = vmatprep.subr.mxu0 %v1832
        %1932 = vmatpush1.msra.mxu0 %v1830
        %1933 = vmatprep.subr.mxu0 %v1836
        %1934 = vmatpush1.msra.mxu0 %v1834
        %1935 = vmatprep.subr.mxu0 %v1840
        %1936 = vmatpush1.msra.mxu0 %v1838
        %1937 = vmatprep.subr.mxu0 %v1844
        %1938 = vmatpush1.msra.mxu0 %v1842
        %1939 = vmatprep.subr.mxu0 %v1848
        %1940 = vmatpush1.msra.mxu0 %v1846
        %1941 = vmatprep.subr.mxu0 %v1852
        %1942 = vmatpush1.msra.mxu0 %v1850
        %1943 = vmatprep.subr.mxu0 %v1856
        %1944 = vmatpush1.msra.mxu0 %v1854
        %1945 = vmatprep.subr.mxu0 %v1860
        %1946 = vmatpush1.msra.mxu0 %v1858
        %1947 = vmatprep.subr.mxu0 %v1864
        %1948 = vmatpush1.msra.mxu0 %v1862
        %1949 = vmatprep.subr.mxu0 %v1868
        %1950 = vmatpush1.msra.mxu0 %v1866
        %1951 = vmatprep.subr.mxu0 %v1872
        %1952 = vmatpush1.msra.mxu0 %v1870
        %1953 = vmatprep.subr.mxu0 %v1876
        %1954 = vmatpush1.msra.mxu0 %v1874
        %1955 = vmatprep.subr.mxu0 %v1880
        %1956 = vmatpush1.msra.mxu0 %v1878
        %1957 = vmatprep.subr.mxu0 %v1884
        %1958 = vmatpush1.msra.mxu0 %v1882
        %1959 = vmatprep.subr.mxu0 %v1888
        %1960 = vmatpush1.msra.mxu0 %v1886
        %1961 = vmatprep.subr.mxu0 %v1892
        %1962 = vmatpush1.msra.mxu0 %v1890
        %1963 = vmatprep.subr.mxu0 %v1896
        %1964 = vmatpush1.msra.mxu0 %v1894
        %1965 = vmatprep.subr.mxu0 %v1900
        %1966 = vmatpush1.msra.mxu0 %v1898
        %1967 = vmatprep.subr.mxu0 %v1904
        %1968 = vmatpush1.msra.mxu0 %v1902
        %1969 = vmatprep.mubr.f32.mxu0 %v453
        %1970 = vmatmul.mubr.f32.gmra.mrb[0].mxu0 %v451
        %v1971 = vpop.f32.mrb[0].mxu0
        %v1972 = vadd.f32 0.0, %v1971
        %v1973 = vpop.f32.mrb[0].mxu0
        %v1974 = vadd.f32 0.0, %v1973
        %1975 = vdwg.mxu0
        %v1976 = vrcp.pop %v1972
        %v1977 = vrcp.pop %v1974
        %v1978 = vlaneseq
        %v1979 = vshrl.u32 %v1978, 7
        %v1980 = vsub.s32 4, %v1979
        %v1981 = vrot.slane %v1976, %v1980
        %v1982 = vlaneseq
        %v1983 = vshrl.u32 %v1982, 7
        %v1984 = vsub.s32 4, %v1983
        %v1985 = vrot.slane %v1977, %v1984
        %v1986 = vmul.f32 %v1972, %v1981
        %v1987 = vmul.f32 %v1974, %v1985
        %v1988 = vadd.f32 %v1220, %v1986
        %v1989 = vadd.f32 %v1221, %v1987
        %v1990 = vld [vmem:[%s3] sm:$0xf]
        %1992 = vset.pattern.permute.xlu0 0
        %1993 = vperm.xlu0 %1992, %v1990
        %v1994 = vpop.permute.xlu0 %1993
        %v1996 = vadd.f32 %v1988, %v1994
        %v1997 = vadd.f32 %v1989, %v1994
        %v2000 = vcombine.low %v1996, %v1997
        %2002 = vst [vmem:[%s230] sm:$0xff] %v2000
        %s2003 = sand.u32 %s136, 1
        %s2004 = scalar_lea.sflag [#allocation3], %s2003
        %s2005 = sand.u32 %s136, 1
        %s2006 = smul.addr %s2005, 8
        %s2007 = scalar_lea.vmem [#allocation2], %s2006
        // Predicated region
        $region37: #{tpu_custom_call.1} parent=35 // pred_check
          %p2008 = pneg %p146
        $region38: #{tpu_custom_call.1} parent=35 // pred_check_branch
          %2010 = sbr.rel (%p2008) target = $region40
        $region39: #{tpu_custom_call.1} parent=35 // pred_region
          %s2011 = smul.u32 2, %s23
          %s2013 = ssub.s32 128, 128
          %2014 = vsyncadd %s2004, %s2013
          %s2015 = smul.addr %s22, 2
          %s2016 = sadd.s32 %s2011, %s2015
          %s2017 = smul.addr %s2016, 64
          %s2018 = scalar_lea.hbm %s4, %s2017
          %s2020 = sshll.u32 %s2007, 4
          %s2021 = int_to_ptr.vmem [resolvable:$true] %s2020
          %2023 = dma.vmem_to_hbm [thread:$0]  %s2021, 128, %s2018, %s2004
        $region40: #{tpu_custom_call.1} parent=35 // pred_fallthru
          _
      $region36: #{tpu_custom_call.1} parent=5 // pred_fallthru
        _
      %p2024 = scmp.le.s32.totalorder 2, %s13
      // Predicated region
      $region41: #{tpu_custom_call.1} parent=5 // pred_check
        %p2025 = pneg %p2024
      $region42: #{tpu_custom_call.1} parent=5 // pred_check_branch
        %2027 = sbr.rel (%p2025) target = $region44
      $region43: #{tpu_custom_call.1} parent=5 // pred_region
        %s2028 = ssub.s32 %s13, 2
        // Predicated region
        $region45: #{tpu_custom_call.1} parent=43 // pred_check
          %p2029 = pneg %p152
        $region46: #{tpu_custom_call.1} parent=43 // pred_check_branch
          %2031 = sbr.rel (%p2029) target = $region48
        $region47: #{tpu_custom_call.1} parent=43 // pred_region
          %s2032 = sand.u32 %s137, 1
          %s2033 = scalar_lea.sflag [#allocation3], %s2032
          %s2034 = sand.u32 %s137, 1
          %s2035 = smul.addr %s2034, 8
          %s2036 = scalar_lea.vmem [#allocation2], %s2035
          %2037 = dma.done %s2033, 128
        $region48: #{tpu_custom_call.1} parent=43 // pred_fallthru
          _
      $region44: #{tpu_custom_call.1} parent=5 // pred_fallthru
        _
    $region6: #{tpu_custom_call.1} parent=1 // loop_footer
      %s17 = sadd.s32 1, %s13
    $region7: #{tpu_custom_call.1} parent=1 // loop_footer_branch
      %12 = sbr.rel target = $region3
    $region8: #{tpu_custom_call.1} parent=1 // loop_exit
      _
    %2038 = vsyncpa [#allocation3], 1
    %s2039 = scalar_lea.sflag [#allocation3], 1
    %2040 = vsyncpa %s2039, 1

</llo_original>
